<compile_context>
chip_gen: v6e
topology: v6e:2x2x1
jax: 0.10.0
libtpu: 0.0.40
codegen_flags: <defaults>
</compile_context>

<pallas_src>
import math

import jax
import jax.numpy as jnp
from jax.experimental import pallas as pl
from jax.experimental.pallas import tpu as pltpu

# ----- flow hyperparameters (mirror ConditionalFlow.__init__ arguments) -----
DIM = 8            # dim
CTX_DIM = 4        # context_dim
N_LAYERS = 2       # n_layers
HIDDEN = 32        # hidden_units
N_BLOCKS = 2       # n_blocks
N_BINS = 4         # n_bins
TAIL_BOUND = 3.0   # tail_bound (tails='linear')
MIN_BW = 1e-3      # min_bin_width
MIN_BH = 1e-3      # min_bin_height
MIN_DER = 1e-3     # min_derivative
# transform_type='coupling', dropout=0.0, use_batch_norm=False,
# unconditional_transform=False, encoder=None

MID = DIM // 2                 # create_mid_split_binary_mask: mask[:DIM//2] = 1
D_T = MID                      # transform features (mask > 0)
D_ID = DIM - MID               # identity features  (conditioner input)
PARAM_DIM = 3 * N_BINS - 1     # spline params / feature with 'linear' tails
OUT_DIM = D_T * PARAM_DIM      # raw conditioner output rows (44)
OUT_PAD = 64                   # re-packed rows / layer: 8*N_BINS (w|h bins) +
                               # 8*(N_BINS-1) (deriv groups, 4 rows padded to 8) + pad
LOG_2PI = math.log(2.0 * math.pi)
INV_SQRT_H = 1.0 / math.sqrt(HIDDEN)   # nflows scales widths/heights by sqrt(hidden)

BATCH_TILE = 512               # lane tile (sweep 512-2048; 512 is safe on v5e too)


# ----------------------------- math helpers (pure jnp, traced inside kernel) ----
def _recip(x, approx):
    if approx:
        return pl.reciprocal(x, approx=True)   # EUP vrcp, off the VALU critical slot
    return 1.0 / x


def _softplus(x):
    return jnp.maximum(x, 0.0) + jnp.log(1.0 + jnp.exp(-jnp.abs(x)))


def _softmax_bins(logits, approx):
    """Softmax across a Python list of per-bin [R, N] logits (pure VPU/EUP, no XLU)."""
    m = logits[0]
    for v in logits[1:]:
        m = jnp.maximum(m, v)
    exps = [jnp.exp(v - m) for v in logits]
    s = exps[0]
    for e in exps[1:]:
        s = s + e
    inv = _recip(s, approx)
    return [e * inv for e in exps]


def _rqs_forward(x_t, wh_logits, ud, approx):
    """Monotonic RQ spline with 'linear' tails, vectorized over all D_T features.

    x_t: [D_T, N]; wh_logits: N_BINS stacked [2*D_T, N] arrays (widths rows 0..D_T-1,
    heights rows D_T..2*D_T-1); ud: N_BINS-1 arrays [D_T, N].
    Returns (y [D_T, N], logabsdet [D_T, N]).
    """
    left, right = -TAIL_BOUND, TAIL_BOUND
    span = right - left

    inside = (x_t >= left) & (x_t <= right)
    xc = jnp.clip(x_t, left, right)

    # min-bin adjustment, applied to the stacked [widths|heights] array at once
    if MIN_BW == MIN_BH:
        min_b = MIN_BW
    else:  # general case: per-sublane constant (widths rows get MIN_BW, heights MIN_BH)
        row = jax.lax.broadcasted_iota(jnp.int32, (2 * D_T, 1), 0)
        min_b = jnp.where(row < D_T, MIN_BW, MIN_BH).astype(jnp.float32)
    scale_b = 1.0 - min_b * N_BINS

    # widths & heights normalized together at full sublane occupancy ([8, N] vregs)
    whn = _softmax_bins(wh_logits, approx)
    wh = [min_b + scale_b * v for v in whn]          # normalized bin fractions
    sizes = [span * v for v in wh]                   # bin sizes in x / y units

    # stacked cumulative left-knot positions (k = 0 .. N_BINS-1)
    knots = [jnp.full_like(wh[0], left)]
    acc = wh[0]
    for k in range(1, N_BINS):
        knots.append(left + span * acc)
        acc = acc + wh[k]

    # split the stacked halves; the bottom-half slice lowers to a single sublane
    # rotate (equivalent to pltpu.roll(a, shift=D_T, axis=0)), the top slice is free.
    def top(a):
        return a[:D_T, :]

    def bot(a):
        return a[D_T:2 * D_T, :]

    cw = [top(a) for a in knots]
    ch = [bot(a) for a in knots]
    w_sz = [top(a) for a in sizes]
    h_sz = [bot(a) for a in sizes]

    # knot derivatives; 'linear' tails force the boundary derivatives to exactly 1
    derivs = ([jnp.ones_like(xc)]
              + [MIN_DER + _softplus(v) for v in ud]
              + [jnp.ones_like(xc)])

    # bin lookup: chained selects on monotone knot positions (no float-equality ids)
    in_cw, in_w = cw[0], w_sz[0]
    in_ch, in_h = ch[0], h_sz[0]
    in_d, in_dp1 = derivs[0], derivs[1]
    for k in range(1, N_BINS):
        m = xc >= cw[k]
        in_cw = jnp.where(m, cw[k], in_cw)
        in_w = jnp.where(m, w_sz[k], in_w)
        in_ch = jnp.where(m, ch[k], in_ch)
        in_h = jnp.where(m, h_sz[k], in_h)
        in_d = jnp.where(m, derivs[k], in_d)
        in_dp1 = jnp.where(m, derivs[k + 1], in_dp1)

    # exact divides here: these feed the log-determinant (approx vrcp error would
    # be amplified ~2x inside the log); the cost is a couple of vreg-ops per layer.
    inv_w = 1.0 / in_w
    delta = in_h * inv_w
    theta = (xc - in_cw) * inv_w
    omt = 1.0 - theta
    tomt = theta * omt
    tsq = theta * theta
    numerator = in_h * (delta * tsq + in_d * tomt)
    denominator = delta + (in_d + in_dp1 - 2.0 * delta) * tomt
    inv_den = 1.0 / denominator
    dnum = (delta * delta) * (in_dp1 * tsq + 2.0 * delta * tomt + in_d * omt * omt)

    y = jnp.where(inside, in_ch + numerator * inv_den, x_t)          # identity on the tails
    ld = jnp.where(inside, jnp.log(dnum * (inv_den * inv_den)), 0.0)  # one log total
    return y, ld


def _flow_logprob(x, ctx, w0x, w0c, b0, w1, b1, w2, b2, wc, bc, wf, bf,
                  slots, approx):
    """log_prob of the flow, feature-major: x [DIM, N], ctx [CTX_DIM, N] -> [1, N].

    slots[l] is the layer-l permutation pre-composed into canonical "slot" indices
    (slots[l][:D_T] = transform slots; identity slots are baked into w0x's columns).
    """
    x = x.astype(jnp.float32)
    n = x.shape[1]
    H = HIDDEN
    bfl = jnp.bfloat16
    ctx_b = ctx.astype(bfl)

    # context projections are loop-invariant -> hoisted out of the layer/block loops
    h0c = jnp.dot(w0c, ctx_b, preferred_element_type=jnp.float32) + b0          # [L*H, N]
    gate_pre = jnp.dot(wc, ctx_b, preferred_element_type=jnp.float32) + bc      # [L*NB*H, N]
    gates = 0.5 * (jnp.tanh(0.5 * gate_pre) + 1.0)        # sigmoid via a single EUP tanh

    logdet = jnp.zeros((1, n), jnp.float32)
    log_norm = None

    for l in range(N_LAYERS):
        t_slots = slots[l][:D_T]
        # transform-feature gather (identity features reach the conditioner through
        # the zero-padded w0x columns, i.e. the MXU does that gather for free)
        x_t = jnp.concatenate([x[s:s + 1, :] for s in t_slots], axis=0)          # [D_T, N]

        # --- ResidualNet conditioner (dropout=0, no batch norm), bf16 MXU / f32 acc ---
        h = (jnp.dot(w0x[l * H:(l + 1) * H, :], x.astype(bfl),
                     preferred_element_type=jnp.float32)
             + h0c[l * H:(l + 1) * H, :])
        for blk in range(N_BLOCKS):
            i = l * N_BLOCKS + blk
            t = jnp.maximum(h, 0.0)
            t = (jnp.dot(w1[i * H:(i + 1) * H, :], t.astype(bfl),
                         preferred_element_type=jnp.float32)
                 + b1[i * H:(i + 1) * H, :])
            t = jnp.maximum(t, 0.0)
            t = (jnp.dot(w2[i * H:(i + 1) * H, :], t.astype(bfl),
                         preferred_element_type=jnp.float32)
                 + b2[i * H:(i + 1) * H, :])
            # F.glu(cat([t, ctx_proj], dim=1)) == t * sigmoid(ctx_proj) (hoisted above)
            h = h + t * gates[i * H:(i + 1) * H, :]
        params = (jnp.dot(wf[l * OUT_PAD:(l + 1) * OUT_PAD, :], h.astype(bfl),
                          preferred_element_type=jnp.float32)
                  + bf[l * OUT_PAD:(l + 1) * OUT_PAD, :])                        # [OUT_PAD, N]

        # 8-sublane-aligned slices: per bin an [8, N] block = [widths_k | heights_k],
        # then the derivative groups (top 4 rows of each 8-row block).
        wh = [params[8 * k:8 * (k + 1), :] for k in range(N_BINS)]
        ud = [params[8 * N_BINS + 8 * m: 8 * N_BINS + 8 * m + D_T, :]
              for m in range(N_BINS - 1)]

        # --- RQ spline on all transform features at once ---
        y_t, ld = _rqs_forward(x_t, wh, ud, approx)
        logdet = logdet + jnp.sum(ld, axis=0, keepdims=True)

        if l + 1 < N_LAYERS:
            # scatter the splined rows back into their canonical slots
            pos = {s: j for j, s in enumerate(t_slots)}
            rows = [y_t[pos[s]:pos[s] + 1, :] if s in pos else x[s:s + 1, :]
                    for s in range(DIM)]
            x = jnp.concatenate(rows, axis=0)
        else:
            # last layer: skip the re-concat; fold y_t straight into the base log-prob
            ss = (jnp.sum(x * x, axis=0, keepdims=True)
                  - jnp.sum(x_t * x_t, axis=0, keepdims=True)
                  + jnp.sum(y_t * y_t, axis=0, keepdims=True))
            log_norm = -0.5 * ss - 0.5 * DIM * LOG_2PI

    return log_norm + logdet                                                     # [1, N]


# --------------------------------- Pallas kernel ---------------------------------
def _make_kernel(slots):
    def kernel(x_ref, c_ref, w0x_ref, w0c_ref, b0_ref, w1_ref, b1_ref,
               w2_ref, b2_ref, wc_ref, bc_ref, wf_ref, bf_ref, out_ref):
        out_ref[...] = _flow_logprob(
            x_ref[...], c_ref[...],
            w0x_ref[...], w0c_ref[...], b0_ref[...],
            w1_ref[...], b1_ref[...], w2_ref[...], b2_ref[...],
            wc_ref[...], bc_ref[...], wf_ref[...], bf_ref[...],
            slots=slots, approx=True)
    return kernel


def conditional_flow_nll(x, ctx, weights, slots, *, batch_tile=BATCH_TILE):
    """-mean(log_prob) of the flow.  x: [N, DIM], ctx: [N, CTX_DIM] -> scalar."""
    n = x.shape[0]
    n_blocks = pl.cdiv(n, batch_tile)
    n_pad = n_blocks * batch_tile
    pad = n_pad - n
    # feature-major (batch on lanes); pad ragged batch with zeros, discarded below
    x_fm = jnp.pad(x.astype(jnp.float32), ((0, pad), (0, 0))).T        # [DIM, n_pad]
    c_fm = jnp.pad(ctx.astype(jnp.float32), ((0, pad), (0, 0))).T      # [CTX_DIM, n_pad]

    in_specs = ([pl.BlockSpec((DIM, batch_tile), lambda i: (0, i)),
                 pl.BlockSpec((CTX_DIM, batch_tile), lambda i: (0, i))]
                # weights (~15 KB bf16 + f32 biases) stay resident via constant maps
                + [pl.BlockSpec(w.shape, lambda i: (0, 0)) for w in weights])
    out_spec = pl.BlockSpec((1, batch_tile), lambda i: (0, i))         # lane-dense output

    wbytes = sum(int(w.size) * int(w.dtype.itemsize) for w in weights)
    cost = pl.CostEstimate(
        flops=int(30_000 * n_pad),
        transcendentals=int(280 * n_pad),
        bytes_accessed=int((DIM + CTX_DIM + 1) * 4 * n_pad + wbytes))

    log_prob = pl.pallas_call(
        _make_kernel(slots),
        out_shape=jax.ShapeDtypeStruct((1, n_pad), jnp.float32),
        grid=(n_blocks,),
        in_specs=in_specs,
        out_specs=out_spec,
        # NOTE: on v7x, swap to pltpu.CORE_PARALLEL to force the batch grid to shard
        # across both TensorCores (the ~15 KB weight re-fetch per core is free).
        compiler_params=pltpu.CompilerParams(
            dimension_semantics=("parallel",)),
        cost_estimate=cost,
    )(x_fm, c_fm, *weights)

    # global mean over the TRUE batch size (padded lanes dropped)
    return -jnp.sum(log_prob[0, :n]) / n


# --------------------------- deterministic parameter init -------------------------
def _linear(key, fan_in, fan_out):
    # PyTorch nn.Linear default init; stored as [out, in] for feature-major W @ X.
    kw, kb = jax.random.split(key)
    bound = 1.0 / math.sqrt(fan_in)
    w = jax.random.uniform(kw, (fan_out, fan_in), jnp.float32, -bound, bound)
    b = jax.random.uniform(kb, (fan_out, 1), jnp.float32, -bound, bound)
    return w, b


def _stack(key, n, fan_in, fan_out):
    ws, bs = [], []
    for i in range(n):
        w, b = _linear(jax.random.fold_in(key, i), fan_in, fan_out)
        ws.append(w)
        bs.append(b)
    return jnp.concatenate(ws, 0), jnp.concatenate(bs, 0)


def init_params(key):
    k_perm, k0, k1, k2, kc_, kf = jax.random.split(key, 6)

    # RandomPermutation per layer: fixed model structure -> static Python ints
    perms = []
    for l in range(N_LAYERS):
        p = jax.random.permutation(jax.random.fold_in(k_perm, l), DIM)
        perms.append([int(v) for v in p.tolist()])

    # Pre-compose the permutations into canonical "slot" indices: slots[l][i] is the
    # row of the (in-place-updated) state holding the i-th permuted feature of layer l.
    slots = []
    cur = list(range(DIM))
    for l in range(N_LAYERS):
        q = [cur[perms[l][i]] for i in range(DIM)]
        slots.append(tuple(q))
        cur = q
    slots = tuple(slots)

    # initial layer: Linear(D_ID + CTX_DIM -> HIDDEN).  The x-part is scattered into a
    # zero-padded [H, DIM] matrix (columns at the identity slots) so the MXU performs
    # the identity-feature gather; the ctx-part is kept separate (hoisted in-kernel).
    w0x_l, w0c_l, b0_l = [], [], []
    for l in range(N_LAYERS):
        w, b = _linear(jax.random.fold_in(k0, l), D_ID + CTX_DIM, HIDDEN)
        wfull = jnp.zeros((HIDDEN, DIM), jnp.float32)
        for i in range(D_ID):
            wfull = wfull.at[:, slots[l][D_T + i]].set(w[:, i])
        w0x_l.append(wfull)
        w0c_l.append(w[:, D_ID:])
        b0_l.append(b)
    w0x = jnp.concatenate(w0x_l, 0)        # [L*H, DIM]
    w0c = jnp.concatenate(w0c_l, 0)        # [L*H, CTX]
    b0 = jnp.concatenate(b0_l, 0)          # [L*H, 1]

    w1, b1 = _stack(k1, N_LAYERS * N_BLOCKS, HIDDEN, HIDDEN)     # residual block linear 0
    w2, b2 = _stack(k2, N_LAYERS * N_BLOCKS, HIDDEN, HIDDEN)     # residual block linear 1
    wc, bc = _stack(kc_, N_LAYERS * N_BLOCKS, CTX_DIM, HIDDEN)   # context / GLU gate layers

    # final layer: re-pack rows (nflows order: feature-major, param-minor) into
    # 8-sublane-aligned groups: per bin [widths_k | heights_k] (8 rows), then each
    # derivative knot as a 4-row group padded to 8; fold 1/sqrt(hidden) into w/h rows.
    wf_l, bf_l = [], []
    for l in range(N_LAYERS):
        w, b = _linear(jax.random.fold_in(kf, l), HIDDEN, OUT_DIM)
        rw, rb = [], []
        for k in range(N_BINS):
            idx = jnp.array([j * PARAM_DIM + k for j in range(D_T)]
                            + [j * PARAM_DIM + N_BINS + k for j in range(D_T)],
                            dtype=jnp.int32)
            rw.append(w[idx] * INV_SQRT_H)
            rb.append(b[idx] * INV_SQRT_H)
        for m in range(N_BINS - 1):
            idx = jnp.array([j * PARAM_DIM + 2 * N_BINS + m for j in range(D_T)],
                            dtype=jnp.int32)
            rw.append(jnp.concatenate([w[idx], jnp.zeros((8 - D_T, HIDDEN), jnp.float32)], 0))
            rb.append(jnp.concatenate([b[idx], jnp.zeros((8 - D_T, 1), jnp.float32)], 0))
        pad_rows = OUT_PAD - 8 * N_BINS - 8 * (N_BINS - 1)
        if pad_rows:
            rw.append(jnp.zeros((pad_rows, HIDDEN), jnp.float32))
            rb.append(jnp.zeros((pad_rows, 1), jnp.float32))
        wf_l.append(jnp.concatenate(rw, 0))
        bf_l.append(jnp.concatenate(rb, 0))
    wf = jnp.concatenate(wf_l, 0)          # [L*OUT_PAD, H]
    bf = jnp.concatenate(bf_l, 0)          # [L*OUT_PAD, 1]

    # bf16 matmul operands (biases and everything downstream stay f32)
    bfl = jnp.bfloat16
    weights = (w0x.astype(bfl), w0c.astype(bfl), b0,
               w1.astype(bfl), b1, w2.astype(bfl), b2,
               wc.astype(bfl), bc, wf.astype(bfl), bf)
    return weights, slots


if __name__ == "__main__":
    key = jax.random.PRNGKey(0)
    kx, kc, kp = jax.random.split(key, 3)

    N = 600                                                     # 2 grid blocks + ragged tail
    x = jax.random.normal(kx, (N, DIM), jnp.float32)            # inputs  [N, dim]
    ctx = jax.random.normal(kc, (N, CTX_DIM), jnp.float32)      # context [N, context_dim]
    weights, slots = init_params(kp)

    loss_fn = jax.jit(lambda x_, c_, w_: conditional_flow_nll(x_, c_, w_, slots))
    loss = jax.block_until_ready(loss_fn(x, ctx, weights))

    # pure-JAX reference of the identical math (exact divides) — checks the Pallas lowering
    lp_ref = _flow_logprob(x.T, ctx.T, *weights, slots=slots, approx=False)
    ref = -jnp.mean(lp_ref[0, :])

    assert jnp.isfinite(loss), loss
    assert jnp.allclose(loss, ref, rtol=5e-3, atol=5e-3), (loss, ref)

    print("KERNEL_OK")
</pallas_src>

<mosaic_0001>
module attributes {stable_mosaic.version = 11 : i64} {
  func.func @kernel(%arg0: i32, %arg1: memref<8x512xf32, #tpu.memory_space<vmem>>, %arg2: memref<4x512xf32, #tpu.memory_space<vmem>>, %arg3: memref<64x8xbf16, #tpu.memory_space<vmem>>, %arg4: memref<64x4xbf16, #tpu.memory_space<vmem>>, %arg5: memref<64x1xf32, #tpu.memory_space<vmem>>, %arg6: memref<128x32xbf16, #tpu.memory_space<vmem>>, %arg7: memref<128x1xf32, #tpu.memory_space<vmem>>, %arg8: memref<128x32xbf16, #tpu.memory_space<vmem>>, %arg9: memref<128x1xf32, #tpu.memory_space<vmem>>, %arg10: memref<128x4xbf16, #tpu.memory_space<vmem>>, %arg11: memref<128x1xf32, #tpu.memory_space<vmem>>, %arg12: memref<128x32xbf16, #tpu.memory_space<vmem>>, %arg13: memref<128x1xf32, #tpu.memory_space<vmem>>, %arg14: memref<1x512xf32, #tpu.memory_space<vmem>>) attributes {dimension_semantics = [#tpu.dimension_semantics<parallel>], iteration_bounds = array<i64: 2>, scalar_prefetch = 0 : i64, scratch_operands = 0 : i64, tpu.core_type = #tpu.core_type<tc>, window_params = [{transform_indices = @transform_0, window_bounds = array<i64: 8, 512>}, {transform_indices = @transform_1, window_bounds = array<i64: 4, 512>}, {pipeline_mode = #tpu.pipeline_mode<synchronous>, transform_indices = @transform_2, window_bounds = array<i64: 64, 8>}, {pipeline_mode = #tpu.pipeline_mode<synchronous>, transform_indices = @transform_3, window_bounds = array<i64: 64, 4>}, {pipeline_mode = #tpu.pipeline_mode<synchronous>, transform_indices = @transform_4, window_bounds = array<i64: 64, 1>}, {pipeline_mode = #tpu.pipeline_mode<synchronous>, transform_indices = @transform_5, window_bounds = array<i64: 128, 32>}, {pipeline_mode = #tpu.pipeline_mode<synchronous>, transform_indices = @transform_6, window_bounds = array<i64: 128, 1>}, {pipeline_mode = #tpu.pipeline_mode<synchronous>, transform_indices = @transform_7, window_bounds = array<i64: 128, 32>}, {pipeline_mode = #tpu.pipeline_mode<synchronous>, transform_indices = @transform_8, window_bounds = array<i64: 128, 1>}, {pipeline_mode = #tpu.pipeline_mode<synchronous>, transform_indices = @transform_9, window_bounds = array<i64: 128, 4>}, {pipeline_mode = #tpu.pipeline_mode<synchronous>, transform_indices = @transform_10, window_bounds = array<i64: 128, 1>}, {pipeline_mode = #tpu.pipeline_mode<synchronous>, transform_indices = @transform_11, window_bounds = array<i64: 128, 32>}, {pipeline_mode = #tpu.pipeline_mode<synchronous>, transform_indices = @transform_12, window_bounds = array<i64: 128, 1>}, {transform_indices = @transform_13, window_bounds = array<i64: 1, 512>}]} {
    %c0 = arith.constant 0 : index
    %c0_0 = arith.constant 0 : index
    %0 = vector.load %arg1[%c0, %c0_0] : memref<8x512xf32, #tpu.memory_space<vmem>>, vector<8x512xf32>
    %c0_1 = arith.constant 0 : index
    %c0_2 = arith.constant 0 : index
    %1 = vector.load %arg2[%c0_1, %c0_2] : memref<4x512xf32, #tpu.memory_space<vmem>>, vector<4x512xf32>
    %c0_3 = arith.constant 0 : index
    %c0_4 = arith.constant 0 : index
    %2 = vector.load %arg3[%c0_3, %c0_4] : memref<64x8xbf16, #tpu.memory_space<vmem>>, vector<64x8xbf16>
    %c0_5 = arith.constant 0 : index
    %c0_6 = arith.constant 0 : index
    %3 = vector.load %arg4[%c0_5, %c0_6] : memref<64x4xbf16, #tpu.memory_space<vmem>>, vector<64x4xbf16>
    %c0_7 = arith.constant 0 : index
    %c0_8 = arith.constant 0 : index
    %4 = vector.load %arg5[%c0_7, %c0_8] : memref<64x1xf32, #tpu.memory_space<vmem>>, vector<64x1xf32>
    %c0_9 = arith.constant 0 : index
    %c0_10 = arith.constant 0 : index
    %5 = vector.load %arg6[%c0_9, %c0_10] : memref<128x32xbf16, #tpu.memory_space<vmem>>, vector<128x32xbf16>
    %c0_11 = arith.constant 0 : index
    %c0_12 = arith.constant 0 : index
    %6 = vector.load %arg7[%c0_11, %c0_12] : memref<128x1xf32, #tpu.memory_space<vmem>>, vector<128x1xf32>
    %c0_13 = arith.constant 0 : index
    %c0_14 = arith.constant 0 : index
    %7 = vector.load %arg8[%c0_13, %c0_14] : memref<128x32xbf16, #tpu.memory_space<vmem>>, vector<128x32xbf16>
    %c0_15 = arith.constant 0 : index
    %c0_16 = arith.constant 0 : index
    %8 = vector.load %arg9[%c0_15, %c0_16] : memref<128x1xf32, #tpu.memory_space<vmem>>, vector<128x1xf32>
    %c0_17 = arith.constant 0 : index
    %c0_18 = arith.constant 0 : index
    %9 = vector.load %arg10[%c0_17, %c0_18] : memref<128x4xbf16, #tpu.memory_space<vmem>>, vector<128x4xbf16>
    %c0_19 = arith.constant 0 : index
    %c0_20 = arith.constant 0 : index
    %10 = vector.load %arg11[%c0_19, %c0_20] : memref<128x1xf32, #tpu.memory_space<vmem>>, vector<128x1xf32>
    %c0_21 = arith.constant 0 : index
    %c0_22 = arith.constant 0 : index
    %11 = vector.load %arg12[%c0_21, %c0_22] : memref<128x32xbf16, #tpu.memory_space<vmem>>, vector<128x32xbf16>
    %c0_23 = arith.constant 0 : index
    %c0_24 = arith.constant 0 : index
    %12 = vector.load %arg13[%c0_23, %c0_24] : memref<128x1xf32, #tpu.memory_space<vmem>>, vector<128x1xf32>
    %13 = arith.truncf %1 : vector<4x512xf32> to vector<4x512xbf16>
    %cst = arith.constant dense<0.000000e+00> : vector<64x512xf32>
    %14 = tpu.matmul %3, %13, %cst {dimension_numbers = #tpu.dot_dimension_numbers<[1], [0], [0], [1], [0, 0, 1, 1], [], []>} : vector<64x4xbf16>, vector<4x512xbf16>, vector<64x512xf32> -> vector<64x512xf32>
    %15 = vector.broadcast %4 : vector<64x1xf32> to vector<64x512xf32>
    %16 = arith.addf %14, %15 : vector<64x512xf32>
    %cst_25 = arith.constant dense<0.000000e+00> : vector<128x512xf32>
    %17 = tpu.matmul %9, %13, %cst_25 {dimension_numbers = #tpu.dot_dimension_numbers<[1], [0], [0], [1], [0, 0, 1, 1], [], []>} : vector<128x4xbf16>, vector<4x512xbf16>, vector<128x512xf32> -> vector<128x512xf32>
    %18 = vector.broadcast %10 : vector<128x1xf32> to vector<128x512xf32>
    %19 = arith.addf %17, %18 : vector<128x512xf32>
    %cst_26 = arith.constant 5.000000e-01 : f32
    %20 = vector.broadcast %cst_26 : f32 to vector<128x512xf32>
    %21 = arith.mulf %20, %19 : vector<128x512xf32>
    %22 = math.tanh %21 : vector<128x512xf32>
    %cst_27 = arith.constant 1.000000e+00 : f32
    %23 = vector.broadcast %cst_27 : f32 to vector<128x512xf32>
    %24 = arith.addf %22, %23 : vector<128x512xf32>
    %cst_28 = arith.constant 5.000000e-01 : f32
    %25 = vector.broadcast %cst_28 : f32 to vector<128x512xf32>
    %26 = arith.mulf %25, %24 : vector<128x512xf32>
    %cst_29 = arith.constant 0.000000e+00 : f32
    %27 = vector.broadcast %cst_29 : f32 to vector<1x512xf32>
    %28 = vector.extract_strided_slice %0 {offsets = [7, 0], sizes = [1, 512], strides = [1, 1]} : vector<8x512xf32> to vector<1x512xf32>
    %29 = vector.extract_strided_slice %0 {offsets = [2, 0], sizes = [1, 512], strides = [1, 1]} : vector<8x512xf32> to vector<1x512xf32>
    %30 = vector.extract_strided_slice %0 {offsets = [3, 0], sizes = [1, 512], strides = [1, 1]} : vector<8x512xf32> to vector<1x512xf32>
    %31 = vector.extract_strided_slice %0 {offsets = [1, 0], sizes = [1, 512], strides = [1, 1]} : vector<8x512xf32> to vector<1x512xf32>
    %32 = tpu.concatenate %28, %29, %30, %31 in 0 : vector<1x512xf32>, vector<1x512xf32>, vector<1x512xf32>, vector<1x512xf32> -> vector<4x512xf32>
    %33 = vector.extract_strided_slice %2 {offsets = [0, 0], sizes = [32, 8], strides = [1, 1]} : vector<64x8xbf16> to vector<32x8xbf16>
    %34 = arith.truncf %0 : vector<8x512xf32> to vector<8x512xbf16>
    %cst_30 = arith.constant dense<0.000000e+00> : vector<32x512xf32>
    %35 = tpu.matmul %33, %34, %cst_30 {dimension_numbers = #tpu.dot_dimension_numbers<[1], [0], [0], [1], [0, 0, 1, 1], [], []>} : vector<32x8xbf16>, vector<8x512xbf16>, vector<32x512xf32> -> vector<32x512xf32>
    %36 = vector.extract_strided_slice %16 {offsets = [0, 0], sizes = [32, 512], strides = [1, 1]} : vector<64x512xf32> to vector<32x512xf32>
    %37 = arith.addf %35, %36 : vector<32x512xf32>
    %cst_31 = arith.constant 0.000000e+00 : f32
    %38 = vector.broadcast %cst_31 : f32 to vector<32x512xf32>
    %39 = arith.maximumf %37, %38 : vector<32x512xf32>
    %40 = vector.extract_strided_slice %5 {offsets = [0, 0], sizes = [32, 32], strides = [1, 1]} : vector<128x32xbf16> to vector<32x32xbf16>
    %41 = arith.truncf %39 : vector<32x512xf32> to vector<32x512xbf16>
    %cst_32 = arith.constant dense<0.000000e+00> : vector<32x512xf32>
    %42 = tpu.matmul %40, %41, %cst_32 {dimension_numbers = #tpu.dot_dimension_numbers<[1], [0], [0], [1], [0, 0, 1, 1], [], []>} : vector<32x32xbf16>, vector<32x512xbf16>, vector<32x512xf32> -> vector<32x512xf32>
    %43 = vector.extract_strided_slice %6 {offsets = [0, 0], sizes = [32, 1], strides = [1, 1]} : vector<128x1xf32> to vector<32x1xf32>
    %44 = vector.broadcast %43 : vector<32x1xf32> to vector<32x512xf32>
    %45 = arith.addf %42, %44 : vector<32x512xf32>
    %cst_33 = arith.constant 0.000000e+00 : f32
    %46 = vector.broadcast %cst_33 : f32 to vector<32x512xf32>
    %47 = arith.maximumf %45, %46 : vector<32x512xf32>
    %48 = vector.extract_strided_slice %7 {offsets = [0, 0], sizes = [32, 32], strides = [1, 1]} : vector<128x32xbf16> to vector<32x32xbf16>
    %49 = arith.truncf %47 : vector<32x512xf32> to vector<32x512xbf16>
    %cst_34 = arith.constant dense<0.000000e+00> : vector<32x512xf32>
    %50 = tpu.matmul %48, %49, %cst_34 {dimension_numbers = #tpu.dot_dimension_numbers<[1], [0], [0], [1], [0, 0, 1, 1], [], []>} : vector<32x32xbf16>, vector<32x512xbf16>, vector<32x512xf32> -> vector<32x512xf32>
    %51 = vector.extract_strided_slice %8 {offsets = [0, 0], sizes = [32, 1], strides = [1, 1]} : vector<128x1xf32> to vector<32x1xf32>
    %52 = vector.broadcast %51 : vector<32x1xf32> to vector<32x512xf32>
    %53 = arith.addf %50, %52 : vector<32x512xf32>
    %54 = vector.extract_strided_slice %26 {offsets = [0, 0], sizes = [32, 512], strides = [1, 1]} : vector<128x512xf32> to vector<32x512xf32>
    %55 = arith.mulf %53, %54 : vector<32x512xf32>
    %56 = arith.addf %37, %55 : vector<32x512xf32>
    %cst_35 = arith.constant 0.000000e+00 : f32
    %57 = vector.broadcast %cst_35 : f32 to vector<32x512xf32>
    %58 = arith.maximumf %56, %57 : vector<32x512xf32>
    %59 = vector.extract_strided_slice %5 {offsets = [32, 0], sizes = [32, 32], strides = [1, 1]} : vector<128x32xbf16> to vector<32x32xbf16>
    %60 = arith.truncf %58 : vector<32x512xf32> to vector<32x512xbf16>
    %cst_36 = arith.constant dense<0.000000e+00> : vector<32x512xf32>
    %61 = tpu.matmul %59, %60, %cst_36 {dimension_numbers = #tpu.dot_dimension_numbers<[1], [0], [0], [1], [0, 0, 1, 1], [], []>} : vector<32x32xbf16>, vector<32x512xbf16>, vector<32x512xf32> -> vector<32x512xf32>
    %62 = vector.extract_strided_slice %6 {offsets = [32, 0], sizes = [32, 1], strides = [1, 1]} : vector<128x1xf32> to vector<32x1xf32>
    %63 = vector.broadcast %62 : vector<32x1xf32> to vector<32x512xf32>
    %64 = arith.addf %61, %63 : vector<32x512xf32>
    %cst_37 = arith.constant 0.000000e+00 : f32
    %65 = vector.broadcast %cst_37 : f32 to vector<32x512xf32>
    %66 = arith.maximumf %64, %65 : vector<32x512xf32>
    %67 = vector.extract_strided_slice %7 {offsets = [32, 0], sizes = [32, 32], strides = [1, 1]} : vector<128x32xbf16> to vector<32x32xbf16>
    %68 = arith.truncf %66 : vector<32x512xf32> to vector<32x512xbf16>
    %cst_38 = arith.constant dense<0.000000e+00> : vector<32x512xf32>
    %69 = tpu.matmul %67, %68, %cst_38 {dimension_numbers = #tpu.dot_dimension_numbers<[1], [0], [0], [1], [0, 0, 1, 1], [], []>} : vector<32x32xbf16>, vector<32x512xbf16>, vector<32x512xf32> -> vector<32x512xf32>
    %70 = vector.extract_strided_slice %8 {offsets = [32, 0], sizes = [32, 1], strides = [1, 1]} : vector<128x1xf32> to vector<32x1xf32>
    %71 = vector.broadcast %70 : vector<32x1xf32> to vector<32x512xf32>
    %72 = arith.addf %69, %71 : vector<32x512xf32>
    %73 = vector.extract_strided_slice %26 {offsets = [32, 0], sizes = [32, 512], strides = [1, 1]} : vector<128x512xf32> to vector<32x512xf32>
    %74 = arith.mulf %72, %73 : vector<32x512xf32>
    %75 = arith.addf %56, %74 : vector<32x512xf32>
    %76 = vector.extract_strided_slice %11 {offsets = [0, 0], sizes = [64, 32], strides = [1, 1]} : vector<128x32xbf16> to vector<64x32xbf16>
    %77 = arith.truncf %75 : vector<32x512xf32> to vector<32x512xbf16>
    %cst_39 = arith.constant dense<0.000000e+00> : vector<64x512xf32>
    %78 = tpu.matmul %76, %77, %cst_39 {dimension_numbers = #tpu.dot_dimension_numbers<[1], [0], [0], [1], [0, 0, 1, 1], [], []>} : vector<64x32xbf16>, vector<32x512xbf16>, vector<64x512xf32> -> vector<64x512xf32>
    %79 = vector.extract_strided_slice %12 {offsets = [0, 0], sizes = [64, 1], strides = [1, 1]} : vector<128x1xf32> to vector<64x1xf32>
    %80 = vector.broadcast %79 : vector<64x1xf32> to vector<64x512xf32>
    %81 = arith.addf %78, %80 : vector<64x512xf32>
    %82 = vector.extract_strided_slice %81 {offsets = [0, 0], sizes = [8, 512], strides = [1, 1]} : vector<64x512xf32> to vector<8x512xf32>
    %83 = vector.extract_strided_slice %81 {offsets = [8, 0], sizes = [8, 512], strides = [1, 1]} : vector<64x512xf32> to vector<8x512xf32>
    %84 = vector.extract_strided_slice %81 {offsets = [16, 0], sizes = [8, 512], strides = [1, 1]} : vector<64x512xf32> to vector<8x512xf32>
    %85 = vector.extract_strided_slice %81 {offsets = [24, 0], sizes = [8, 512], strides = [1, 1]} : vector<64x512xf32> to vector<8x512xf32>
    %86 = vector.extract_strided_slice %81 {offsets = [32, 0], sizes = [4, 512], strides = [1, 1]} : vector<64x512xf32> to vector<4x512xf32>
    %87 = vector.extract_strided_slice %81 {offsets = [40, 0], sizes = [4, 512], strides = [1, 1]} : vector<64x512xf32> to vector<4x512xf32>
    %88 = vector.extract_strided_slice %81 {offsets = [48, 0], sizes = [4, 512], strides = [1, 1]} : vector<64x512xf32> to vector<4x512xf32>
    %cst_40 = arith.constant -3.000000e+00 : f32
    %89 = vector.broadcast %cst_40 : f32 to vector<4x512xf32>
    %90 = arith.cmpf oge, %32, %89 : vector<4x512xf32>
    %cst_41 = arith.constant 3.000000e+00 : f32
    %91 = vector.broadcast %cst_41 : f32 to vector<4x512xf32>
    %92 = arith.cmpf ole, %32, %91 : vector<4x512xf32>
    %93 = arith.andi %90, %92 : vector<4x512xi1>
    %cst_42 = arith.constant -3.000000e+00 : f32
    %cst_43 = arith.constant 3.000000e+00 : f32
    %94 = vector.broadcast %cst_42 : f32 to vector<4x512xf32>
    %95 = arith.maximumf %94, %32 : vector<4x512xf32>
    %96 = vector.broadcast %cst_43 : f32 to vector<4x512xf32>
    %97 = arith.minimumf %96, %95 : vector<4x512xf32>
    %98 = arith.maximumf %82, %83 : vector<8x512xf32>
    %99 = arith.maximumf %98, %84 : vector<8x512xf32>
    %100 = arith.maximumf %99, %85 : vector<8x512xf32>
    %101 = arith.subf %82, %100 : vector<8x512xf32>
    %102 = math.exp %101 : vector<8x512xf32>
    %103 = arith.subf %83, %100 : vector<8x512xf32>
    %104 = math.exp %103 : vector<8x512xf32>
    %105 = arith.subf %84, %100 : vector<8x512xf32>
    %106 = math.exp %105 : vector<8x512xf32>
    %107 = arith.subf %85, %100 : vector<8x512xf32>
    %108 = math.exp %107 : vector<8x512xf32>
    %109 = arith.addf %102, %104 : vector<8x512xf32>
    %110 = arith.addf %109, %106 : vector<8x512xf32>
    %111 = arith.addf %110, %108 : vector<8x512xf32>
    %112 = tpu.reciprocal %111 {approx = true} : vector<8x512xf32> -> vector<8x512xf32>
    %113 = arith.mulf %102, %112 : vector<8x512xf32>
    %114 = arith.mulf %104, %112 : vector<8x512xf32>
    %115 = arith.mulf %106, %112 : vector<8x512xf32>
    %116 = arith.mulf %108, %112 : vector<8x512xf32>
    %cst_44 = arith.constant 0.995999991 : f32
    %117 = vector.broadcast %cst_44 : f32 to vector<8x512xf32>
    %118 = arith.mulf %117, %113 : vector<8x512xf32>
    %cst_45 = arith.constant 1.000000e-03 : f32
    %119 = vector.broadcast %cst_45 : f32 to vector<8x512xf32>
    %120 = arith.addf %119, %118 : vector<8x512xf32>
    %cst_46 = arith.constant 0.995999991 : f32
    %121 = vector.broadcast %cst_46 : f32 to vector<8x512xf32>
    %122 = arith.mulf %121, %114 : vector<8x512xf32>
    %cst_47 = arith.constant 1.000000e-03 : f32
    %123 = vector.broadcast %cst_47 : f32 to vector<8x512xf32>
    %124 = arith.addf %123, %122 : vector<8x512xf32>
    %cst_48 = arith.constant 0.995999991 : f32
    %125 = vector.broadcast %cst_48 : f32 to vector<8x512xf32>
    %126 = arith.mulf %125, %115 : vector<8x512xf32>
    %cst_49 = arith.constant 1.000000e-03 : f32
    %127 = vector.broadcast %cst_49 : f32 to vector<8x512xf32>
    %128 = arith.addf %127, %126 : vector<8x512xf32>
    %cst_50 = arith.constant 0.995999991 : f32
    %129 = vector.broadcast %cst_50 : f32 to vector<8x512xf32>
    %130 = arith.mulf %129, %116 : vector<8x512xf32>
    %cst_51 = arith.constant 1.000000e-03 : f32
    %131 = vector.broadcast %cst_51 : f32 to vector<8x512xf32>
    %132 = arith.addf %131, %130 : vector<8x512xf32>
    %cst_52 = arith.constant 6.000000e+00 : f32
    %133 = vector.broadcast %cst_52 : f32 to vector<8x512xf32>
    %134 = arith.mulf %133, %120 : vector<8x512xf32>
    %cst_53 = arith.constant 6.000000e+00 : f32
    %135 = vector.broadcast %cst_53 : f32 to vector<8x512xf32>
    %136 = arith.mulf %135, %124 : vector<8x512xf32>
    %cst_54 = arith.constant 6.000000e+00 : f32
    %137 = vector.broadcast %cst_54 : f32 to vector<8x512xf32>
    %138 = arith.mulf %137, %128 : vector<8x512xf32>
    %cst_55 = arith.constant 6.000000e+00 : f32
    %139 = vector.broadcast %cst_55 : f32 to vector<8x512xf32>
    %140 = arith.mulf %139, %132 : vector<8x512xf32>
    %cst_56 = arith.constant -3.000000e+00 : f32
    %141 = vector.broadcast %cst_56 : f32 to vector<8x512xf32>
    %cst_57 = arith.constant 6.000000e+00 : f32
    %142 = vector.broadcast %cst_57 : f32 to vector<8x512xf32>
    %143 = arith.mulf %142, %120 : vector<8x512xf32>
    %cst_58 = arith.constant -3.000000e+00 : f32
    %144 = vector.broadcast %cst_58 : f32 to vector<8x512xf32>
    %145 = arith.addf %144, %143 : vector<8x512xf32>
    %146 = arith.addf %120, %124 : vector<8x512xf32>
    %cst_59 = arith.constant 6.000000e+00 : f32
    %147 = vector.broadcast %cst_59 : f32 to vector<8x512xf32>
    %148 = arith.mulf %147, %146 : vector<8x512xf32>
    %cst_60 = arith.constant -3.000000e+00 : f32
    %149 = vector.broadcast %cst_60 : f32 to vector<8x512xf32>
    %150 = arith.addf %149, %148 : vector<8x512xf32>
    %151 = arith.addf %146, %128 : vector<8x512xf32>
    %cst_61 = arith.constant 6.000000e+00 : f32
    %152 = vector.broadcast %cst_61 : f32 to vector<8x512xf32>
    %153 = arith.mulf %152, %151 : vector<8x512xf32>
    %cst_62 = arith.constant -3.000000e+00 : f32
    %154 = vector.broadcast %cst_62 : f32 to vector<8x512xf32>
    %155 = arith.addf %154, %153 : vector<8x512xf32>
    %156 = vector.extract_strided_slice %141 {offsets = [0, 0], sizes = [4, 512], strides = [1, 1]} : vector<8x512xf32> to vector<4x512xf32>
    %157 = vector.extract_strided_slice %145 {offsets = [0, 0], sizes = [4, 512], strides = [1, 1]} : vector<8x512xf32> to vector<4x512xf32>
    %158 = vector.extract_strided_slice %150 {offsets = [0, 0], sizes = [4, 512], strides = [1, 1]} : vector<8x512xf32> to vector<4x512xf32>
    %159 = vector.extract_strided_slice %155 {offsets = [0, 0], sizes = [4, 512], strides = [1, 1]} : vector<8x512xf32> to vector<4x512xf32>
    %160 = vector.extract_strided_slice %141 {offsets = [4, 0], sizes = [4, 512], strides = [1, 1]} : vector<8x512xf32> to vector<4x512xf32>
    %161 = vector.extract_strided_slice %145 {offsets = [4, 0], sizes = [4, 512], strides = [1, 1]} : vector<8x512xf32> to vector<4x512xf32>
    %162 = vector.extract_strided_slice %150 {offsets = [4, 0], sizes = [4, 512], strides = [1, 1]} : vector<8x512xf32> to vector<4x512xf32>
    %163 = vector.extract_strided_slice %155 {offsets = [4, 0], sizes = [4, 512], strides = [1, 1]} : vector<8x512xf32> to vector<4x512xf32>
    %164 = vector.extract_strided_slice %134 {offsets = [0, 0], sizes = [4, 512], strides = [1, 1]} : vector<8x512xf32> to vector<4x512xf32>
    %165 = vector.extract_strided_slice %136 {offsets = [0, 0], sizes = [4, 512], strides = [1, 1]} : vector<8x512xf32> to vector<4x512xf32>
    %166 = vector.extract_strided_slice %138 {offsets = [0, 0], sizes = [4, 512], strides = [1, 1]} : vector<8x512xf32> to vector<4x512xf32>
    %167 = vector.extract_strided_slice %140 {offsets = [0, 0], sizes = [4, 512], strides = [1, 1]} : vector<8x512xf32> to vector<4x512xf32>
    %168 = vector.extract_strided_slice %134 {offsets = [4, 0], sizes = [4, 512], strides = [1, 1]} : vector<8x512xf32> to vector<4x512xf32>
    %169 = vector.extract_strided_slice %136 {offsets = [4, 0], sizes = [4, 512], strides = [1, 1]} : vector<8x512xf32> to vector<4x512xf32>
    %170 = vector.extract_strided_slice %138 {offsets = [4, 0], sizes = [4, 512], strides = [1, 1]} : vector<8x512xf32> to vector<4x512xf32>
    %171 = vector.extract_strided_slice %140 {offsets = [4, 0], sizes = [4, 512], strides = [1, 1]} : vector<8x512xf32> to vector<4x512xf32>
    %cst_63 = arith.constant 1.000000e+00 : f32
    %172 = vector.broadcast %cst_63 : f32 to vector<4x512xf32>
    %cst_64 = arith.constant 0.000000e+00 : f32
    %173 = vector.broadcast %cst_64 : f32 to vector<4x512xf32>
    %174 = arith.maximumf %86, %173 : vector<4x512xf32>
    %175 = math.absf %86 : vector<4x512xf32>
    %cst_65 = arith.constant 0.000000e+00 : f32
    %176 = vector.broadcast %cst_65 : f32 to vector<4x512xf32>
    %177 = arith.subf %176, %175 : vector<4x512xf32>
    %178 = math.exp %177 : vector<4x512xf32>
    %cst_66 = arith.constant 1.000000e+00 : f32
    %179 = vector.broadcast %cst_66 : f32 to vector<4x512xf32>
    %180 = arith.addf %179, %178 : vector<4x512xf32>
    %181 = math.log %180 : vector<4x512xf32>
    %182 = arith.addf %174, %181 : vector<4x512xf32>
    %cst_67 = arith.constant 1.000000e-03 : f32
    %183 = vector.broadcast %cst_67 : f32 to vector<4x512xf32>
    %184 = arith.addf %183, %182 : vector<4x512xf32>
    %cst_68 = arith.constant 0.000000e+00 : f32
    %185 = vector.broadcast %cst_68 : f32 to vector<4x512xf32>
    %186 = arith.maximumf %87, %185 : vector<4x512xf32>
    %187 = math.absf %87 : vector<4x512xf32>
    %cst_69 = arith.constant 0.000000e+00 : f32
    %188 = vector.broadcast %cst_69 : f32 to vector<4x512xf32>
    %189 = arith.subf %188, %187 : vector<4x512xf32>
    %190 = math.exp %189 : vector<4x512xf32>
    %cst_70 = arith.constant 1.000000e+00 : f32
    %191 = vector.broadcast %cst_70 : f32 to vector<4x512xf32>
    %192 = arith.addf %191, %190 : vector<4x512xf32>
    %193 = math.log %192 : vector<4x512xf32>
    %194 = arith.addf %186, %193 : vector<4x512xf32>
    %cst_71 = arith.constant 1.000000e-03 : f32
    %195 = vector.broadcast %cst_71 : f32 to vector<4x512xf32>
    %196 = arith.addf %195, %194 : vector<4x512xf32>
    %cst_72 = arith.constant 0.000000e+00 : f32
    %197 = vector.broadcast %cst_72 : f32 to vector<4x512xf32>
    %198 = arith.maximumf %88, %197 : vector<4x512xf32>
    %199 = math.absf %88 : vector<4x512xf32>
    %cst_73 = arith.constant 0.000000e+00 : f32
    %200 = vector.broadcast %cst_73 : f32 to vector<4x512xf32>
    %201 = arith.subf %200, %199 : vector<4x512xf32>
    %202 = math.exp %201 : vector<4x512xf32>
    %cst_74 = arith.constant 1.000000e+00 : f32
    %203 = vector.broadcast %cst_74 : f32 to vector<4x512xf32>
    %204 = arith.addf %203, %202 : vector<4x512xf32>
    %205 = math.log %204 : vector<4x512xf32>
    %206 = arith.addf %198, %205 : vector<4x512xf32>
    %cst_75 = arith.constant 1.000000e-03 : f32
    %207 = vector.broadcast %cst_75 : f32 to vector<4x512xf32>
    %208 = arith.addf %207, %206 : vector<4x512xf32>
    %cst_76 = arith.constant 1.000000e+00 : f32
    %209 = vector.broadcast %cst_76 : f32 to vector<4x512xf32>
    %210 = arith.cmpf oge, %97, %157 : vector<4x512xf32>
    %211 = arith.select %210, %157, %156 : vector<4x512xi1>, vector<4x512xf32>
    %212 = arith.select %210, %165, %164 : vector<4x512xi1>, vector<4x512xf32>
    %213 = arith.select %210, %161, %160 : vector<4x512xi1>, vector<4x512xf32>
    %214 = arith.select %210, %169, %168 : vector<4x512xi1>, vector<4x512xf32>
    %215 = arith.select %210, %184, %172 : vector<4x512xi1>, vector<4x512xf32>
    %216 = arith.select %210, %196, %184 : vector<4x512xi1>, vector<4x512xf32>
    %217 = arith.cmpf oge, %97, %158 : vector<4x512xf32>
    %218 = arith.select %217, %158, %211 : vector<4x512xi1>, vector<4x512xf32>
    %219 = arith.select %217, %166, %212 : vector<4x512xi1>, vector<4x512xf32>
    %220 = arith.select %217, %162, %213 : vector<4x512xi1>, vector<4x512xf32>
    %221 = arith.select %217, %170, %214 : vector<4x512xi1>, vector<4x512xf32>
    %222 = arith.select %217, %196, %215 : vector<4x512xi1>, vector<4x512xf32>
    %223 = arith.select %217, %208, %216 : vector<4x512xi1>, vector<4x512xf32>
    %224 = arith.cmpf oge, %97, %159 : vector<4x512xf32>
    %225 = arith.select %224, %159, %218 : vector<4x512xi1>, vector<4x512xf32>
    %226 = arith.select %224, %167, %219 : vector<4x512xi1>, vector<4x512xf32>
    %227 = arith.select %224, %163, %220 : vector<4x512xi1>, vector<4x512xf32>
    %228 = arith.select %224, %171, %221 : vector<4x512xi1>, vector<4x512xf32>
    %229 = arith.select %224, %208, %222 : vector<4x512xi1>, vector<4x512xf32>
    %230 = arith.select %224, %209, %223 : vector<4x512xi1>, vector<4x512xf32>
    %cst_77 = arith.constant 1.000000e+00 : f32
    %231 = vector.broadcast %cst_77 : f32 to vector<4x512xf32>
    %232 = arith.divf %231, %226 : vector<4x512xf32>
    %233 = arith.mulf %228, %232 : vector<4x512xf32>
    %234 = arith.subf %97, %225 : vector<4x512xf32>
    %235 = arith.mulf %234, %232 : vector<4x512xf32>
    %cst_78 = arith.constant 1.000000e+00 : f32
    %236 = vector.broadcast %cst_78 : f32 to vector<4x512xf32>
    %237 = arith.subf %236, %235 : vector<4x512xf32>
    %238 = arith.mulf %235, %237 : vector<4x512xf32>
    %239 = arith.mulf %235, %235 : vector<4x512xf32>
    %240 = arith.mulf %233, %239 : vector<4x512xf32>
    %241 = arith.mulf %229, %238 : vector<4x512xf32>
    %242 = arith.addf %240, %241 : vector<4x512xf32>
    %243 = arith.mulf %228, %242 : vector<4x512xf32>
    %244 = arith.addf %229, %230 : vector<4x512xf32>
    %cst_79 = arith.constant 2.000000e+00 : f32
    %245 = vector.broadcast %cst_79 : f32 to vector<4x512xf32>
    %246 = arith.mulf %245, %233 : vector<4x512xf32>
    %247 = arith.subf %244, %246 : vector<4x512xf32>
    %248 = arith.mulf %247, %238 : vector<4x512xf32>
    %249 = arith.addf %233, %248 : vector<4x512xf32>
    %cst_80 = arith.constant 1.000000e+00 : f32
    %250 = vector.broadcast %cst_80 : f32 to vector<4x512xf32>
    %251 = arith.divf %250, %249 : vector<4x512xf32>
    %252 = arith.mulf %233, %233 : vector<4x512xf32>
    %253 = arith.mulf %230, %239 : vector<4x512xf32>
    %cst_81 = arith.constant 2.000000e+00 : f32
    %254 = vector.broadcast %cst_81 : f32 to vector<4x512xf32>
    %255 = arith.mulf %254, %233 : vector<4x512xf32>
    %256 = arith.mulf %255, %238 : vector<4x512xf32>
    %257 = arith.addf %253, %256 : vector<4x512xf32>
    %258 = arith.mulf %229, %237 : vector<4x512xf32>
    %259 = arith.mulf %258, %237 : vector<4x512xf32>
    %260 = arith.addf %257, %259 : vector<4x512xf32>
    %261 = arith.mulf %252, %260 : vector<4x512xf32>
    %262 = arith.mulf %243, %251 : vector<4x512xf32>
    %263 = arith.addf %227, %262 : vector<4x512xf32>
    %264 = arith.select %93, %263, %32 : vector<4x512xi1>, vector<4x512xf32>
    %265 = arith.mulf %251, %251 : vector<4x512xf32>
    %266 = arith.mulf %261, %265 : vector<4x512xf32>
    %267 = math.log %266 : vector<4x512xf32>
    %cst_82 = arith.constant 0.000000e+00 : f32
    %268 = vector.broadcast %cst_82 : f32 to vector<4x512xf32>
    %269 = arith.select %93, %267, %268 : vector<4x512xi1>, vector<4x512xf32>
    %cst_83 = arith.constant dense<0.000000e+00> : vector<512xf32>
    %270 = vector.multi_reduction <add>, %269, %cst_83 [0] : vector<4x512xf32> to vector<512xf32>
    %271 = vector.shape_cast %270 : vector<512xf32> to vector<1x512xf32>
    %272 = arith.addf %27, %271 : vector<1x512xf32>
    %273 = vector.extract_strided_slice %0 {offsets = [0, 0], sizes = [1, 512], strides = [1, 1]} : vector<8x512xf32> to vector<1x512xf32>
    %274 = vector.extract_strided_slice %264 {offsets = [3, 0], sizes = [1, 512], strides = [1, 1]} : vector<4x512xf32> to vector<1x512xf32>
    %275 = vector.extract_strided_slice %264 {offsets = [1, 0], sizes = [1, 512], strides = [1, 1]} : vector<4x512xf32> to vector<1x512xf32>
    %276 = vector.extract_strided_slice %264 {offsets = [2, 0], sizes = [1, 512], strides = [1, 1]} : vector<4x512xf32> to vector<1x512xf32>
    %277 = vector.extract_strided_slice %0 {offsets = [4, 0], sizes = [1, 512], strides = [1, 1]} : vector<8x512xf32> to vector<1x512xf32>
    %278 = vector.extract_strided_slice %0 {offsets = [5, 0], sizes = [1, 512], strides = [1, 1]} : vector<8x512xf32> to vector<1x512xf32>
    %279 = vector.extract_strided_slice %0 {offsets = [6, 0], sizes = [1, 512], strides = [1, 1]} : vector<8x512xf32> to vector<1x512xf32>
    %280 = vector.extract_strided_slice %264 {offsets = [0, 0], sizes = [1, 512], strides = [1, 1]} : vector<4x512xf32> to vector<1x512xf32>
    %281 = tpu.concatenate %273, %274, %275, %276, %277, %278, %279, %280 in 0 : vector<1x512xf32>, vector<1x512xf32>, vector<1x512xf32>, vector<1x512xf32>, vector<1x512xf32>, vector<1x512xf32>, vector<1x512xf32>, vector<1x512xf32> -> vector<8x512xf32>
    %282 = vector.extract_strided_slice %281 {offsets = [4, 0], sizes = [1, 512], strides = [1, 1]} : vector<8x512xf32> to vector<1x512xf32>
    %283 = vector.extract_strided_slice %281 {offsets = [6, 0], sizes = [1, 512], strides = [1, 1]} : vector<8x512xf32> to vector<1x512xf32>
    %284 = vector.extract_strided_slice %281 {offsets = [2, 0], sizes = [1, 512], strides = [1, 1]} : vector<8x512xf32> to vector<1x512xf32>
    %285 = vector.extract_strided_slice %281 {offsets = [5, 0], sizes = [1, 512], strides = [1, 1]} : vector<8x512xf32> to vector<1x512xf32>
    %286 = tpu.concatenate %282, %283, %284, %285 in 0 : vector<1x512xf32>, vector<1x512xf32>, vector<1x512xf32>, vector<1x512xf32> -> vector<4x512xf32>
    %287 = vector.extract_strided_slice %2 {offsets = [32, 0], sizes = [32, 8], strides = [1, 1]} : vector<64x8xbf16> to vector<32x8xbf16>
    %288 = arith.truncf %281 : vector<8x512xf32> to vector<8x512xbf16>
    %cst_84 = arith.constant dense<0.000000e+00> : vector<32x512xf32>
    %289 = tpu.matmul %287, %288, %cst_84 {dimension_numbers = #tpu.dot_dimension_numbers<[1], [0], [0], [1], [0, 0, 1, 1], [], []>} : vector<32x8xbf16>, vector<8x512xbf16>, vector<32x512xf32> -> vector<32x512xf32>
    %290 = vector.extract_strided_slice %16 {offsets = [32, 0], sizes = [32, 512], strides = [1, 1]} : vector<64x512xf32> to vector<32x512xf32>
    %291 = arith.addf %289, %290 : vector<32x512xf32>
    %cst_85 = arith.constant 0.000000e+00 : f32
    %292 = vector.broadcast %cst_85 : f32 to vector<32x512xf32>
    %293 = arith.maximumf %291, %292 : vector<32x512xf32>
    %294 = vector.extract_strided_slice %5 {offsets = [64, 0], sizes = [32, 32], strides = [1, 1]} : vector<128x32xbf16> to vector<32x32xbf16>
    %295 = arith.truncf %293 : vector<32x512xf32> to vector<32x512xbf16>
    %cst_86 = arith.constant dense<0.000000e+00> : vector<32x512xf32>
    %296 = tpu.matmul %294, %295, %cst_86 {dimension_numbers = #tpu.dot_dimension_numbers<[1], [0], [0], [1], [0, 0, 1, 1], [], []>} : vector<32x32xbf16>, vector<32x512xbf16>, vector<32x512xf32> -> vector<32x512xf32>
    %297 = vector.extract_strided_slice %6 {offsets = [64, 0], sizes = [32, 1], strides = [1, 1]} : vector<128x1xf32> to vector<32x1xf32>
    %298 = vector.broadcast %297 : vector<32x1xf32> to vector<32x512xf32>
    %299 = arith.addf %296, %298 : vector<32x512xf32>
    %cst_87 = arith.constant 0.000000e+00 : f32
    %300 = vector.broadcast %cst_87 : f32 to vector<32x512xf32>
    %301 = arith.maximumf %299, %300 : vector<32x512xf32>
    %302 = vector.extract_strided_slice %7 {offsets = [64, 0], sizes = [32, 32], strides = [1, 1]} : vector<128x32xbf16> to vector<32x32xbf16>
    %303 = arith.truncf %301 : vector<32x512xf32> to vector<32x512xbf16>
    %cst_88 = arith.constant dense<0.000000e+00> : vector<32x512xf32>
    %304 = tpu.matmul %302, %303, %cst_88 {dimension_numbers = #tpu.dot_dimension_numbers<[1], [0], [0], [1], [0, 0, 1, 1], [], []>} : vector<32x32xbf16>, vector<32x512xbf16>, vector<32x512xf32> -> vector<32x512xf32>
    %305 = vector.extract_strided_slice %8 {offsets = [64, 0], sizes = [32, 1], strides = [1, 1]} : vector<128x1xf32> to vector<32x1xf32>
    %306 = vector.broadcast %305 : vector<32x1xf32> to vector<32x512xf32>
    %307 = arith.addf %304, %306 : vector<32x512xf32>
    %308 = vector.extract_strided_slice %26 {offsets = [64, 0], sizes = [32, 512], strides = [1, 1]} : vector<128x512xf32> to vector<32x512xf32>
    %309 = arith.mulf %307, %308 : vector<32x512xf32>
    %310 = arith.addf %291, %309 : vector<32x512xf32>
    %cst_89 = arith.constant 0.000000e+00 : f32
    %311 = vector.broadcast %cst_89 : f32 to vector<32x512xf32>
    %312 = arith.maximumf %310, %311 : vector<32x512xf32>
    %313 = vector.extract_strided_slice %5 {offsets = [96, 0], sizes = [32, 32], strides = [1, 1]} : vector<128x32xbf16> to vector<32x32xbf16>
    %314 = arith.truncf %312 : vector<32x512xf32> to vector<32x512xbf16>
    %cst_90 = arith.constant dense<0.000000e+00> : vector<32x512xf32>
    %315 = tpu.matmul %313, %314, %cst_90 {dimension_numbers = #tpu.dot_dimension_numbers<[1], [0], [0], [1], [0, 0, 1, 1], [], []>} : vector<32x32xbf16>, vector<32x512xbf16>, vector<32x512xf32> -> vector<32x512xf32>
    %316 = vector.extract_strided_slice %6 {offsets = [96, 0], sizes = [32, 1], strides = [1, 1]} : vector<128x1xf32> to vector<32x1xf32>
    %317 = vector.broadcast %316 : vector<32x1xf32> to vector<32x512xf32>
    %318 = arith.addf %315, %317 : vector<32x512xf32>
    %cst_91 = arith.constant 0.000000e+00 : f32
    %319 = vector.broadcast %cst_91 : f32 to vector<32x512xf32>
    %320 = arith.maximumf %318, %319 : vector<32x512xf32>
    %321 = vector.extract_strided_slice %7 {offsets = [96, 0], sizes = [32, 32], strides = [1, 1]} : vector<128x32xbf16> to vector<32x32xbf16>
    %322 = arith.truncf %320 : vector<32x512xf32> to vector<32x512xbf16>
    %cst_92 = arith.constant dense<0.000000e+00> : vector<32x512xf32>
    %323 = tpu.matmul %321, %322, %cst_92 {dimension_numbers = #tpu.dot_dimension_numbers<[1], [0], [0], [1], [0, 0, 1, 1], [], []>} : vector<32x32xbf16>, vector<32x512xbf16>, vector<32x512xf32> -> vector<32x512xf32>
    %324 = vector.extract_strided_slice %8 {offsets = [96, 0], sizes = [32, 1], strides = [1, 1]} : vector<128x1xf32> to vector<32x1xf32>
    %325 = vector.broadcast %324 : vector<32x1xf32> to vector<32x512xf32>
    %326 = arith.addf %323, %325 : vector<32x512xf32>
    %327 = vector.extract_strided_slice %26 {offsets = [96, 0], sizes = [32, 512], strides = [1, 1]} : vector<128x512xf32> to vector<32x512xf32>
    %328 = arith.mulf %326, %327 : vector<32x512xf32>
    %329 = arith.addf %310, %328 : vector<32x512xf32>
    %330 = vector.extract_strided_slice %11 {offsets = [64, 0], sizes = [64, 32], strides = [1, 1]} : vector<128x32xbf16> to vector<64x32xbf16>
    %331 = arith.truncf %329 : vector<32x512xf32> to vector<32x512xbf16>
    %cst_93 = arith.constant dense<0.000000e+00> : vector<64x512xf32>
    %332 = tpu.matmul %330, %331, %cst_93 {dimension_numbers = #tpu.dot_dimension_numbers<[1], [0], [0], [1], [0, 0, 1, 1], [], []>} : vector<64x32xbf16>, vector<32x512xbf16>, vector<64x512xf32> -> vector<64x512xf32>
    %333 = vector.extract_strided_slice %12 {offsets = [64, 0], sizes = [64, 1], strides = [1, 1]} : vector<128x1xf32> to vector<64x1xf32>
    %334 = vector.broadcast %333 : vector<64x1xf32> to vector<64x512xf32>
    %335 = arith.addf %332, %334 : vector<64x512xf32>
    %336 = vector.extract_strided_slice %335 {offsets = [0, 0], sizes = [8, 512], strides = [1, 1]} : vector<64x512xf32> to vector<8x512xf32>
    %337 = vector.extract_strided_slice %335 {offsets = [8, 0], sizes = [8, 512], strides = [1, 1]} : vector<64x512xf32> to vector<8x512xf32>
    %338 = vector.extract_strided_slice %335 {offsets = [16, 0], sizes = [8, 512], strides = [1, 1]} : vector<64x512xf32> to vector<8x512xf32>
    %339 = vector.extract_strided_slice %335 {offsets = [24, 0], sizes = [8, 512], strides = [1, 1]} : vector<64x512xf32> to vector<8x512xf32>
    %340 = vector.extract_strided_slice %335 {offsets = [32, 0], sizes = [4, 512], strides = [1, 1]} : vector<64x512xf32> to vector<4x512xf32>
    %341 = vector.extract_strided_slice %335 {offsets = [40, 0], sizes = [4, 512], strides = [1, 1]} : vector<64x512xf32> to vector<4x512xf32>
    %342 = vector.extract_strided_slice %335 {offsets = [48, 0], sizes = [4, 512], strides = [1, 1]} : vector<64x512xf32> to vector<4x512xf32>
    %cst_94 = arith.constant -3.000000e+00 : f32
    %343 = vector.broadcast %cst_94 : f32 to vector<4x512xf32>
    %344 = arith.cmpf oge, %286, %343 : vector<4x512xf32>
    %cst_95 = arith.constant 3.000000e+00 : f32
    %345 = vector.broadcast %cst_95 : f32 to vector<4x512xf32>
    %346 = arith.cmpf ole, %286, %345 : vector<4x512xf32>
    %347 = arith.andi %344, %346 : vector<4x512xi1>
    %cst_96 = arith.constant -3.000000e+00 : f32
    %cst_97 = arith.constant 3.000000e+00 : f32
    %348 = vector.broadcast %cst_96 : f32 to vector<4x512xf32>
    %349 = arith.maximumf %348, %286 : vector<4x512xf32>
    %350 = vector.broadcast %cst_97 : f32 to vector<4x512xf32>
    %351 = arith.minimumf %350, %349 : vector<4x512xf32>
    %352 = arith.maximumf %336, %337 : vector<8x512xf32>
    %353 = arith.maximumf %352, %338 : vector<8x512xf32>
    %354 = arith.maximumf %353, %339 : vector<8x512xf32>
    %355 = arith.subf %336, %354 : vector<8x512xf32>
    %356 = math.exp %355 : vector<8x512xf32>
    %357 = arith.subf %337, %354 : vector<8x512xf32>
    %358 = math.exp %357 : vector<8x512xf32>
    %359 = arith.subf %338, %354 : vector<8x512xf32>
    %360 = math.exp %359 : vector<8x512xf32>
    %361 = arith.subf %339, %354 : vector<8x512xf32>
    %362 = math.exp %361 : vector<8x512xf32>
    %363 = arith.addf %356, %358 : vector<8x512xf32>
    %364 = arith.addf %363, %360 : vector<8x512xf32>
    %365 = arith.addf %364, %362 : vector<8x512xf32>
    %366 = tpu.reciprocal %365 {approx = true} : vector<8x512xf32> -> vector<8x512xf32>
    %367 = arith.mulf %356, %366 : vector<8x512xf32>
    %368 = arith.mulf %358, %366 : vector<8x512xf32>
    %369 = arith.mulf %360, %366 : vector<8x512xf32>
    %370 = arith.mulf %362, %366 : vector<8x512xf32>
    %cst_98 = arith.constant 0.995999991 : f32
    %371 = vector.broadcast %cst_98 : f32 to vector<8x512xf32>
    %372 = arith.mulf %371, %367 : vector<8x512xf32>
    %cst_99 = arith.constant 1.000000e-03 : f32
    %373 = vector.broadcast %cst_99 : f32 to vector<8x512xf32>
    %374 = arith.addf %373, %372 : vector<8x512xf32>
    %cst_100 = arith.constant 0.995999991 : f32
    %375 = vector.broadcast %cst_100 : f32 to vector<8x512xf32>
    %376 = arith.mulf %375, %368 : vector<8x512xf32>
    %cst_101 = arith.constant 1.000000e-03 : f32
    %377 = vector.broadcast %cst_101 : f32 to vector<8x512xf32>
    %378 = arith.addf %377, %376 : vector<8x512xf32>
    %cst_102 = arith.constant 0.995999991 : f32
    %379 = vector.broadcast %cst_102 : f32 to vector<8x512xf32>
    %380 = arith.mulf %379, %369 : vector<8x512xf32>
    %cst_103 = arith.constant 1.000000e-03 : f32
    %381 = vector.broadcast %cst_103 : f32 to vector<8x512xf32>
    %382 = arith.addf %381, %380 : vector<8x512xf32>
    %cst_104 = arith.constant 0.995999991 : f32
    %383 = vector.broadcast %cst_104 : f32 to vector<8x512xf32>
    %384 = arith.mulf %383, %370 : vector<8x512xf32>
    %cst_105 = arith.constant 1.000000e-03 : f32
    %385 = vector.broadcast %cst_105 : f32 to vector<8x512xf32>
    %386 = arith.addf %385, %384 : vector<8x512xf32>
    %cst_106 = arith.constant 6.000000e+00 : f32
    %387 = vector.broadcast %cst_106 : f32 to vector<8x512xf32>
    %388 = arith.mulf %387, %374 : vector<8x512xf32>
    %cst_107 = arith.constant 6.000000e+00 : f32
    %389 = vector.broadcast %cst_107 : f32 to vector<8x512xf32>
    %390 = arith.mulf %389, %378 : vector<8x512xf32>
    %cst_108 = arith.constant 6.000000e+00 : f32
    %391 = vector.broadcast %cst_108 : f32 to vector<8x512xf32>
    %392 = arith.mulf %391, %382 : vector<8x512xf32>
    %cst_109 = arith.constant 6.000000e+00 : f32
    %393 = vector.broadcast %cst_109 : f32 to vector<8x512xf32>
    %394 = arith.mulf %393, %386 : vector<8x512xf32>
    %cst_110 = arith.constant -3.000000e+00 : f32
    %395 = vector.broadcast %cst_110 : f32 to vector<8x512xf32>
    %cst_111 = arith.constant 6.000000e+00 : f32
    %396 = vector.broadcast %cst_111 : f32 to vector<8x512xf32>
    %397 = arith.mulf %396, %374 : vector<8x512xf32>
    %cst_112 = arith.constant -3.000000e+00 : f32
    %398 = vector.broadcast %cst_112 : f32 to vector<8x512xf32>
    %399 = arith.addf %398, %397 : vector<8x512xf32>
    %400 = arith.addf %374, %378 : vector<8x512xf32>
    %cst_113 = arith.constant 6.000000e+00 : f32
    %401 = vector.broadcast %cst_113 : f32 to vector<8x512xf32>
    %402 = arith.mulf %401, %400 : vector<8x512xf32>
    %cst_114 = arith.constant -3.000000e+00 : f32
    %403 = vector.broadcast %cst_114 : f32 to vector<8x512xf32>
    %404 = arith.addf %403, %402 : vector<8x512xf32>
    %405 = arith.addf %400, %382 : vector<8x512xf32>
    %cst_115 = arith.constant 6.000000e+00 : f32
    %406 = vector.broadcast %cst_115 : f32 to vector<8x512xf32>
    %407 = arith.mulf %406, %405 : vector<8x512xf32>
    %cst_116 = arith.constant -3.000000e+00 : f32
    %408 = vector.broadcast %cst_116 : f32 to vector<8x512xf32>
    %409 = arith.addf %408, %407 : vector<8x512xf32>
    %410 = vector.extract_strided_slice %395 {offsets = [0, 0], sizes = [4, 512], strides = [1, 1]} : vector<8x512xf32> to vector<4x512xf32>
    %411 = vector.extract_strided_slice %399 {offsets = [0, 0], sizes = [4, 512], strides = [1, 1]} : vector<8x512xf32> to vector<4x512xf32>
    %412 = vector.extract_strided_slice %404 {offsets = [0, 0], sizes = [4, 512], strides = [1, 1]} : vector<8x512xf32> to vector<4x512xf32>
    %413 = vector.extract_strided_slice %409 {offsets = [0, 0], sizes = [4, 512], strides = [1, 1]} : vector<8x512xf32> to vector<4x512xf32>
    %414 = vector.extract_strided_slice %395 {offsets = [4, 0], sizes = [4, 512], strides = [1, 1]} : vector<8x512xf32> to vector<4x512xf32>
    %415 = vector.extract_strided_slice %399 {offsets = [4, 0], sizes = [4, 512], strides = [1, 1]} : vector<8x512xf32> to vector<4x512xf32>
    %416 = vector.extract_strided_slice %404 {offsets = [4, 0], sizes = [4, 512], strides = [1, 1]} : vector<8x512xf32> to vector<4x512xf32>
    %417 = vector.extract_strided_slice %409 {offsets = [4, 0], sizes = [4, 512], strides = [1, 1]} : vector<8x512xf32> to vector<4x512xf32>
    %418 = vector.extract_strided_slice %388 {offsets = [0, 0], sizes = [4, 512], strides = [1, 1]} : vector<8x512xf32> to vector<4x512xf32>
    %419 = vector.extract_strided_slice %390 {offsets = [0, 0], sizes = [4, 512], strides = [1, 1]} : vector<8x512xf32> to vector<4x512xf32>
    %420 = vector.extract_strided_slice %392 {offsets = [0, 0], sizes = [4, 512], strides = [1, 1]} : vector<8x512xf32> to vector<4x512xf32>
    %421 = vector.extract_strided_slice %394 {offsets = [0, 0], sizes = [4, 512], strides = [1, 1]} : vector<8x512xf32> to vector<4x512xf32>
    %422 = vector.extract_strided_slice %388 {offsets = [4, 0], sizes = [4, 512], strides = [1, 1]} : vector<8x512xf32> to vector<4x512xf32>
    %423 = vector.extract_strided_slice %390 {offsets = [4, 0], sizes = [4, 512], strides = [1, 1]} : vector<8x512xf32> to vector<4x512xf32>
    %424 = vector.extract_strided_slice %392 {offsets = [4, 0], sizes = [4, 512], strides = [1, 1]} : vector<8x512xf32> to vector<4x512xf32>
    %425 = vector.extract_strided_slice %394 {offsets = [4, 0], sizes = [4, 512], strides = [1, 1]} : vector<8x512xf32> to vector<4x512xf32>
    %cst_117 = arith.constant 1.000000e+00 : f32
    %426 = vector.broadcast %cst_117 : f32 to vector<4x512xf32>
    %cst_118 = arith.constant 0.000000e+00 : f32
    %427 = vector.broadcast %cst_118 : f32 to vector<4x512xf32>
    %428 = arith.maximumf %340, %427 : vector<4x512xf32>
    %429 = math.absf %340 : vector<4x512xf32>
    %cst_119 = arith.constant 0.000000e+00 : f32
    %430 = vector.broadcast %cst_119 : f32 to vector<4x512xf32>
    %431 = arith.subf %430, %429 : vector<4x512xf32>
    %432 = math.exp %431 : vector<4x512xf32>
    %cst_120 = arith.constant 1.000000e+00 : f32
    %433 = vector.broadcast %cst_120 : f32 to vector<4x512xf32>
    %434 = arith.addf %433, %432 : vector<4x512xf32>
    %435 = math.log %434 : vector<4x512xf32>
    %436 = arith.addf %428, %435 : vector<4x512xf32>
    %cst_121 = arith.constant 1.000000e-03 : f32
    %437 = vector.broadcast %cst_121 : f32 to vector<4x512xf32>
    %438 = arith.addf %437, %436 : vector<4x512xf32>
    %cst_122 = arith.constant 0.000000e+00 : f32
    %439 = vector.broadcast %cst_122 : f32 to vector<4x512xf32>
    %440 = arith.maximumf %341, %439 : vector<4x512xf32>
    %441 = math.absf %341 : vector<4x512xf32>
    %cst_123 = arith.constant 0.000000e+00 : f32
    %442 = vector.broadcast %cst_123 : f32 to vector<4x512xf32>
    %443 = arith.subf %442, %441 : vector<4x512xf32>
    %444 = math.exp %443 : vector<4x512xf32>
    %cst_124 = arith.constant 1.000000e+00 : f32
    %445 = vector.broadcast %cst_124 : f32 to vector<4x512xf32>
    %446 = arith.addf %445, %444 : vector<4x512xf32>
    %447 = math.log %446 : vector<4x512xf32>
    %448 = arith.addf %440, %447 : vector<4x512xf32>
    %cst_125 = arith.constant 1.000000e-03 : f32
    %449 = vector.broadcast %cst_125 : f32 to vector<4x512xf32>
    %450 = arith.addf %449, %448 : vector<4x512xf32>
    %cst_126 = arith.constant 0.000000e+00 : f32
    %451 = vector.broadcast %cst_126 : f32 to vector<4x512xf32>
    %452 = arith.maximumf %342, %451 : vector<4x512xf32>
    %453 = math.absf %342 : vector<4x512xf32>
    %cst_127 = arith.constant 0.000000e+00 : f32
    %454 = vector.broadcast %cst_127 : f32 to vector<4x512xf32>
    %455 = arith.subf %454, %453 : vector<4x512xf32>
    %456 = math.exp %455 : vector<4x512xf32>
    %cst_128 = arith.constant 1.000000e+00 : f32
    %457 = vector.broadcast %cst_128 : f32 to vector<4x512xf32>
    %458 = arith.addf %457, %456 : vector<4x512xf32>
    %459 = math.log %458 : vector<4x512xf32>
    %460 = arith.addf %452, %459 : vector<4x512xf32>
    %cst_129 = arith.constant 1.000000e-03 : f32
    %461 = vector.broadcast %cst_129 : f32 to vector<4x512xf32>
    %462 = arith.addf %461, %460 : vector<4x512xf32>
    %cst_130 = arith.constant 1.000000e+00 : f32
    %463 = vector.broadcast %cst_130 : f32 to vector<4x512xf32>
    %464 = arith.cmpf oge, %351, %411 : vector<4x512xf32>
    %465 = arith.select %464, %411, %410 : vector<4x512xi1>, vector<4x512xf32>
    %466 = arith.select %464, %419, %418 : vector<4x512xi1>, vector<4x512xf32>
    %467 = arith.select %464, %415, %414 : vector<4x512xi1>, vector<4x512xf32>
    %468 = arith.select %464, %423, %422 : vector<4x512xi1>, vector<4x512xf32>
    %469 = arith.select %464, %438, %426 : vector<4x512xi1>, vector<4x512xf32>
    %470 = arith.select %464, %450, %438 : vector<4x512xi1>, vector<4x512xf32>
    %471 = arith.cmpf oge, %351, %412 : vector<4x512xf32>
    %472 = arith.select %471, %412, %465 : vector<4x512xi1>, vector<4x512xf32>
    %473 = arith.select %471, %420, %466 : vector<4x512xi1>, vector<4x512xf32>
    %474 = arith.select %471, %416, %467 : vector<4x512xi1>, vector<4x512xf32>
    %475 = arith.select %471, %424, %468 : vector<4x512xi1>, vector<4x512xf32>
    %476 = arith.select %471, %450, %469 : vector<4x512xi1>, vector<4x512xf32>
    %477 = arith.select %471, %462, %470 : vector<4x512xi1>, vector<4x512xf32>
    %478 = arith.cmpf oge, %351, %413 : vector<4x512xf32>
    %479 = arith.select %478, %413, %472 : vector<4x512xi1>, vector<4x512xf32>
    %480 = arith.select %478, %421, %473 : vector<4x512xi1>, vector<4x512xf32>
    %481 = arith.select %478, %417, %474 : vector<4x512xi1>, vector<4x512xf32>
    %482 = arith.select %478, %425, %475 : vector<4x512xi1>, vector<4x512xf32>
    %483 = arith.select %478, %462, %476 : vector<4x512xi1>, vector<4x512xf32>
    %484 = arith.select %478, %463, %477 : vector<4x512xi1>, vector<4x512xf32>
    %cst_131 = arith.constant 1.000000e+00 : f32
    %485 = vector.broadcast %cst_131 : f32 to vector<4x512xf32>
    %486 = arith.divf %485, %480 : vector<4x512xf32>
    %487 = arith.mulf %482, %486 : vector<4x512xf32>
    %488 = arith.subf %351, %479 : vector<4x512xf32>
    %489 = arith.mulf %488, %486 : vector<4x512xf32>
    %cst_132 = arith.constant 1.000000e+00 : f32
    %490 = vector.broadcast %cst_132 : f32 to vector<4x512xf32>
    %491 = arith.subf %490, %489 : vector<4x512xf32>
    %492 = arith.mulf %489, %491 : vector<4x512xf32>
    %493 = arith.mulf %489, %489 : vector<4x512xf32>
    %494 = arith.mulf %487, %493 : vector<4x512xf32>
    %495 = arith.mulf %483, %492 : vector<4x512xf32>
    %496 = arith.addf %494, %495 : vector<4x512xf32>
    %497 = arith.mulf %482, %496 : vector<4x512xf32>
    %498 = arith.addf %483, %484 : vector<4x512xf32>
    %cst_133 = arith.constant 2.000000e+00 : f32
    %499 = vector.broadcast %cst_133 : f32 to vector<4x512xf32>
    %500 = arith.mulf %499, %487 : vector<4x512xf32>
    %501 = arith.subf %498, %500 : vector<4x512xf32>
    %502 = arith.mulf %501, %492 : vector<4x512xf32>
    %503 = arith.addf %487, %502 : vector<4x512xf32>
    %cst_134 = arith.constant 1.000000e+00 : f32
    %504 = vector.broadcast %cst_134 : f32 to vector<4x512xf32>
    %505 = arith.divf %504, %503 : vector<4x512xf32>
    %506 = arith.mulf %487, %487 : vector<4x512xf32>
    %507 = arith.mulf %484, %493 : vector<4x512xf32>
    %cst_135 = arith.constant 2.000000e+00 : f32
    %508 = vector.broadcast %cst_135 : f32 to vector<4x512xf32>
    %509 = arith.mulf %508, %487 : vector<4x512xf32>
    %510 = arith.mulf %509, %492 : vector<4x512xf32>
    %511 = arith.addf %507, %510 : vector<4x512xf32>
    %512 = arith.mulf %483, %491 : vector<4x512xf32>
    %513 = arith.mulf %512, %491 : vector<4x512xf32>
    %514 = arith.addf %511, %513 : vector<4x512xf32>
    %515 = arith.mulf %506, %514 : vector<4x512xf32>
    %516 = arith.mulf %497, %505 : vector<4x512xf32>
    %517 = arith.addf %481, %516 : vector<4x512xf32>
    %518 = arith.select %347, %517, %286 : vector<4x512xi1>, vector<4x512xf32>
    %519 = arith.mulf %505, %505 : vector<4x512xf32>
    %520 = arith.mulf %515, %519 : vector<4x512xf32>
    %521 = math.log %520 : vector<4x512xf32>
    %cst_136 = arith.constant 0.000000e+00 : f32
    %522 = vector.broadcast %cst_136 : f32 to vector<4x512xf32>
    %523 = arith.select %347, %521, %522 : vector<4x512xi1>, vector<4x512xf32>
    %cst_137 = arith.constant dense<0.000000e+00> : vector<512xf32>
    %524 = vector.multi_reduction <add>, %523, %cst_137 [0] : vector<4x512xf32> to vector<512xf32>
    %525 = vector.shape_cast %524 : vector<512xf32> to vector<1x512xf32>
    %526 = arith.addf %272, %525 : vector<1x512xf32>
    %527 = arith.mulf %281, %281 : vector<8x512xf32>
    %cst_138 = arith.constant dense<0.000000e+00> : vector<512xf32>
    %528 = vector.multi_reduction <add>, %527, %cst_138 [0] : vector<8x512xf32> to vector<512xf32>
    %529 = vector.shape_cast %528 : vector<512xf32> to vector<1x512xf32>
    %530 = arith.mulf %286, %286 : vector<4x512xf32>
    %cst_139 = arith.constant dense<0.000000e+00> : vector<512xf32>
    %531 = vector.multi_reduction <add>, %530, %cst_139 [0] : vector<4x512xf32> to vector<512xf32>
    %532 = vector.shape_cast %531 : vector<512xf32> to vector<1x512xf32>
    %533 = arith.subf %529, %532 : vector<1x512xf32>
    %534 = arith.mulf %518, %518 : vector<4x512xf32>
    %cst_140 = arith.constant dense<0.000000e+00> : vector<512xf32>
    %535 = vector.multi_reduction <add>, %534, %cst_140 [0] : vector<4x512xf32> to vector<512xf32>
    %536 = vector.shape_cast %535 : vector<512xf32> to vector<1x512xf32>
    %537 = arith.addf %533, %536 : vector<1x512xf32>
    %cst_141 = arith.constant -5.000000e-01 : f32
    %538 = vector.broadcast %cst_141 : f32 to vector<1x512xf32>
    %539 = arith.mulf %538, %537 : vector<1x512xf32>
    %cst_142 = arith.constant 7.35150814 : f32
    %540 = vector.broadcast %cst_142 : f32 to vector<1x512xf32>
    %541 = arith.subf %539, %540 : vector<1x512xf32>
    %542 = arith.addf %541, %526 : vector<1x512xf32>
    %c0_143 = arith.constant 0 : index
    %c0_144 = arith.constant 0 : index
    %543 = vector.load %arg14[%c0_143, %c0_144] : memref<1x512xf32, #tpu.memory_space<vmem>>, vector<1x512xf32>
    tpu.vector_store %arg14[%c0_143, %c0_144], %542 {strides = array<i32>} : memref<1x512xf32, #tpu.memory_space<vmem>>, vector<1x512xf32>,
    return
  }
  func.func @transform_0(%arg0: i32) -> (i32, i32) {
    %c0_i32 = arith.constant 0 : i32
    %c0_i32_0 = arith.constant 0 : i32
    return %c0_i32, %arg0 : i32, i32
  }
  func.func @transform_1(%arg0: i32) -> (i32, i32) {
    %c0_i32 = arith.constant 0 : i32
    %c0_i32_0 = arith.constant 0 : i32
    return %c0_i32, %arg0 : i32, i32
  }
  func.func @transform_2(%arg0: i32) -> (i32, i32) {
    %c0_i32 = arith.constant 0 : i32
    %c0_i32_0 = arith.constant 0 : i32
    %c0_i32_1 = arith.constant 0 : i32
    return %c0_i32, %c0_i32_0 : i32, i32
  }
  func.func @transform_3(%arg0: i32) -> (i32, i32) {
    %c0_i32 = arith.constant 0 : i32
    %c0_i32_0 = arith.constant 0 : i32
    %c0_i32_1 = arith.constant 0 : i32
    return %c0_i32, %c0_i32_0 : i32, i32
  }
  func.func @transform_4(%arg0: i32) -> (i32, i32) {
    %c0_i32 = arith.constant 0 : i32
    %c0_i32_0 = arith.constant 0 : i32
    %c0_i32_1 = arith.constant 0 : i32
    return %c0_i32, %c0_i32_0 : i32, i32
  }
  func.func @transform_5(%arg0: i32) -> (i32, i32) {
    %c0_i32 = arith.constant 0 : i32
    %c0_i32_0 = arith.constant 0 : i32
    %c0_i32_1 = arith.constant 0 : i32
    return %c0_i32, %c0_i32_0 : i32, i32
  }
  func.func @transform_6(%arg0: i32) -> (i32, i32) {
    %c0_i32 = arith.constant 0 : i32
    %c0_i32_0 = arith.constant 0 : i32
    %c0_i32_1 = arith.constant 0 : i32
    return %c0_i32, %c0_i32_0 : i32, i32
  }
  func.func @transform_7(%arg0: i32) -> (i32, i32) {
    %c0_i32 = arith.constant 0 : i32
    %c0_i32_0 = arith.constant 0 : i32
    %c0_i32_1 = arith.constant 0 : i32
    return %c0_i32, %c0_i32_0 : i32, i32
  }
  func.func @transform_8(%arg0: i32) -> (i32, i32) {
    %c0_i32 = arith.constant 0 : i32
    %c0_i32_0 = arith.constant 0 : i32
    %c0_i32_1 = arith.constant 0 : i32
    return %c0_i32, %c0_i32_0 : i32, i32
  }
  func.func @transform_9(%arg0: i32) -> (i32, i32) {
    %c0_i32 = arith.constant 0 : i32
    %c0_i32_0 = arith.constant 0 : i32
    %c0_i32_1 = arith.constant 0 : i32
    return %c0_i32, %c0_i32_0 : i32, i32
  }
  func.func @transform_10(%arg0: i32) -> (i32, i32) {
    %c0_i32 = arith.constant 0 : i32
    %c0_i32_0 = arith.constant 0 : i32
    %c0_i32_1 = arith.constant 0 : i32
    return %c0_i32, %c0_i32_0 : i32, i32
  }
  func.func @transform_11(%arg0: i32) -> (i32, i32) {
    %c0_i32 = arith.constant 0 : i32
    %c0_i32_0 = arith.constant 0 : i32
    %c0_i32_1 = arith.constant 0 : i32
    return %c0_i32, %c0_i32_0 : i32, i32
  }
  func.func @transform_12(%arg0: i32) -> (i32, i32) {
    %c0_i32 = arith.constant 0 : i32
    %c0_i32_0 = arith.constant 0 : i32
    %c0_i32_1 = arith.constant 0 : i32
    return %c0_i32, %c0_i32_0 : i32, i32
  }
  func.func @transform_13(%arg0: i32) -> (i32, i32) {
    %c0_i32 = arith.constant 0 : i32
    %c0_i32_0 = arith.constant 0 : i32
    return %c0_i32, %arg0 : i32, i32
  }
}

</mosaic_0001>

<llo_original>
// kernel: _lambda_.1
$region0: #{_lambda_.1}
  #allocation0 [shape = 'u32[]', space=smem, size = 0x4, offset = 0x4, fixed_abs, tag = 'smem constant byte address 0x4 - core index']
  #allocation1 [shape = 'u32[144,128]{1,0:T(1,128)}', space=vmem, size = 0x12000, scoped, tag = 'internal scratch']
  %s0 = inlined_call_operand.vmem [shape: f32[8,1024], index: 0, kind: input, shape index: {}]
  %s1 = inlined_call_operand.vmem [shape: f32[4,1024], index: 1, kind: input, shape index: {}]
  %s2 = inlined_call_operand.vmem [shape: bf16[64,8], index: 2, kind: input, shape index: {}]
  %s3 = inlined_call_operand.vmem [shape: bf16[64,4], index: 3, kind: input, shape index: {}]
  %s4 = inlined_call_operand.vmem [shape: f32[64,1], index: 4, kind: input, shape index: {}]
  %s5 = inlined_call_operand.vmem [shape: bf16[128,32], index: 5, kind: input, shape index: {}]
  %s6 = inlined_call_operand.vmem [shape: f32[128,1], index: 6, kind: input, shape index: {}]
  %s7 = inlined_call_operand.vmem [shape: bf16[128,32], index: 7, kind: input, shape index: {}]
  %s8 = inlined_call_operand.vmem [shape: f32[128,1], index: 8, kind: input, shape index: {}]
  %s9 = inlined_call_operand.vmem [shape: bf16[128,4], index: 9, kind: input, shape index: {}]
  %s10 = inlined_call_operand.vmem [shape: f32[128,1], index: 10, kind: input, shape index: {}]
  %s11 = inlined_call_operand.vmem [shape: bf16[128,32], index: 11, kind: input, shape index: {}]
  %s12 = inlined_call_operand.vmem [shape: f32[128,1], index: 12, kind: input, shape index: {}]
  %s13 = inlined_call_operand.vmem [shape: f32[1,1024], index: 13, kind: output, shape index: {}]
  %s14 = sld [smem:[#allocation0]]
  $region85: #{_lambda_.1} parent=0
    _
  %s16 = ssub.s32 1, %s14
  %s17 = scalar_select 0, %s16, %s14
  loop: start=0, step=1, limit=4
  $region2: #{_lambda_.1} parent=0 // loop_pre_header
    _
  $region3: #{_lambda_.1} parent=0 // loop_header
    %s19 = sphi 0, %s23
    %p20 = scmp.ge.s32.totalorder %s19, 4
    %s29 = sphi 0, %s31
    %s32 = sphi 0, %s29
    %s33 = sphi 0, %s32
    %s49 = sphi 0, %s33
    %s55 = sphi 0, %s57
    %s58 = sphi 0, %s55
    %s59 = sphi 0, %s58
    %s75 = sphi 0, %s59
    %s79 = sphi 0, %s79
    %s81 = sphi 0, %s79
    %s82 = sphi 0, %s81
    %s96 = sphi 0, %s82
    %s100 = sphi 0, %s100
    %s102 = sphi 0, %s100
    %s103 = sphi 0, %s102
    %s117 = sphi 0, %s103
    %s121 = sphi 0, %s121
    %s123 = sphi 0, %s121
    %s124 = sphi 0, %s123
    %s138 = sphi 0, %s124
    %s142 = sphi 0, %s142
    %s144 = sphi 0, %s142
    %s145 = sphi 0, %s144
    %s159 = sphi 0, %s145
    %s163 = sphi 0, %s163
    %s165 = sphi 0, %s163
    %s166 = sphi 0, %s165
    %s180 = sphi 0, %s166
    %s184 = sphi 0, %s184
    %s186 = sphi 0, %s184
    %s187 = sphi 0, %s186
    %s201 = sphi 0, %s187
    %s205 = sphi 0, %s205
    %s207 = sphi 0, %s205
    %s208 = sphi 0, %s207
    %s222 = sphi 0, %s208
    %s226 = sphi 0, %s226
    %s228 = sphi 0, %s226
    %s229 = sphi 0, %s228
    %s243 = sphi 0, %s229
    %s247 = sphi 0, %s247
    %s249 = sphi 0, %s247
    %s250 = sphi 0, %s249
    %s264 = sphi 0, %s250
    %s268 = sphi 0, %s268
    %s270 = sphi 0, %s268
    %s271 = sphi 0, %s270
    %s285 = sphi 0, %s271
    %s289 = sphi 0, %s289
    %s291 = sphi 0, %s289
    %s292 = sphi 0, %s291
    %s306 = sphi 0, %s292
    %s312 = sphi 0, %s314
    %s315 = sphi 0, %s312
    %s316 = sphi 0, %s315
    %s332 = sphi 0, %s316
  $region4: #{_lambda_.1} parent=0 // loop_header_branch
    %22 = sbr.rel (%p20) target = $region8
  $region5: #{_lambda_.1} parent=0 // loop_body
    %s24 = ssub.s32 %s19, 1
    %s25 = ssub.s32 %s19, 2
    %s26 = sadd.s32 %s19, 1
    %s27 = ssub.s32 %s19, %s26
    %p28 = scmp.eq.s32.totalorder %s27, 0
    %s30 = sadd.s32 %s29, 1
    %s31 = scalar_select %p28, %s29, %s30
    %p34 = pneg %p28
    %p35 = scmp.eq.s32.totalorder %s19, 1
    %p36 = por %p34, %p35
    %p37 = scmp.ne.s32.totalorder %s29, %s32
    %p38 = scmp.eq.s32.totalorder %s19, 0
    %p39 = por %p37, %p38
    %p40 = scmp.ne.s32.totalorder %s29, %s32
    %p41 = scmp.eq.s32.totalorder %s24, 1
    %p42 = por %p40, %p41
    %p43 = scmp.ne.s32.totalorder %s32, %s33
    %p44 = scmp.eq.s32.totalorder %s24, 0
    %p45 = por %p43, %p44
    %p46 = scmp.ne.s32.totalorder %s32, %s33
    %p47 = scmp.eq.s32.totalorder %s25, 1
    %p48 = por %p46, %p47
    %p50 = scmp.ne.s32.totalorder %s33, %s49
    %p51 = scmp.eq.s32.totalorder %s25, 0
    %p52 = por %p50, %p51
    %s53 = ssub.s32 %s19, %s26
    %p54 = scmp.eq.s32.totalorder %s53, 0
    %s56 = sadd.s32 %s55, 1
    %s57 = scalar_select %p54, %s55, %s56
    %p60 = pneg %p54
    %p61 = scmp.eq.s32.totalorder %s19, 1
    %p62 = por %p60, %p61
    %p63 = scmp.ne.s32.totalorder %s55, %s58
    %p64 = scmp.eq.s32.totalorder %s19, 0
    %p65 = por %p63, %p64
    %p66 = scmp.ne.s32.totalorder %s55, %s58
    %p67 = scmp.eq.s32.totalorder %s24, 1
    %p68 = por %p66, %p67
    %p69 = scmp.ne.s32.totalorder %s58, %s59
    %p70 = scmp.eq.s32.totalorder %s24, 0
    %p71 = por %p69, %p70
    %p72 = scmp.ne.s32.totalorder %s58, %s59
    %p73 = scmp.eq.s32.totalorder %s25, 1
    %p74 = por %p72, %p73
    %p76 = scmp.ne.s32.totalorder %s59, %s75
    %p77 = scmp.eq.s32.totalorder %s25, 0
    %p78 = por %p76, %p77
    %s80 = sadd.s32 %s79, 1
    %p83 = scmp.eq.s32.totalorder %s19, 1
    %p84 = scmp.ne.s32.totalorder %s79, %s81
    %p85 = scmp.eq.s32.totalorder %s19, 0
    %p86 = por %p84, %p85
    %p87 = scmp.ne.s32.totalorder %s79, %s81
    %p88 = scmp.eq.s32.totalorder %s24, 1
    %p89 = por %p87, %p88
    %p90 = scmp.ne.s32.totalorder %s81, %s82
    %p91 = scmp.eq.s32.totalorder %s24, 0
    %p92 = por %p90, %p91
    %p93 = scmp.ne.s32.totalorder %s81, %s82
    %p94 = scmp.eq.s32.totalorder %s25, 1
    %p95 = por %p93, %p94
    %p97 = scmp.ne.s32.totalorder %s82, %s96
    %p98 = scmp.eq.s32.totalorder %s25, 0
    %p99 = por %p97, %p98
    %s101 = sadd.s32 %s100, 1
    %p104 = scmp.eq.s32.totalorder %s19, 1
    %p105 = scmp.ne.s32.totalorder %s100, %s102
    %p106 = scmp.eq.s32.totalorder %s19, 0
    %p107 = por %p105, %p106
    %p108 = scmp.ne.s32.totalorder %s100, %s102
    %p109 = scmp.eq.s32.totalorder %s24, 1
    %p110 = por %p108, %p109
    %p111 = scmp.ne.s32.totalorder %s102, %s103
    %p112 = scmp.eq.s32.totalorder %s24, 0
    %p113 = por %p111, %p112
    %p114 = scmp.ne.s32.totalorder %s102, %s103
    %p115 = scmp.eq.s32.totalorder %s25, 1
    %p116 = por %p114, %p115
    %p118 = scmp.ne.s32.totalorder %s103, %s117
    %p119 = scmp.eq.s32.totalorder %s25, 0
    %p120 = por %p118, %p119
    %s122 = sadd.s32 %s121, 1
    %p125 = scmp.eq.s32.totalorder %s19, 1
    %p126 = scmp.ne.s32.totalorder %s121, %s123
    %p127 = scmp.eq.s32.totalorder %s19, 0
    %p128 = por %p126, %p127
    %p129 = scmp.ne.s32.totalorder %s121, %s123
    %p130 = scmp.eq.s32.totalorder %s24, 1
    %p131 = por %p129, %p130
    %p132 = scmp.ne.s32.totalorder %s123, %s124
    %p133 = scmp.eq.s32.totalorder %s24, 0
    %p134 = por %p132, %p133
    %p135 = scmp.ne.s32.totalorder %s123, %s124
    %p136 = scmp.eq.s32.totalorder %s25, 1
    %p137 = por %p135, %p136
    %p139 = scmp.ne.s32.totalorder %s124, %s138
    %p140 = scmp.eq.s32.totalorder %s25, 0
    %p141 = por %p139, %p140
    %s143 = sadd.s32 %s142, 1
    %p146 = scmp.eq.s32.totalorder %s19, 1
    %p147 = scmp.ne.s32.totalorder %s142, %s144
    %p148 = scmp.eq.s32.totalorder %s19, 0
    %p149 = por %p147, %p148
    %p150 = scmp.ne.s32.totalorder %s142, %s144
    %p151 = scmp.eq.s32.totalorder %s24, 1
    %p152 = por %p150, %p151
    %p153 = scmp.ne.s32.totalorder %s144, %s145
    %p154 = scmp.eq.s32.totalorder %s24, 0
    %p155 = por %p153, %p154
    %p156 = scmp.ne.s32.totalorder %s144, %s145
    %p157 = scmp.eq.s32.totalorder %s25, 1
    %p158 = por %p156, %p157
    %p160 = scmp.ne.s32.totalorder %s145, %s159
    %p161 = scmp.eq.s32.totalorder %s25, 0
    %p162 = por %p160, %p161
    %s164 = sadd.s32 %s163, 1
    %p167 = scmp.eq.s32.totalorder %s19, 1
    %p168 = scmp.ne.s32.totalorder %s163, %s165
    %p169 = scmp.eq.s32.totalorder %s19, 0
    %p170 = por %p168, %p169
    %p171 = scmp.ne.s32.totalorder %s163, %s165
    %p172 = scmp.eq.s32.totalorder %s24, 1
    %p173 = por %p171, %p172
    %p174 = scmp.ne.s32.totalorder %s165, %s166
    %p175 = scmp.eq.s32.totalorder %s24, 0
    %p176 = por %p174, %p175
    %p177 = scmp.ne.s32.totalorder %s165, %s166
    %p178 = scmp.eq.s32.totalorder %s25, 1
    %p179 = por %p177, %p178
    %p181 = scmp.ne.s32.totalorder %s166, %s180
    %p182 = scmp.eq.s32.totalorder %s25, 0
    %p183 = por %p181, %p182
    %s185 = sadd.s32 %s184, 1
    %p188 = scmp.eq.s32.totalorder %s19, 1
    %p189 = scmp.ne.s32.totalorder %s184, %s186
    %p190 = scmp.eq.s32.totalorder %s19, 0
    %p191 = por %p189, %p190
    %p192 = scmp.ne.s32.totalorder %s184, %s186
    %p193 = scmp.eq.s32.totalorder %s24, 1
    %p194 = por %p192, %p193
    %p195 = scmp.ne.s32.totalorder %s186, %s187
    %p196 = scmp.eq.s32.totalorder %s24, 0
    %p197 = por %p195, %p196
    %p198 = scmp.ne.s32.totalorder %s186, %s187
    %p199 = scmp.eq.s32.totalorder %s25, 1
    %p200 = por %p198, %p199
    %p202 = scmp.ne.s32.totalorder %s187, %s201
    %p203 = scmp.eq.s32.totalorder %s25, 0
    %p204 = por %p202, %p203
    %s206 = sadd.s32 %s205, 1
    %p209 = scmp.eq.s32.totalorder %s19, 1
    %p210 = scmp.ne.s32.totalorder %s205, %s207
    %p211 = scmp.eq.s32.totalorder %s19, 0
    %p212 = por %p210, %p211
    %p213 = scmp.ne.s32.totalorder %s205, %s207
    %p214 = scmp.eq.s32.totalorder %s24, 1
    %p215 = por %p213, %p214
    %p216 = scmp.ne.s32.totalorder %s207, %s208
    %p217 = scmp.eq.s32.totalorder %s24, 0
    %p218 = por %p216, %p217
    %p219 = scmp.ne.s32.totalorder %s207, %s208
    %p220 = scmp.eq.s32.totalorder %s25, 1
    %p221 = por %p219, %p220
    %p223 = scmp.ne.s32.totalorder %s208, %s222
    %p224 = scmp.eq.s32.totalorder %s25, 0
    %p225 = por %p223, %p224
    %s227 = sadd.s32 %s226, 1
    %p230 = scmp.eq.s32.totalorder %s19, 1
    %p231 = scmp.ne.s32.totalorder %s226, %s228
    %p232 = scmp.eq.s32.totalorder %s19, 0
    %p233 = por %p231, %p232
    %p234 = scmp.ne.s32.totalorder %s226, %s228
    %p235 = scmp.eq.s32.totalorder %s24, 1
    %p236 = por %p234, %p235
    %p237 = scmp.ne.s32.totalorder %s228, %s229
    %p238 = scmp.eq.s32.totalorder %s24, 0
    %p239 = por %p237, %p238
    %p240 = scmp.ne.s32.totalorder %s228, %s229
    %p241 = scmp.eq.s32.totalorder %s25, 1
    %p242 = por %p240, %p241
    %p244 = scmp.ne.s32.totalorder %s229, %s243
    %p245 = scmp.eq.s32.totalorder %s25, 0
    %p246 = por %p244, %p245
    %s248 = sadd.s32 %s247, 1
    %p251 = scmp.eq.s32.totalorder %s19, 1
    %p252 = scmp.ne.s32.totalorder %s247, %s249
    %p253 = scmp.eq.s32.totalorder %s19, 0
    %p254 = por %p252, %p253
    %p255 = scmp.ne.s32.totalorder %s247, %s249
    %p256 = scmp.eq.s32.totalorder %s24, 1
    %p257 = por %p255, %p256
    %p258 = scmp.ne.s32.totalorder %s249, %s250
    %p259 = scmp.eq.s32.totalorder %s24, 0
    %p260 = por %p258, %p259
    %p261 = scmp.ne.s32.totalorder %s249, %s250
    %p262 = scmp.eq.s32.totalorder %s25, 1
    %p263 = por %p261, %p262
    %p265 = scmp.ne.s32.totalorder %s250, %s264
    %p266 = scmp.eq.s32.totalorder %s25, 0
    %p267 = por %p265, %p266
    %s269 = sadd.s32 %s268, 1
    %p272 = scmp.eq.s32.totalorder %s19, 1
    %p273 = scmp.ne.s32.totalorder %s268, %s270
    %p274 = scmp.eq.s32.totalorder %s19, 0
    %p275 = por %p273, %p274
    %p276 = scmp.ne.s32.totalorder %s268, %s270
    %p277 = scmp.eq.s32.totalorder %s24, 1
    %p278 = por %p276, %p277
    %p279 = scmp.ne.s32.totalorder %s270, %s271
    %p280 = scmp.eq.s32.totalorder %s24, 0
    %p281 = por %p279, %p280
    %p282 = scmp.ne.s32.totalorder %s270, %s271
    %p283 = scmp.eq.s32.totalorder %s25, 1
    %p284 = por %p282, %p283
    %p286 = scmp.ne.s32.totalorder %s271, %s285
    %p287 = scmp.eq.s32.totalorder %s25, 0
    %p288 = por %p286, %p287
    %s290 = sadd.s32 %s289, 1
    %p293 = scmp.eq.s32.totalorder %s19, 1
    %p294 = scmp.ne.s32.totalorder %s289, %s291
    %p295 = scmp.eq.s32.totalorder %s19, 0
    %p296 = por %p294, %p295
    %p297 = scmp.ne.s32.totalorder %s289, %s291
    %p298 = scmp.eq.s32.totalorder %s24, 1
    %p299 = por %p297, %p298
    %p300 = scmp.ne.s32.totalorder %s291, %s292
    %p301 = scmp.eq.s32.totalorder %s24, 0
    %p302 = por %p300, %p301
    %p303 = scmp.ne.s32.totalorder %s291, %s292
    %p304 = scmp.eq.s32.totalorder %s25, 1
    %p305 = por %p303, %p304
    %p307 = scmp.ne.s32.totalorder %s292, %s306
    %p308 = scmp.eq.s32.totalorder %s25, 0
    %p309 = por %p307, %p308
    %s310 = ssub.s32 %s19, %s26
    %p311 = scmp.eq.s32.totalorder %s310, 0
    %s313 = sadd.s32 %s312, 1
    %s314 = scalar_select %p311, %s312, %s313
    %p317 = pneg %p311
    %p318 = scmp.eq.s32.totalorder %s19, 1
    %p319 = por %p317, %p318
    %p320 = scmp.ne.s32.totalorder %s312, %s315
    %p321 = scmp.eq.s32.totalorder %s19, 0
    %p322 = por %p320, %p321
    %p323 = scmp.ne.s32.totalorder %s312, %s315
    %p324 = scmp.eq.s32.totalorder %s24, 1
    %p325 = por %p323, %p324
    %p326 = scmp.ne.s32.totalorder %s315, %s316
    %p327 = scmp.eq.s32.totalorder %s24, 0
    %p328 = por %p326, %p327
    %p329 = scmp.ne.s32.totalorder %s315, %s316
    %p330 = scmp.eq.s32.totalorder %s25, 1
    %p331 = por %p329, %p330
    %p333 = scmp.ne.s32.totalorder %s316, %s332
    %p334 = scmp.eq.s32.totalorder %s25, 0
    %p335 = por %p333, %p334
    %p336 = scmp.le.s32.totalorder 1, %s19
    %p337 = scmp.lt.s32.totalorder %s19, 3
    %p338 = pnand %p336, %p337
    %p339 = pneg %p338
    // Predicated region
    $region9: #{_lambda_.1} parent=5 // pred_check
      _
    $region10: #{_lambda_.1} parent=5 // pred_check_branch
      %341 = sbr.rel (%p338) target = $region12
    $region11: #{_lambda_.1} parent=5 // pred_region
      %s342 = ssub.s32 %s19, 1
      // Predicated region
      $region13: #{_lambda_.1} parent=11 // pred_check
        %p343 = pneg %p92
      $region14: #{_lambda_.1} parent=11 // pred_check_branch
        %345 = sbr.rel (%p343) target = $region16
      $region15: #{_lambda_.1} parent=11 // pred_region
        _
      $region16: #{_lambda_.1} parent=11 // pred_fallthru
        _
      // Predicated region
      $region17: #{_lambda_.1} parent=11 // pred_check
        %p346 = pneg %p113
      $region18: #{_lambda_.1} parent=11 // pred_check_branch
        %348 = sbr.rel (%p346) target = $region20
      $region19: #{_lambda_.1} parent=11 // pred_region
        _
      $region20: #{_lambda_.1} parent=11 // pred_fallthru
        _
      // Predicated region
      $region21: #{_lambda_.1} parent=11 // pred_check
        %p349 = pneg %p134
      $region22: #{_lambda_.1} parent=11 // pred_check_branch
        %351 = sbr.rel (%p349) target = $region24
      $region23: #{_lambda_.1} parent=11 // pred_region
        _
      $region24: #{_lambda_.1} parent=11 // pred_fallthru
        _
      // Predicated region
      $region25: #{_lambda_.1} parent=11 // pred_check
        %p352 = pneg %p155
      $region26: #{_lambda_.1} parent=11 // pred_check_branch
        %354 = sbr.rel (%p352) target = $region28
      $region27: #{_lambda_.1} parent=11 // pred_region
        _
      $region28: #{_lambda_.1} parent=11 // pred_fallthru
        _
      // Predicated region
      $region29: #{_lambda_.1} parent=11 // pred_check
        %p355 = pneg %p176
      $region30: #{_lambda_.1} parent=11 // pred_check_branch
        %357 = sbr.rel (%p355) target = $region32
      $region31: #{_lambda_.1} parent=11 // pred_region
        _
      $region32: #{_lambda_.1} parent=11 // pred_fallthru
        _
      // Predicated region
      $region33: #{_lambda_.1} parent=11 // pred_check
        %p358 = pneg %p197
      $region34: #{_lambda_.1} parent=11 // pred_check_branch
        %360 = sbr.rel (%p358) target = $region36
      $region35: #{_lambda_.1} parent=11 // pred_region
        _
      $region36: #{_lambda_.1} parent=11 // pred_fallthru
        _
      // Predicated region
      $region37: #{_lambda_.1} parent=11 // pred_check
        %p361 = pneg %p218
      $region38: #{_lambda_.1} parent=11 // pred_check_branch
        %363 = sbr.rel (%p361) target = $region40
      $region39: #{_lambda_.1} parent=11 // pred_region
        _
      $region40: #{_lambda_.1} parent=11 // pred_fallthru
        _
      // Predicated region
      $region41: #{_lambda_.1} parent=11 // pred_check
        %p364 = pneg %p239
      $region42: #{_lambda_.1} parent=11 // pred_check_branch
        %366 = sbr.rel (%p364) target = $region44
      $region43: #{_lambda_.1} parent=11 // pred_region
        _
      $region44: #{_lambda_.1} parent=11 // pred_fallthru
        _
      // Predicated region
      $region45: #{_lambda_.1} parent=11 // pred_check
        %p367 = pneg %p260
      $region46: #{_lambda_.1} parent=11 // pred_check_branch
        %369 = sbr.rel (%p367) target = $region48
      $region47: #{_lambda_.1} parent=11 // pred_region
        _
      $region48: #{_lambda_.1} parent=11 // pred_fallthru
        _
      // Predicated region
      $region49: #{_lambda_.1} parent=11 // pred_check
        %p370 = pneg %p281
      $region50: #{_lambda_.1} parent=11 // pred_check_branch
        %372 = sbr.rel (%p370) target = $region52
      $region51: #{_lambda_.1} parent=11 // pred_region
        _
      $region52: #{_lambda_.1} parent=11 // pred_fallthru
        _
      // Predicated region
      $region53: #{_lambda_.1} parent=11 // pred_check
        %p373 = pneg %p302
      $region54: #{_lambda_.1} parent=11 // pred_check_branch
        %375 = sbr.rel (%p373) target = $region56
      $region55: #{_lambda_.1} parent=11 // pred_region
        _
      $region56: #{_lambda_.1} parent=11 // pred_fallthru
        _
    $region12: #{_lambda_.1} parent=5 // pred_fallthru
      _
    %p376 = scmp.lt.s32.totalorder %s19, 2
    // Predicated region
    $region57: #{_lambda_.1} parent=5 // pred_check
      %p377 = pneg %p376
    $region58: #{_lambda_.1} parent=5 // pred_check_branch
      %379 = sbr.rel (%p377) target = $region60
    $region59: #{_lambda_.1} parent=5 // pred_region
      // Predicated region
      $region61: #{_lambda_.1} parent=59 // pred_check
        %p380 = pneg %p39
      $region62: #{_lambda_.1} parent=59 // pred_check_branch
        %382 = sbr.rel (%p380) target = $region64
      $region63: #{_lambda_.1} parent=59 // pred_region
        %s383 = smul.u32 4, %s19
        %p384 = scmp.lt.s32.totalorder %s383, 7
        %s385 = scalar_select %p384, %s383, 7
        %s386 = smul.addr %s385, 8
        %s387 = scalar_lea.vmem %s0, %s386
        %s388 = smul.u32 4, %s19
      $region64: #{_lambda_.1} parent=59 // pred_fallthru
        _
      // Predicated region
      $region65: #{_lambda_.1} parent=59 // pred_check
        %p389 = pneg %p65
      $region66: #{_lambda_.1} parent=59 // pred_check_branch
        %391 = sbr.rel (%p389) target = $region68
      $region67: #{_lambda_.1} parent=59 // pred_region
        %s392 = smul.u32 4, %s19
        %p393 = scmp.lt.s32.totalorder %s392, 7
        %s394 = scalar_select %p393, %s392, 7
        %s395 = smul.addr %s394, 4
        %s396 = scalar_lea.vmem %s1, %s395
        %s397 = smul.u32 4, %s19
      $region68: #{_lambda_.1} parent=59 // pred_fallthru
        _
    $region60: #{_lambda_.1} parent=5 // pred_fallthru
      _
    %p398 = scmp.le.s32.totalorder 1, %s19
    %p399 = scmp.lt.s32.totalorder %s19, 3
    %p400 = pnand %p398, %p399
    %p401 = pneg %p400
    // Predicated region
    $region69: #{_lambda_.1} parent=5 // pred_check
      _
    $region70: #{_lambda_.1} parent=5 // pred_check_branch
      %403 = sbr.rel (%p400) target = $region72
    $region71: #{_lambda_.1} parent=5 // pred_region
      %s404 = ssub.s32 %s19, 1
      %s405 = smul.u32 4, %s24
      %p406 = scmp.lt.s32.totalorder %s405, 7
      %s407 = scalar_select %p406, %s405, 7
      %s408 = smul.addr %s407, 8
      %s409 = scalar_lea.vmem %s0, %s408
      %p410 = pneg %p45
      %p411 = pneg %p42
      %s412 = smul.u32 4, %s24
      %p413 = scmp.lt.s32.totalorder %s412, 7
      %s414 = scalar_select %p413, %s412, 7
      %s415 = smul.addr %s414, 4
      %s416 = scalar_lea.vmem %s1, %s415
      %p417 = pneg %p71
      %p418 = pneg %p68
      %p419 = pneg %p92
      %p420 = pneg %p89
      %p421 = pneg %p113
      %p422 = pneg %p110
      %p423 = pneg %p134
      %p424 = pneg %p131
      %p425 = pneg %p155
      %p426 = pneg %p152
      %p427 = pneg %p176
      %p428 = pneg %p173
      %p429 = pneg %p197
      %p430 = pneg %p194
      %p431 = pneg %p218
      %p432 = pneg %p215
      %p433 = pneg %p239
      %p434 = pneg %p236
      %p435 = pneg %p260
      %p436 = pneg %p257
      %p437 = pneg %p281
      %p438 = pneg %p278
      %p439 = pneg %p302
      %p440 = pneg %p299
      %p441 = pneg %p328
      %p442 = pneg %p325
      %s443 = smul.u32 4, %s24
      %p444 = scmp.lt.s32.totalorder %s443, 7
      %s445 = scalar_select %p444, %s443, 7
      %s446 = scalar_lea.vmem %s13, %s445
      %s447 = smul.u32 4, %s24
      %p448 = scmp.lt.s32.totalorder %s447, 7
      %s449 = scalar_select %p448, %s447, 7
      %s450 = smul.addr %s449, 8
      %s451 = scalar_lea.vmem %s0, %s450
      %s452 = smul.u32 4, %s24
      %s453 = smul.u32 4, %s24
      %p454 = scmp.lt.s32.totalorder %s453, 7
      %s455 = scalar_select %p454, %s453, 7
      %s456 = smul.addr %s455, 4
      %s457 = scalar_lea.vmem %s1, %s456
      %s458 = smul.u32 4, %s24
      %s459 = smul.u32 4, %s24
      %p460 = scmp.lt.s32.totalorder %s459, 7
      %s461 = scalar_select %p460, %s459, 7
      %s462 = scalar_lea.vmem %s13, %s461
      %s463 = smul.u32 4, %s24
      %v465 = vld [vmem:[%s451] sm:$0xff]
      %v466 = vld [vmem:[%s451 + $0x8] sm:$0xff]
      %v467 = vld [vmem:[%s451 + $0x10] sm:$0xff]
      %v468 = vld [vmem:[%s451 + $0x18] sm:$0xff]
      %v469 = vld [vmem:[%s457] sm:$0xff]
      %v470 = vld [vmem:[%s457 + $0x8] sm:$0xff]
      %v471 = vld [vmem:[%s2] sm:$0xf]
      %v472 = vld [vmem:[%s2 + $0x4] sm:$0xf]
      %v473 = vld [vmem:[%s2 + $0x8] sm:$0xf]
      %v474 = vld [vmem:[%s2 + $0xc] sm:$0xf]
      %v475 = vld [vmem:[%s2 + $0x10] sm:$0xf]
      %v476 = vld [vmem:[%s2 + $0x14] sm:$0xf]
      %v477 = vld [vmem:[%s2 + $0x18] sm:$0xf]
      %v478 = vld [vmem:[%s2 + $0x1c] sm:$0xf]
      %v479 = vld [vmem:[%s3] sm:$0xf]
      %v480 = vld [vmem:[%s3 + $0x4] sm:$0xf]
      %v481 = vld [vmem:[%s3 + $0x8] sm:$0xf]
      %v482 = vld [vmem:[%s3 + $0xc] sm:$0xf]
      %v483 = vld [vmem:[%s3 + $0x10] sm:$0xf]
      %v484 = vld [vmem:[%s3 + $0x14] sm:$0xf]
      %v485 = vld [vmem:[%s3 + $0x18] sm:$0xf]
      %v486 = vld [vmem:[%s3 + $0x1c] sm:$0xf]
      %v487 = vld [vmem:[%s4] sm:$0xff]
      %v488 = vld [vmem:[%s4 + $0x8] sm:$0xff]
      %v489 = vld [vmem:[%s4 + $0x10] sm:$0xff]
      %v490 = vld [vmem:[%s4 + $0x18] sm:$0xff]
      %v491 = vld [vmem:[%s4 + $0x20] sm:$0xff]
      %v492 = vld [vmem:[%s4 + $0x28] sm:$0xff]
      %v493 = vld [vmem:[%s4 + $0x30] sm:$0xff]
      %v494 = vld [vmem:[%s4 + $0x38] sm:$0xff]
      %v495 = vld [vmem:[%s5] sm:$0xf]
      %v496 = vld [vmem:[%s5 + $0x4] sm:$0xf]
      %v497 = vld [vmem:[%s5 + $0x8] sm:$0xf]
      %v498 = vld [vmem:[%s5 + $0xc] sm:$0xf]
      %v499 = vld [vmem:[%s5 + $0x10] sm:$0xf]
      %v500 = vld [vmem:[%s5 + $0x14] sm:$0xf]
      %v501 = vld [vmem:[%s5 + $0x18] sm:$0xf]
      %v502 = vld [vmem:[%s5 + $0x1c] sm:$0xf]
      %v503 = vld [vmem:[%s5 + $0x20] sm:$0xf]
      %v504 = vld [vmem:[%s5 + $0x24] sm:$0xf]
      %v505 = vld [vmem:[%s5 + $0x28] sm:$0xf]
      %v506 = vld [vmem:[%s5 + $0x2c] sm:$0xf]
      %v507 = vld [vmem:[%s5 + $0x30] sm:$0xf]
      %v508 = vld [vmem:[%s5 + $0x34] sm:$0xf]
      %v509 = vld [vmem:[%s5 + $0x38] sm:$0xf]
      %v510 = vld [vmem:[%s5 + $0x3c] sm:$0xf]
      %v511 = vld [vmem:[%s6] sm:$0xff]
      %v512 = vld [vmem:[%s6 + $0x8] sm:$0xff]
      %v513 = vld [vmem:[%s6 + $0x10] sm:$0xff]
      %v514 = vld [vmem:[%s6 + $0x18] sm:$0xff]
      %v515 = vld [vmem:[%s6 + $0x20] sm:$0xff]
      %v516 = vld [vmem:[%s6 + $0x28] sm:$0xff]
      %v517 = vld [vmem:[%s6 + $0x30] sm:$0xff]
      %v518 = vld [vmem:[%s6 + $0x38] sm:$0xff]
      %v519 = vld [vmem:[%s6 + $0x40] sm:$0xff]
      %v520 = vld [vmem:[%s6 + $0x48] sm:$0xff]
      %v521 = vld [vmem:[%s6 + $0x50] sm:$0xff]
      %v522 = vld [vmem:[%s6 + $0x58] sm:$0xff]
      %v523 = vld [vmem:[%s6 + $0x60] sm:$0xff]
      %v524 = vld [vmem:[%s6 + $0x68] sm:$0xff]
      %v525 = vld [vmem:[%s6 + $0x70] sm:$0xff]
      %v526 = vld [vmem:[%s6 + $0x78] sm:$0xff]
      %v527 = vld [vmem:[%s7] sm:$0xf]
      %v528 = vld [vmem:[%s7 + $0x4] sm:$0xf]
      %v529 = vld [vmem:[%s7 + $0x8] sm:$0xf]
      %v530 = vld [vmem:[%s7 + $0xc] sm:$0xf]
      %v531 = vld [vmem:[%s7 + $0x10] sm:$0xf]
      %v532 = vld [vmem:[%s7 + $0x14] sm:$0xf]
      %v533 = vld [vmem:[%s7 + $0x18] sm:$0xf]
      %v534 = vld [vmem:[%s7 + $0x1c] sm:$0xf]
      %v535 = vld [vmem:[%s7 + $0x20] sm:$0xf]
      %v536 = vld [vmem:[%s7 + $0x24] sm:$0xf]
      %v537 = vld [vmem:[%s7 + $0x28] sm:$0xf]
      %v538 = vld [vmem:[%s7 + $0x2c] sm:$0xf]
      %v539 = vld [vmem:[%s7 + $0x30] sm:$0xf]
      %v540 = vld [vmem:[%s7 + $0x34] sm:$0xf]
      %v541 = vld [vmem:[%s7 + $0x38] sm:$0xf]
      %v542 = vld [vmem:[%s7 + $0x3c] sm:$0xf]
      %v543 = vld [vmem:[%s8] sm:$0xff]
      %v544 = vld [vmem:[%s8 + $0x8] sm:$0xff]
      %v545 = vld [vmem:[%s8 + $0x10] sm:$0xff]
      %v546 = vld [vmem:[%s8 + $0x18] sm:$0xff]
      %v547 = vld [vmem:[%s8 + $0x20] sm:$0xff]
      %v548 = vld [vmem:[%s8 + $0x28] sm:$0xff]
      %v549 = vld [vmem:[%s8 + $0x30] sm:$0xff]
      %v550 = vld [vmem:[%s8 + $0x38] sm:$0xff]
      %v551 = vld [vmem:[%s8 + $0x40] sm:$0xff]
      %v552 = vld [vmem:[%s8 + $0x48] sm:$0xff]
      %v553 = vld [vmem:[%s8 + $0x50] sm:$0xff]
      %v554 = vld [vmem:[%s8 + $0x58] sm:$0xff]
      %v555 = vld [vmem:[%s8 + $0x60] sm:$0xff]
      %v556 = vld [vmem:[%s8 + $0x68] sm:$0xff]
      %v557 = vld [vmem:[%s8 + $0x70] sm:$0xff]
      %v558 = vld [vmem:[%s8 + $0x78] sm:$0xff]
      %v559 = vld [vmem:[%s9] sm:$0xf]
      %v560 = vld [vmem:[%s9 + $0x4] sm:$0xf]
      %v561 = vld [vmem:[%s9 + $0x8] sm:$0xf]
      %v562 = vld [vmem:[%s9 + $0xc] sm:$0xf]
      %v563 = vld [vmem:[%s9 + $0x10] sm:$0xf]
      %v564 = vld [vmem:[%s9 + $0x14] sm:$0xf]
      %v565 = vld [vmem:[%s9 + $0x18] sm:$0xf]
      %v566 = vld [vmem:[%s9 + $0x1c] sm:$0xf]
      %v567 = vld [vmem:[%s9 + $0x20] sm:$0xf]
      %v568 = vld [vmem:[%s9 + $0x24] sm:$0xf]
      %v569 = vld [vmem:[%s9 + $0x28] sm:$0xf]
      %v570 = vld [vmem:[%s9 + $0x2c] sm:$0xf]
      %v571 = vld [vmem:[%s9 + $0x30] sm:$0xf]
      %v572 = vld [vmem:[%s9 + $0x34] sm:$0xf]
      %v573 = vld [vmem:[%s9 + $0x38] sm:$0xf]
      %v574 = vld [vmem:[%s9 + $0x3c] sm:$0xf]
      %v575 = vld [vmem:[%s10] sm:$0xff]
      %v576 = vld [vmem:[%s10 + $0x8] sm:$0xff]
      %v577 = vld [vmem:[%s10 + $0x10] sm:$0xff]
      %v578 = vld [vmem:[%s10 + $0x18] sm:$0xff]
      %v579 = vld [vmem:[%s10 + $0x20] sm:$0xff]
      %v580 = vld [vmem:[%s10 + $0x28] sm:$0xff]
      %v581 = vld [vmem:[%s10 + $0x30] sm:$0xff]
      %v582 = vld [vmem:[%s10 + $0x38] sm:$0xff]
      %v583 = vld [vmem:[%s10 + $0x40] sm:$0xff]
      %v584 = vld [vmem:[%s10 + $0x48] sm:$0xff]
      %v585 = vld [vmem:[%s10 + $0x50] sm:$0xff]
      %v586 = vld [vmem:[%s10 + $0x58] sm:$0xff]
      %v587 = vld [vmem:[%s10 + $0x60] sm:$0xff]
      %v588 = vld [vmem:[%s10 + $0x68] sm:$0xff]
      %v589 = vld [vmem:[%s10 + $0x70] sm:$0xff]
      %v590 = vld [vmem:[%s10 + $0x78] sm:$0xff]
      %v591 = vld [vmem:[%s11] sm:$0xf]
      %v592 = vld [vmem:[%s11 + $0x4] sm:$0xf]
      %v593 = vld [vmem:[%s11 + $0x8] sm:$0xf]
      %v594 = vld [vmem:[%s11 + $0xc] sm:$0xf]
      %v595 = vld [vmem:[%s11 + $0x10] sm:$0xf]
      %v596 = vld [vmem:[%s11 + $0x14] sm:$0xf]
      %v597 = vld [vmem:[%s11 + $0x18] sm:$0xf]
      %v598 = vld [vmem:[%s11 + $0x1c] sm:$0xf]
      %v599 = vld [vmem:[%s11 + $0x20] sm:$0xf]
      %v600 = vld [vmem:[%s11 + $0x24] sm:$0xf]
      %v601 = vld [vmem:[%s11 + $0x28] sm:$0xf]
      %v602 = vld [vmem:[%s11 + $0x2c] sm:$0xf]
      %v603 = vld [vmem:[%s11 + $0x30] sm:$0xf]
      %v604 = vld [vmem:[%s11 + $0x34] sm:$0xf]
      %v605 = vld [vmem:[%s11 + $0x38] sm:$0xf]
      %v606 = vld [vmem:[%s11 + $0x3c] sm:$0xf]
      %v607 = vld [vmem:[%s12] sm:$0xff]
      %v608 = vld [vmem:[%s12 + $0x8] sm:$0xff]
      %v609 = vld [vmem:[%s12 + $0x10] sm:$0xff]
      %v610 = vld [vmem:[%s12 + $0x18] sm:$0xff]
      %v611 = vld [vmem:[%s12 + $0x20] sm:$0xff]
      %v612 = vld [vmem:[%s12 + $0x28] sm:$0xff]
      %v613 = vld [vmem:[%s12 + $0x30] sm:$0xff]
      %v614 = vld [vmem:[%s12 + $0x38] sm:$0xff]
      %v615 = vld [vmem:[%s12 + $0x40] sm:$0xff]
      %v616 = vld [vmem:[%s12 + $0x48] sm:$0xff]
      %v617 = vld [vmem:[%s12 + $0x50] sm:$0xff]
      %v618 = vld [vmem:[%s12 + $0x58] sm:$0xff]
      %v619 = vld [vmem:[%s12 + $0x60] sm:$0xff]
      %v620 = vld [vmem:[%s12 + $0x68] sm:$0xff]
      %v621 = vld [vmem:[%s12 + $0x70] sm:$0xff]
      %v622 = vld [vmem:[%s12 + $0x78] sm:$0xff]
      %v625 = vcombine.high %v469, %v469
      %v626 = vcombine.high %v470, %v470
      %v629 = vpack.c.bf16 %v469, %v469
      %v630 = vpack.c.bf16 %v625, %v625
      %v631 = vpack.c.bf16 %v470, %v470
      %v632 = vpack.c.bf16 %v626, %v626
      %634 = vset.pattern.permute.xlu0 0
      %635 = vperm.xlu0 %634, %v487
      %v636 = vpop.permute.xlu0 %635
      %639 = vset.pattern.permute.xlu0 0
      %640 = vperm.xlu0 %639, %v488
      %v641 = vpop.permute.xlu0 %640
      %644 = vset.pattern.permute.xlu0 0
      %645 = vperm.xlu0 %644, %v489
      %v646 = vpop.permute.xlu0 %645
      %649 = vset.pattern.permute.xlu0 0
      %650 = vperm.xlu0 %649, %v490
      %v651 = vpop.permute.xlu0 %650
      %654 = vset.pattern.permute.xlu0 0
      %655 = vperm.xlu0 %654, %v491
      %v656 = vpop.permute.xlu0 %655
      %659 = vset.pattern.permute.xlu0 0
      %660 = vperm.xlu0 %659, %v492
      %v661 = vpop.permute.xlu0 %660
      %664 = vset.pattern.permute.xlu0 0
      %665 = vperm.xlu0 %664, %v493
      %v666 = vpop.permute.xlu0 %665
      %669 = vset.pattern.permute.xlu0 0
      %670 = vperm.xlu0 %669, %v494
      %v671 = vpop.permute.xlu0 %670
      %v681 = vunpack.c.l.b16 %v479
      %v682 = vunpack.c.l.b16 %v480
      %v683 = vunpack.c.l.b16 %v481
      %v684 = vunpack.c.l.b16 %v482
      %v685 = vunpack.c.l.b16 %v483
      %v686 = vunpack.c.l.b16 %v484
      %v687 = vunpack.c.l.b16 %v485
      %v688 = vunpack.c.l.b16 %v486
      %v689 = vpack.c.b16 %v682, %v681
      %v690 = vpack.c.b16 %v684, %v683
      %v691 = vpack.c.b16 %v686, %v685
      %v692 = vpack.c.b16 %v688, %v687
      %vm693 = vcmask 31744
      %v695 = vsel %vm693, %v689, 0
      %v698 = vsel %vm693, %v690, 0
      %v701 = vsel %vm693, %v691, 0
      %v704 = vsel %vm693, %v692, 0
      %vm706 = vcmask 1041408
      %v708 = vsel %vm706, %v629, 0
      %v711 = vsel %vm706, %v630, 0
      %v714 = vsel %vm706, %v631, 0
      %v717 = vsel %vm706, %v632, 0
      %719 = vmatprep.subr.bf16.mxu0 0
      %720 = vmatpush1.bf16.msra.mxu0 0
      %721 = vmatprep.subr.bf16.mxu0 0
      %722 = vmatpush1.bf16.msra.mxu0 0
      %723 = vmatprep.subr.bf16.mxu0 0
      %724 = vmatpush1.bf16.msra.mxu0 0
      %725 = vmatprep.subr.bf16.mxu0 0
      %726 = vmatpush1.bf16.msra.mxu0 0
      %727 = vmatprep.subr.bf16.mxu0 0
      %728 = vmatpush1.bf16.msra.mxu0 0
      %729 = vmatprep.subr.bf16.mxu0 0
      %730 = vmatpush1.bf16.msra.mxu0 0
      %731 = vmatprep.subr.bf16.mxu0 0
      %732 = vmatpush1.bf16.msra.mxu0 0
      %733 = vmatprep.subr.bf16.mxu0 %v711
      %734 = vmatpush1.bf16.msra.mxu0 %v708
      %735 = vmatprep.subr.bf16.mxu0 0
      %736 = vmatpush2.bf16.msra.mxu0 0
      %737 = vmatprep.subr.bf16.mxu0 0
      %738 = vmatpush2.bf16.msra.mxu0 0
      %739 = vmatprep.subr.bf16.mxu0 0
      %740 = vmatpush2.bf16.msra.mxu0 0
      %741 = vmatprep.subr.bf16.mxu0 0
      %742 = vmatpush2.bf16.msra.mxu0 0
      %743 = vmatprep.subr.bf16.mxu0 0
      %744 = vmatpush2.bf16.msra.mxu0 0
      %745 = vmatprep.subr.bf16.mxu0 0
      %746 = vmatpush2.bf16.msra.mxu0 0
      %747 = vmatprep.subr.bf16.mxu0 0
      %748 = vmatpush2.bf16.msra.mxu0 0
      %749 = vmatprep.subr.bf16.mxu0 0
      %750 = vmatpush2.bf16.msra.mxu0 0
      %751 = vmatprep.mubr.bf16.mxu0 0
      %752 = vmatmul.mubr.bf16.gmra.mxu0 %v695
      %v753 = vpop.f32.mrf.mxu0
      %v754 = vadd.f32 %v636, %v753
      %v755 = vpop.f32.mrf.mxu0
      %v756 = vadd.f32 %v636, %v755
      %v757 = vpop.f32.mrf.mxu0
      %v758 = vadd.f32 %v641, %v757
      %v759 = vpop.f32.mrf.mxu0
      %v760 = vadd.f32 %v641, %v759
      %761 = vmatprep.mubr.bf16.mxu0 0
      %762 = vmatmul.mubr.bf16.gmra.mxu0 %v698
      %v763 = vpop.f32.mrf.mxu0
      %v764 = vadd.f32 %v646, %v763
      %v765 = vpop.f32.mrf.mxu0
      %v766 = vadd.f32 %v646, %v765
      %v767 = vpop.f32.mrf.mxu0
      %v768 = vadd.f32 %v651, %v767
      %v769 = vpop.f32.mrf.mxu0
      %v770 = vadd.f32 %v651, %v769
      %771 = vmatprep.mubr.bf16.mxu0 0
      %772 = vmatmul.mubr.bf16.gmra.mxu0 %v701
      %v773 = vpop.f32.mrf.mxu0
      %v774 = vadd.f32 %v656, %v773
      %v775 = vpop.f32.mrf.mxu0
      %v776 = vadd.f32 %v656, %v775
      %v777 = vpop.f32.mrf.mxu0
      %v778 = vadd.f32 %v661, %v777
      %v779 = vpop.f32.mrf.mxu0
      %v780 = vadd.f32 %v661, %v779
      %781 = vmatprep.mubr.bf16.mxu0 0
      %782 = vmatmul.mubr.bf16.gmra.mxu0 %v704
      %v783 = vpop.f32.mrf.mxu0
      %v784 = vadd.f32 %v666, %v783
      %v785 = vpop.f32.mrf.mxu0
      %v786 = vadd.f32 %v666, %v785
      %v787 = vpop.f32.mrf.mxu0
      %v788 = vadd.f32 %v671, %v787
      %v789 = vpop.f32.mrf.mxu0
      %v790 = vadd.f32 %v671, %v789
      %791 = vdwg.mxu0
      %792 = vmatprep.subr.bf16.mxu0 0
      %793 = vmatpush1.bf16.msra.mxu0 0
      %794 = vmatprep.subr.bf16.mxu0 0
      %795 = vmatpush1.bf16.msra.mxu0 0
      %796 = vmatprep.subr.bf16.mxu0 0
      %797 = vmatpush1.bf16.msra.mxu0 0
      %798 = vmatprep.subr.bf16.mxu0 0
      %799 = vmatpush1.bf16.msra.mxu0 0
      %800 = vmatprep.subr.bf16.mxu0 0
      %801 = vmatpush1.bf16.msra.mxu0 0
      %802 = vmatprep.subr.bf16.mxu0 0
      %803 = vmatpush1.bf16.msra.mxu0 0
      %804 = vmatprep.subr.bf16.mxu0 0
      %805 = vmatpush1.bf16.msra.mxu0 0
      %806 = vmatprep.subr.bf16.mxu0 %v717
      %807 = vmatpush1.bf16.msra.mxu0 %v714
      %808 = vmatprep.subr.bf16.mxu0 0
      %809 = vmatpush2.bf16.msra.mxu0 0
      %810 = vmatprep.subr.bf16.mxu0 0
      %811 = vmatpush2.bf16.msra.mxu0 0
      %812 = vmatprep.subr.bf16.mxu0 0
      %813 = vmatpush2.bf16.msra.mxu0 0
      %814 = vmatprep.subr.bf16.mxu0 0
      %815 = vmatpush2.bf16.msra.mxu0 0
      %816 = vmatprep.subr.bf16.mxu0 0
      %817 = vmatpush2.bf16.msra.mxu0 0
      %818 = vmatprep.subr.bf16.mxu0 0
      %819 = vmatpush2.bf16.msra.mxu0 0
      %820 = vmatprep.subr.bf16.mxu0 0
      %821 = vmatpush2.bf16.msra.mxu0 0
      %822 = vmatprep.subr.bf16.mxu0 0
      %823 = vmatpush2.bf16.msra.mxu0 0
      %824 = vmatprep.mubr.bf16.mxu0 0
      %825 = vmatmul.mubr.bf16.gmra.mxu0 %v695
      %v826 = vpop.f32.mrf.mxu0
      %v827 = vadd.f32 %v636, %v826
      %v828 = vpop.f32.mrf.mxu0
      %v829 = vadd.f32 %v636, %v828
      %v830 = vpop.f32.mrf.mxu0
      %v831 = vadd.f32 %v641, %v830
      %v832 = vpop.f32.mrf.mxu0
      %v833 = vadd.f32 %v641, %v832
      %834 = vmatprep.mubr.bf16.mxu0 0
      %835 = vmatmul.mubr.bf16.gmra.mxu0 %v698
      %v836 = vpop.f32.mrf.mxu0
      %v837 = vadd.f32 %v646, %v836
      %v838 = vpop.f32.mrf.mxu0
      %v839 = vadd.f32 %v646, %v838
      %v840 = vpop.f32.mrf.mxu0
      %v841 = vadd.f32 %v651, %v840
      %v842 = vpop.f32.mrf.mxu0
      %v843 = vadd.f32 %v651, %v842
      %844 = vmatprep.mubr.bf16.mxu0 0
      %845 = vmatmul.mubr.bf16.gmra.mxu0 %v701
      %v846 = vpop.f32.mrf.mxu0
      %v847 = vadd.f32 %v656, %v846
      %v848 = vpop.f32.mrf.mxu0
      %v849 = vadd.f32 %v656, %v848
      %v850 = vpop.f32.mrf.mxu0
      %v851 = vadd.f32 %v661, %v850
      %v852 = vpop.f32.mrf.mxu0
      %v853 = vadd.f32 %v661, %v852
      %854 = vmatprep.mubr.bf16.mxu0 0
      %855 = vmatmul.mubr.bf16.gmra.mxu0 %v704
      %v856 = vpop.f32.mrf.mxu0
      %v857 = vadd.f32 %v666, %v856
      %v858 = vpop.f32.mrf.mxu0
      %v859 = vadd.f32 %v666, %v858
      %v860 = vpop.f32.mrf.mxu0
      %v861 = vadd.f32 %v671, %v860
      %v862 = vpop.f32.mrf.mxu0
      %v863 = vadd.f32 %v671, %v862
      %864 = vdwg.mxu0
      %866 = vset.pattern.permute.xlu0 0
      %867 = vperm.xlu0 %866, %v575
      %v868 = vpop.permute.xlu0 %867
      %871 = vset.pattern.permute.xlu0 0
      %872 = vperm.xlu0 %871, %v576
      %v873 = vpop.permute.xlu0 %872
      %876 = vset.pattern.permute.xlu0 0
      %877 = vperm.xlu0 %876, %v577
      %v878 = vpop.permute.xlu0 %877
      %881 = vset.pattern.permute.xlu0 0
      %882 = vperm.xlu0 %881, %v578
      %v883 = vpop.permute.xlu0 %882
      %886 = vset.pattern.permute.xlu0 0
      %887 = vperm.xlu0 %886, %v579
      %v888 = vpop.permute.xlu0 %887
      %891 = vset.pattern.permute.xlu0 0
      %892 = vperm.xlu0 %891, %v580
      %v893 = vpop.permute.xlu0 %892
      %896 = vset.pattern.permute.xlu0 0
      %897 = vperm.xlu0 %896, %v581
      %v898 = vpop.permute.xlu0 %897
      %901 = vset.pattern.permute.xlu0 0
      %902 = vperm.xlu0 %901, %v582
      %v903 = vpop.permute.xlu0 %902
      %906 = vset.pattern.permute.xlu0 0
      %907 = vperm.xlu0 %906, %v583
      %v908 = vpop.permute.xlu0 %907
      %911 = vset.pattern.permute.xlu0 0
      %912 = vperm.xlu0 %911, %v584
      %v913 = vpop.permute.xlu0 %912
      %916 = vset.pattern.permute.xlu0 0
      %917 = vperm.xlu0 %916, %v585
      %v918 = vpop.permute.xlu0 %917
      %921 = vset.pattern.permute.xlu0 0
      %922 = vperm.xlu0 %921, %v586
      %v923 = vpop.permute.xlu0 %922
      %926 = vset.pattern.permute.xlu0 0
      %927 = vperm.xlu0 %926, %v587
      %v928 = vpop.permute.xlu0 %927
      %931 = vset.pattern.permute.xlu0 0
      %932 = vperm.xlu0 %931, %v588
      %v933 = vpop.permute.xlu0 %932
      %936 = vset.pattern.permute.xlu0 0
      %937 = vperm.xlu0 %936, %v589
      %v938 = vpop.permute.xlu0 %937
      %941 = vset.pattern.permute.xlu0 0
      %942 = vperm.xlu0 %941, %v590
      %v943 = vpop.permute.xlu0 %942
      %v961 = vunpack.c.l.b16 %v559
      %v962 = vunpack.c.l.b16 %v560
      %v963 = vunpack.c.l.b16 %v561
      %v964 = vunpack.c.l.b16 %v562
      %v965 = vunpack.c.l.b16 %v563
      %v966 = vunpack.c.l.b16 %v564
      %v967 = vunpack.c.l.b16 %v565
      %v968 = vunpack.c.l.b16 %v566
      %v969 = vunpack.c.l.b16 %v567
      %v970 = vunpack.c.l.b16 %v568
      %v971 = vunpack.c.l.b16 %v569
      %v972 = vunpack.c.l.b16 %v570
      %v973 = vunpack.c.l.b16 %v571
      %v974 = vunpack.c.l.b16 %v572
      %v975 = vunpack.c.l.b16 %v573
      %v976 = vunpack.c.l.b16 %v574
      %v977 = vpack.c.b16 %v962, %v961
      %v978 = vpack.c.b16 %v964, %v963
      %v979 = vpack.c.b16 %v966, %v965
      %v980 = vpack.c.b16 %v968, %v967
      %v981 = vpack.c.b16 %v970, %v969
      %v982 = vpack.c.b16 %v972, %v971
      %v983 = vpack.c.b16 %v974, %v973
      %v984 = vpack.c.b16 %v976, %v975
      %v986 = vsel %vm693, %v977, 0
      %v989 = vsel %vm693, %v978, 0
      %v992 = vsel %vm693, %v979, 0
      %v995 = vsel %vm693, %v980, 0
      %v998 = vsel %vm693, %v981, 0
      %v1001 = vsel %vm693, %v982, 0
      %v1004 = vsel %vm693, %v983, 0
      %v1007 = vsel %vm693, %v984, 0
      %1009 = vmatprep.subr.bf16.mxu0 0
      %1010 = vmatpush1.bf16.msra.mxu0 0
      %1011 = vmatprep.subr.bf16.mxu0 0
      %1012 = vmatpush1.bf16.msra.mxu0 0
      %1013 = vmatprep.subr.bf16.mxu0 0
      %1014 = vmatpush1.bf16.msra.mxu0 0
      %1015 = vmatprep.subr.bf16.mxu0 0
      %1016 = vmatpush1.bf16.msra.mxu0 0
      %1017 = vmatprep.subr.bf16.mxu0 0
      %1018 = vmatpush1.bf16.msra.mxu0 0
      %1019 = vmatprep.subr.bf16.mxu0 0
      %1020 = vmatpush1.bf16.msra.mxu0 0
      %1021 = vmatprep.subr.bf16.mxu0 0
      %1022 = vmatpush1.bf16.msra.mxu0 0
      %1023 = vmatprep.subr.bf16.mxu0 %v711
      %1024 = vmatpush1.bf16.msra.mxu0 %v708
      %1025 = vmatprep.subr.bf16.mxu0 0
      %1026 = vmatpush2.bf16.msra.mxu0 0
      %1027 = vmatprep.subr.bf16.mxu0 0
      %1028 = vmatpush2.bf16.msra.mxu0 0
      %1029 = vmatprep.subr.bf16.mxu0 0
      %1030 = vmatpush2.bf16.msra.mxu0 0
      %1031 = vmatprep.subr.bf16.mxu0 0
      %1032 = vmatpush2.bf16.msra.mxu0 0
      %1033 = vmatprep.subr.bf16.mxu0 0
      %1034 = vmatpush2.bf16.msra.mxu0 0
      %1035 = vmatprep.subr.bf16.mxu0 0
      %1036 = vmatpush2.bf16.msra.mxu0 0
      %1037 = vmatprep.subr.bf16.mxu0 0
      %1038 = vmatpush2.bf16.msra.mxu0 0
      %1039 = vmatprep.subr.bf16.mxu0 0
      %1040 = vmatpush2.bf16.msra.mxu0 0
      %1041 = vmatprep.mubr.bf16.mxu0 0
      %1042 = vmatmul.mubr.bf16.gmra.mxu0 %v986
      %v1043 = vpop.f32.mrf.mxu0
      %v1044 = vadd.f32 %v868, %v1043
      %v1045 = vpop.f32.mrf.mxu0
      %v1046 = vadd.f32 %v868, %v1045
      %v1047 = vpop.f32.mrf.mxu0
      %v1048 = vadd.f32 %v873, %v1047
      %v1049 = vpop.f32.mrf.mxu0
      %v1050 = vadd.f32 %v873, %v1049
      %1051 = vmatprep.mubr.bf16.mxu0 0
      %1052 = vmatmul.mubr.bf16.gmra.mxu0 %v989
      %v1053 = vpop.f32.mrf.mxu0
      %v1054 = vadd.f32 %v878, %v1053
      %v1055 = vpop.f32.mrf.mxu0
      %v1056 = vadd.f32 %v878, %v1055
      %v1057 = vpop.f32.mrf.mxu0
      %v1058 = vadd.f32 %v883, %v1057
      %v1059 = vpop.f32.mrf.mxu0
      %v1060 = vadd.f32 %v883, %v1059
      %1061 = vmatprep.mubr.bf16.mxu0 0
      %1062 = vmatmul.mubr.bf16.gmra.mxu0 %v992
      %v1063 = vpop.f32.mrf.mxu0
      %v1064 = vadd.f32 %v888, %v1063
      %v1065 = vpop.f32.mrf.mxu0
      %v1066 = vadd.f32 %v888, %v1065
      %v1067 = vpop.f32.mrf.mxu0
      %v1068 = vadd.f32 %v893, %v1067
      %v1069 = vpop.f32.mrf.mxu0
      %v1070 = vadd.f32 %v893, %v1069
      %1071 = vmatprep.mubr.bf16.mxu0 0
      %1072 = vmatmul.mubr.bf16.gmra.mxu0 %v995
      %v1073 = vpop.f32.mrf.mxu0
      %v1074 = vadd.f32 %v898, %v1073
      %v1075 = vpop.f32.mrf.mxu0
      %v1076 = vadd.f32 %v898, %v1075
      %v1077 = vpop.f32.mrf.mxu0
      %v1078 = vadd.f32 %v903, %v1077
      %v1079 = vpop.f32.mrf.mxu0
      %v1080 = vadd.f32 %v903, %v1079
      %1081 = vmatprep.mubr.bf16.mxu0 0
      %1082 = vmatmul.mubr.bf16.gmra.mxu0 %v998
      %v1083 = vpop.f32.mrf.mxu0
      %v1084 = vadd.f32 %v908, %v1083
      %v1085 = vpop.f32.mrf.mxu0
      %v1086 = vadd.f32 %v908, %v1085
      %v1087 = vpop.f32.mrf.mxu0
      %v1088 = vadd.f32 %v913, %v1087
      %v1089 = vpop.f32.mrf.mxu0
      %v1090 = vadd.f32 %v913, %v1089
      %1091 = vmatprep.mubr.bf16.mxu0 0
      %1092 = vmatmul.mubr.bf16.gmra.mxu0 %v1001
      %v1093 = vpop.f32.mrf.mxu0
      %v1094 = vadd.f32 %v918, %v1093
      %v1095 = vpop.f32.mrf.mxu0
      %v1096 = vadd.f32 %v918, %v1095
      %v1097 = vpop.f32.mrf.mxu0
      %v1098 = vadd.f32 %v923, %v1097
      %v1099 = vpop.f32.mrf.mxu0
      %v1100 = vadd.f32 %v923, %v1099
      %1101 = vmatprep.mubr.bf16.mxu0 0
      %1102 = vmatmul.mubr.bf16.gmra.mxu0 %v1004
      %v1103 = vpop.f32.mrf.mxu0
      %v1104 = vadd.f32 %v928, %v1103
      %v1105 = vpop.f32.mrf.mxu0
      %v1106 = vadd.f32 %v928, %v1105
      %v1107 = vpop.f32.mrf.mxu0
      %v1108 = vadd.f32 %v933, %v1107
      %v1109 = vpop.f32.mrf.mxu0
      %v1110 = vadd.f32 %v933, %v1109
      %1111 = vmatprep.mubr.bf16.mxu0 0
      %1112 = vmatmul.mubr.bf16.gmra.mxu0 %v1007
      %v1113 = vpop.f32.mrf.mxu0
      %v1114 = vadd.f32 %v938, %v1113
      %v1115 = vpop.f32.mrf.mxu0
      %v1116 = vadd.f32 %v938, %v1115
      %v1117 = vpop.f32.mrf.mxu0
      %v1118 = vadd.f32 %v943, %v1117
      %v1119 = vpop.f32.mrf.mxu0
      %v1120 = vadd.f32 %v943, %v1119
      %1121 = vdwg.mxu0
      %1122 = vmatprep.subr.bf16.mxu0 0
      %1123 = vmatpush1.bf16.msra.mxu0 0
      %1124 = vmatprep.subr.bf16.mxu0 0
      %1125 = vmatpush1.bf16.msra.mxu0 0
      %1126 = vmatprep.subr.bf16.mxu0 0
      %1127 = vmatpush1.bf16.msra.mxu0 0
      %1128 = vmatprep.subr.bf16.mxu0 0
      %1129 = vmatpush1.bf16.msra.mxu0 0
      %1130 = vmatprep.subr.bf16.mxu0 0
      %1131 = vmatpush1.bf16.msra.mxu0 0
      %1132 = vmatprep.subr.bf16.mxu0 0
      %1133 = vmatpush1.bf16.msra.mxu0 0
      %1134 = vmatprep.subr.bf16.mxu0 0
      %1135 = vmatpush1.bf16.msra.mxu0 0
      %1136 = vmatprep.subr.bf16.mxu0 %v717
      %1137 = vmatpush1.bf16.msra.mxu0 %v714
      %1138 = vmatprep.subr.bf16.mxu0 0
      %1139 = vmatpush2.bf16.msra.mxu0 0
      %1140 = vmatprep.subr.bf16.mxu0 0
      %1141 = vmatpush2.bf16.msra.mxu0 0
      %1142 = vmatprep.subr.bf16.mxu0 0
      %1143 = vmatpush2.bf16.msra.mxu0 0
      %1144 = vmatprep.subr.bf16.mxu0 0
      %1145 = vmatpush2.bf16.msra.mxu0 0
      %1146 = vmatprep.subr.bf16.mxu0 0
      %1147 = vmatpush2.bf16.msra.mxu0 0
      %1148 = vmatprep.subr.bf16.mxu0 0
      %1149 = vmatpush2.bf16.msra.mxu0 0
      %1150 = vmatprep.subr.bf16.mxu0 0
      %1151 = vmatpush2.bf16.msra.mxu0 0
      %1152 = vmatprep.subr.bf16.mxu0 0
      %1153 = vmatpush2.bf16.msra.mxu0 0
      %1154 = vmatprep.mubr.bf16.mxu0 0
      %1155 = vmatmul.mubr.bf16.gmra.mxu0 %v986
      %v1156 = vpop.f32.mrf.mxu0
      %v1157 = vadd.f32 %v868, %v1156
      %v1158 = vpop.f32.mrf.mxu0
      %v1159 = vadd.f32 %v868, %v1158
      %v1160 = vpop.f32.mrf.mxu0
      %v1161 = vadd.f32 %v873, %v1160
      %v1162 = vpop.f32.mrf.mxu0
      %v1163 = vadd.f32 %v873, %v1162
      %1164 = vmatprep.mubr.bf16.mxu0 0
      %1165 = vmatmul.mubr.bf16.gmra.mxu0 %v989
      %v1166 = vpop.f32.mrf.mxu0
      %v1167 = vadd.f32 %v878, %v1166
      %v1168 = vpop.f32.mrf.mxu0
      %v1169 = vadd.f32 %v878, %v1168
      %v1170 = vpop.f32.mrf.mxu0
      %v1171 = vadd.f32 %v883, %v1170
      %v1172 = vpop.f32.mrf.mxu0
      %v1173 = vadd.f32 %v883, %v1172
      %1174 = vmatprep.mubr.bf16.mxu0 0
      %1175 = vmatmul.mubr.bf16.gmra.mxu0 %v992
      %v1176 = vpop.f32.mrf.mxu0
      %v1177 = vadd.f32 %v888, %v1176
      %v1178 = vpop.f32.mrf.mxu0
      %v1179 = vadd.f32 %v888, %v1178
      %v1180 = vpop.f32.mrf.mxu0
      %v1181 = vadd.f32 %v893, %v1180
      %v1182 = vpop.f32.mrf.mxu0
      %v1183 = vadd.f32 %v893, %v1182
      %1184 = vmatprep.mubr.bf16.mxu0 0
      %1185 = vmatmul.mubr.bf16.gmra.mxu0 %v995
      %v1186 = vpop.f32.mrf.mxu0
      %v1187 = vadd.f32 %v898, %v1186
      %v1188 = vpop.f32.mrf.mxu0
      %v1189 = vadd.f32 %v898, %v1188
      %v1190 = vpop.f32.mrf.mxu0
      %v1191 = vadd.f32 %v903, %v1190
      %v1192 = vpop.f32.mrf.mxu0
      %v1193 = vadd.f32 %v903, %v1192
      %1194 = vmatprep.mubr.bf16.mxu0 0
      %1195 = vmatmul.mubr.bf16.gmra.mxu0 %v998
      %v1196 = vpop.f32.mrf.mxu0
      %v1197 = vadd.f32 %v908, %v1196
      %v1198 = vpop.f32.mrf.mxu0
      %v1199 = vadd.f32 %v908, %v1198
      %v1200 = vpop.f32.mrf.mxu0
      %v1201 = vadd.f32 %v913, %v1200
      %v1202 = vpop.f32.mrf.mxu0
      %v1203 = vadd.f32 %v913, %v1202
      %1204 = vmatprep.mubr.bf16.mxu0 0
      %1205 = vmatmul.mubr.bf16.gmra.mxu0 %v1001
      %v1206 = vpop.f32.mrf.mxu0
      %v1207 = vadd.f32 %v918, %v1206
      %v1208 = vpop.f32.mrf.mxu0
      %v1209 = vadd.f32 %v918, %v1208
      %v1210 = vpop.f32.mrf.mxu0
      %v1211 = vadd.f32 %v923, %v1210
      %v1212 = vpop.f32.mrf.mxu0
      %v1213 = vadd.f32 %v923, %v1212
      %1214 = vmatprep.mubr.bf16.mxu0 0
      %1215 = vmatmul.mubr.bf16.gmra.mxu0 %v1004
      %v1216 = vpop.f32.mrf.mxu0
      %v1217 = vadd.f32 %v928, %v1216
      %v1218 = vpop.f32.mrf.mxu0
      %v1219 = vadd.f32 %v928, %v1218
      %v1220 = vpop.f32.mrf.mxu0
      %v1221 = vadd.f32 %v933, %v1220
      %v1222 = vpop.f32.mrf.mxu0
      %v1223 = vadd.f32 %v933, %v1222
      %1224 = vmatprep.mubr.bf16.mxu0 0
      %1225 = vmatmul.mubr.bf16.gmra.mxu0 %v1007
      %v1226 = vpop.f32.mrf.mxu0
      %v1227 = vadd.f32 %v938, %v1226
      %v1228 = vpop.f32.mrf.mxu0
      %v1229 = vadd.f32 %v938, %v1228
      %v1230 = vpop.f32.mrf.mxu0
      %v1231 = vadd.f32 %v943, %v1230
      %v1232 = vpop.f32.mrf.mxu0
      %v1233 = vadd.f32 %v943, %v1232
      %1234 = vdwg.mxu0
      %v1235 = vmul.f32 %v1044, 0.5
      %v1236 = vmul.f32 %v1046, 0.5
      %v1237 = vmul.f32 %v1157, 0.5
      %v1238 = vmul.f32 %v1159, 0.5
      %v1239 = vmul.f32 %v1048, 0.5
      %v1240 = vmul.f32 %v1050, 0.5
      %v1241 = vmul.f32 %v1161, 0.5
      %v1242 = vmul.f32 %v1163, 0.5
      %v1243 = vmul.f32 %v1054, 0.5
      %v1244 = vmul.f32 %v1056, 0.5
      %v1245 = vmul.f32 %v1167, 0.5
      %v1246 = vmul.f32 %v1169, 0.5
      %v1247 = vmul.f32 %v1058, 0.5
      %v1248 = vmul.f32 %v1060, 0.5
      %v1249 = vmul.f32 %v1171, 0.5
      %v1250 = vmul.f32 %v1173, 0.5
      %v1251 = vmul.f32 %v1064, 0.5
      %v1252 = vmul.f32 %v1066, 0.5
      %v1253 = vmul.f32 %v1177, 0.5
      %v1254 = vmul.f32 %v1179, 0.5
      %v1255 = vmul.f32 %v1068, 0.5
      %v1256 = vmul.f32 %v1070, 0.5
      %v1257 = vmul.f32 %v1181, 0.5
      %v1258 = vmul.f32 %v1183, 0.5
      %v1259 = vmul.f32 %v1074, 0.5
      %v1260 = vmul.f32 %v1076, 0.5
      %v1261 = vmul.f32 %v1187, 0.5
      %v1262 = vmul.f32 %v1189, 0.5
      %v1263 = vmul.f32 %v1078, 0.5
      %v1264 = vmul.f32 %v1080, 0.5
      %v1265 = vmul.f32 %v1191, 0.5
      %v1266 = vmul.f32 %v1193, 0.5
      %v1267 = vmul.f32 %v1084, 0.5
      %v1268 = vmul.f32 %v1086, 0.5
      %v1269 = vmul.f32 %v1197, 0.5
      %v1270 = vmul.f32 %v1199, 0.5
      %v1271 = vmul.f32 %v1088, 0.5
      %v1272 = vmul.f32 %v1090, 0.5
      %v1273 = vmul.f32 %v1201, 0.5
      %v1274 = vmul.f32 %v1203, 0.5
      %v1275 = vmul.f32 %v1094, 0.5
      %v1276 = vmul.f32 %v1096, 0.5
      %v1277 = vmul.f32 %v1207, 0.5
      %v1278 = vmul.f32 %v1209, 0.5
      %v1279 = vmul.f32 %v1098, 0.5
      %v1280 = vmul.f32 %v1100, 0.5
      %v1281 = vmul.f32 %v1211, 0.5
      %v1282 = vmul.f32 %v1213, 0.5
      %v1283 = vmul.f32 %v1104, 0.5
      %v1284 = vmul.f32 %v1106, 0.5
      %v1285 = vmul.f32 %v1217, 0.5
      %v1286 = vmul.f32 %v1219, 0.5
      %v1287 = vmul.f32 %v1108, 0.5
      %v1288 = vmul.f32 %v1110, 0.5
      %v1289 = vmul.f32 %v1221, 0.5
      %v1290 = vmul.f32 %v1223, 0.5
      %v1291 = vmul.f32 %v1114, 0.5
      %v1292 = vmul.f32 %v1116, 0.5
      %v1293 = vmul.f32 %v1227, 0.5
      %v1294 = vmul.f32 %v1229, 0.5
      %v1295 = vmul.f32 %v1118, 0.5
      %v1296 = vmul.f32 %v1120, 0.5
      %v1297 = vmul.f32 %v1231, 0.5
      %v1298 = vmul.f32 %v1233, 0.5
      %v1299 = vtanh.pop %v1235
      %v1300 = vtanh.pop %v1236
      %v1301 = vtanh.pop %v1237
      %v1302 = vtanh.pop %v1238
      %v1303 = vtanh.pop %v1239
      %v1304 = vtanh.pop %v1240
      %v1305 = vtanh.pop %v1241
      %v1306 = vtanh.pop %v1242
      %v1307 = vtanh.pop %v1243
      %v1308 = vtanh.pop %v1244
      %v1309 = vtanh.pop %v1245
      %v1310 = vtanh.pop %v1246
      %v1311 = vtanh.pop %v1247
      %v1312 = vtanh.pop %v1248
      %v1313 = vtanh.pop %v1249
      %v1314 = vtanh.pop %v1250
      %v1315 = vtanh.pop %v1251
      %v1316 = vtanh.pop %v1252
      %v1317 = vtanh.pop %v1253
      %v1318 = vtanh.pop %v1254
      %v1319 = vtanh.pop %v1255
      %v1320 = vtanh.pop %v1256
      %v1321 = vtanh.pop %v1257
      %v1322 = vtanh.pop %v1258
      %v1323 = vtanh.pop %v1259
      %v1324 = vtanh.pop %v1260
      %v1325 = vtanh.pop %v1261
      %v1326 = vtanh.pop %v1262
      %v1327 = vtanh.pop %v1263
      %v1328 = vtanh.pop %v1264
      %v1329 = vtanh.pop %v1265
      %v1330 = vtanh.pop %v1266
      %v1331 = vtanh.pop %v1267
      %v1332 = vtanh.pop %v1268
      %v1333 = vtanh.pop %v1269
      %v1334 = vtanh.pop %v1270
      %v1335 = vtanh.pop %v1271
      %v1336 = vtanh.pop %v1272
      %v1337 = vtanh.pop %v1273
      %v1338 = vtanh.pop %v1274
      %v1339 = vtanh.pop %v1275
      %v1340 = vtanh.pop %v1276
      %v1341 = vtanh.pop %v1277
      %v1342 = vtanh.pop %v1278
      %v1343 = vtanh.pop %v1279
      %v1344 = vtanh.pop %v1280
      %v1345 = vtanh.pop %v1281
      %v1346 = vtanh.pop %v1282
      %v1347 = vtanh.pop %v1283
      %v1348 = vtanh.pop %v1284
      %v1349 = vtanh.pop %v1285
      %v1350 = vtanh.pop %v1286
      %v1351 = vtanh.pop %v1287
      %v1352 = vtanh.pop %v1288
      %v1353 = vtanh.pop %v1289
      %v1354 = vtanh.pop %v1290
      %v1355 = vtanh.pop %v1291
      %v1356 = vtanh.pop %v1292
      %v1357 = vtanh.pop %v1293
      %v1358 = vtanh.pop %v1294
      %v1359 = vtanh.pop %v1295
      %v1360 = vtanh.pop %v1296
      %v1361 = vtanh.pop %v1297
      %v1362 = vtanh.pop %v1298
      %v1363 = vadd.f32 %v1299, 1.0
      %v1364 = vadd.f32 %v1300, 1.0
      %v1365 = vadd.f32 %v1301, 1.0
      %v1366 = vadd.f32 %v1302, 1.0
      %v1367 = vadd.f32 %v1303, 1.0
      %v1368 = vadd.f32 %v1304, 1.0
      %v1369 = vadd.f32 %v1305, 1.0
      %v1370 = vadd.f32 %v1306, 1.0
      %v1371 = vadd.f32 %v1307, 1.0
      %v1372 = vadd.f32 %v1308, 1.0
      %v1373 = vadd.f32 %v1309, 1.0
      %v1374 = vadd.f32 %v1310, 1.0
      %v1375 = vadd.f32 %v1311, 1.0
      %v1376 = vadd.f32 %v1312, 1.0
      %v1377 = vadd.f32 %v1313, 1.0
      %v1378 = vadd.f32 %v1314, 1.0
      %v1379 = vadd.f32 %v1315, 1.0
      %v1380 = vadd.f32 %v1316, 1.0
      %v1381 = vadd.f32 %v1317, 1.0
      %v1382 = vadd.f32 %v1318, 1.0
      %v1383 = vadd.f32 %v1319, 1.0
      %v1384 = vadd.f32 %v1320, 1.0
      %v1385 = vadd.f32 %v1321, 1.0
      %v1386 = vadd.f32 %v1322, 1.0
      %v1387 = vadd.f32 %v1323, 1.0
      %v1388 = vadd.f32 %v1324, 1.0
      %v1389 = vadd.f32 %v1325, 1.0
      %v1390 = vadd.f32 %v1326, 1.0
      %v1391 = vadd.f32 %v1327, 1.0
      %v1392 = vadd.f32 %v1328, 1.0
      %v1393 = vadd.f32 %v1329, 1.0
      %v1394 = vadd.f32 %v1330, 1.0
      %v1395 = vadd.f32 %v1331, 1.0
      %v1396 = vadd.f32 %v1332, 1.0
      %v1397 = vadd.f32 %v1333, 1.0
      %v1398 = vadd.f32 %v1334, 1.0
      %v1399 = vadd.f32 %v1335, 1.0
      %v1400 = vadd.f32 %v1336, 1.0
      %v1401 = vadd.f32 %v1337, 1.0
      %v1402 = vadd.f32 %v1338, 1.0
      %v1403 = vadd.f32 %v1339, 1.0
      %v1404 = vadd.f32 %v1340, 1.0
      %v1405 = vadd.f32 %v1341, 1.0
      %v1406 = vadd.f32 %v1342, 1.0
      %v1407 = vadd.f32 %v1343, 1.0
      %v1408 = vadd.f32 %v1344, 1.0
      %v1409 = vadd.f32 %v1345, 1.0
      %v1410 = vadd.f32 %v1346, 1.0
      %v1411 = vadd.f32 %v1347, 1.0
      %v1412 = vadd.f32 %v1348, 1.0
      %v1413 = vadd.f32 %v1349, 1.0
      %v1414 = vadd.f32 %v1350, 1.0
      %v1415 = vadd.f32 %v1351, 1.0
      %v1416 = vadd.f32 %v1352, 1.0
      %v1417 = vadd.f32 %v1353, 1.0
      %v1418 = vadd.f32 %v1354, 1.0
      %v1419 = vadd.f32 %v1355, 1.0
      %v1420 = vadd.f32 %v1356, 1.0
      %v1421 = vadd.f32 %v1357, 1.0
      %v1422 = vadd.f32 %v1358, 1.0
      %v1423 = vadd.f32 %v1359, 1.0
      %v1424 = vadd.f32 %v1360, 1.0
      %v1425 = vadd.f32 %v1361, 1.0
      %v1426 = vadd.f32 %v1362, 1.0
      %v1427 = vmul.f32 %v1363, 0.5
      %v1428 = vmul.f32 %v1364, 0.5
      %v1429 = vmul.f32 %v1365, 0.5
      %v1430 = vmul.f32 %v1366, 0.5
      %v1431 = vmul.f32 %v1367, 0.5
      %v1432 = vmul.f32 %v1368, 0.5
      %v1433 = vmul.f32 %v1369, 0.5
      %v1434 = vmul.f32 %v1370, 0.5
      %v1435 = vmul.f32 %v1371, 0.5
      %v1436 = vmul.f32 %v1372, 0.5
      %v1437 = vmul.f32 %v1373, 0.5
      %v1438 = vmul.f32 %v1374, 0.5
      %v1439 = vmul.f32 %v1375, 0.5
      %v1440 = vmul.f32 %v1376, 0.5
      %v1441 = vmul.f32 %v1377, 0.5
      %v1442 = vmul.f32 %v1378, 0.5
      %v1443 = vmul.f32 %v1379, 0.5
      %v1444 = vmul.f32 %v1380, 0.5
      %v1445 = vmul.f32 %v1381, 0.5
      %v1446 = vmul.f32 %v1382, 0.5
      %v1447 = vmul.f32 %v1383, 0.5
      %v1448 = vmul.f32 %v1384, 0.5
      %v1449 = vmul.f32 %v1385, 0.5
      %v1450 = vmul.f32 %v1386, 0.5
      %v1451 = vmul.f32 %v1387, 0.5
      %v1452 = vmul.f32 %v1388, 0.5
      %v1453 = vmul.f32 %v1389, 0.5
      %v1454 = vmul.f32 %v1390, 0.5
      %v1455 = vmul.f32 %v1391, 0.5
      %v1456 = vmul.f32 %v1392, 0.5
      %v1457 = vmul.f32 %v1393, 0.5
      %v1458 = vmul.f32 %v1394, 0.5
      %v1459 = vmul.f32 %v1395, 0.5
      %v1460 = vmul.f32 %v1396, 0.5
      %v1461 = vmul.f32 %v1397, 0.5
      %v1462 = vmul.f32 %v1398, 0.5
      %v1463 = vmul.f32 %v1399, 0.5
      %v1464 = vmul.f32 %v1400, 0.5
      %v1465 = vmul.f32 %v1401, 0.5
      %v1466 = vmul.f32 %v1402, 0.5
      %v1467 = vmul.f32 %v1403, 0.5
      %v1468 = vmul.f32 %v1404, 0.5
      %v1469 = vmul.f32 %v1405, 0.5
      %v1470 = vmul.f32 %v1406, 0.5
      %v1471 = vmul.f32 %v1407, 0.5
      %v1472 = vmul.f32 %v1408, 0.5
      %v1473 = vmul.f32 %v1409, 0.5
      %v1474 = vmul.f32 %v1410, 0.5
      %v1475 = vmul.f32 %v1411, 0.5
      %v1476 = vmul.f32 %v1412, 0.5
      %v1477 = vmul.f32 %v1413, 0.5
      %v1478 = vmul.f32 %v1414, 0.5
      %v1479 = vmul.f32 %v1415, 0.5
      %v1480 = vmul.f32 %v1416, 0.5
      %v1481 = vmul.f32 %v1417, 0.5
      %v1482 = vmul.f32 %v1418, 0.5
      %v1483 = vmul.f32 %v1419, 0.5
      %v1484 = vmul.f32 %v1420, 0.5
      %v1485 = vmul.f32 %v1421, 0.5
      %v1486 = vmul.f32 %v1422, 0.5
      %v1487 = vmul.f32 %v1423, 0.5
      %v1488 = vmul.f32 %v1424, 0.5
      %v1489 = vmul.f32 %v1425, 0.5
      %v1490 = vmul.f32 %v1426, 0.5
      %v1495 = vrot.slane %v465, 7
      %v1496 = vrot.slane %v466, 7
      %v1497 = vrot.slane %v467, 7
      %v1498 = vrot.slane %v468, 7
      %v1503 = vrot.slane %v465, 1
      %v1504 = vrot.slane %v466, 1
      %v1505 = vrot.slane %v467, 1
      %v1506 = vrot.slane %v468, 1
      %v1511 = vrot.slane %v465, 6
      %v1512 = vrot.slane %v466, 6
      %v1513 = vrot.slane %v467, 6
      %v1514 = vrot.slane %v468, 6
      %vm1519 = vcmask 1040384
      %v1520 = vsel %vm1519, %v1495, %v1503
      %v1521 = vsel %vm1519, %v1496, %v1504
      %v1522 = vsel %vm1519, %v1497, %v1505
      %v1523 = vsel %vm1519, %v1498, %v1506
      %v1524 = vsel %vm706, %v1520, %v1503
      %v1525 = vsel %vm706, %v1521, %v1504
      %v1526 = vsel %vm706, %v1522, %v1505
      %v1527 = vsel %vm706, %v1523, %v1506
      %vm1528 = vcmask 1042432
      %v1529 = vsel %vm1528, %v1524, %v1511
      %v1530 = vsel %vm1528, %v1525, %v1512
      %v1531 = vsel %vm1528, %v1526, %v1513
      %v1532 = vsel %vm1528, %v1527, %v1514
      %v1533 = vpack.c.bf16 %v465, %v465
      %v1534 = vpack.c.bf16 %v466, %v466
      %v1535 = vpack.c.bf16 %v467, %v467
      %v1536 = vpack.c.bf16 %v468, %v468
      %v1541 = vunpack.c.l.b16 %v471
      %v1542 = vunpack.c.l.b16 %v472
      %v1543 = vunpack.c.l.b16 %v473
      %v1544 = vunpack.c.l.b16 %v474
      %v1545 = vpack.c.b16 %v1542, %v1541
      %v1546 = vpack.c.b16 %v1544, %v1543
      %vm1547 = vcmask 64512
      %v1549 = vsel %vm1547, %v1545, 0
      %v1552 = vsel %vm1547, %v1546, 0
      %vm1554 = vcmask 1043456
      %v1556 = vsel %vm1554, %v1533, 0
      %v1559 = vsel %vm1554, %v1534, 0
      %v1562 = vsel %vm1554, %v1535, 0
      %v1565 = vsel %vm1554, %v1536, 0
      %1567 = vmatprep.subr.bf16.mxu0 0
      %1568 = vmatpush1.bf16.msra.mxu0 0
      %1569 = vmatprep.subr.bf16.mxu0 0
      %1570 = vmatpush1.bf16.msra.mxu0 0
      %1571 = vmatprep.subr.bf16.mxu0 0
      %1572 = vmatpush1.bf16.msra.mxu0 0
      %1573 = vmatprep.subr.bf16.mxu0 0
      %1574 = vmatpush1.bf16.msra.mxu0 0
      %1575 = vmatprep.subr.bf16.mxu0 0
      %1576 = vmatpush1.bf16.msra.mxu0 0
      %1577 = vmatprep.subr.bf16.mxu0 0
      %1578 = vmatpush1.bf16.msra.mxu0 0
      %1579 = vmatprep.subr.bf16.mxu0 0
      %1580 = vmatpush1.bf16.msra.mxu0 0
      %1581 = vmatprep.subr.bf16.mxu0 %v1559
      %1582 = vmatpush1.bf16.msra.mxu0 %v1556
      %1583 = vmatprep.subr.bf16.mxu0 0
      %1584 = vmatpush2.bf16.msra.mxu0 0
      %1585 = vmatprep.subr.bf16.mxu0 0
      %1586 = vmatpush2.bf16.msra.mxu0 0
      %1587 = vmatprep.subr.bf16.mxu0 0
      %1588 = vmatpush2.bf16.msra.mxu0 0
      %1589 = vmatprep.subr.bf16.mxu0 0
      %1590 = vmatpush2.bf16.msra.mxu0 0
      %1591 = vmatprep.subr.bf16.mxu0 0
      %1592 = vmatpush2.bf16.msra.mxu0 0
      %1593 = vmatprep.subr.bf16.mxu0 0
      %1594 = vmatpush2.bf16.msra.mxu0 0
      %1595 = vmatprep.subr.bf16.mxu0 0
      %1596 = vmatpush2.bf16.msra.mxu0 0
      %1597 = vmatprep.subr.bf16.mxu0 0
      %1598 = vmatpush2.bf16.msra.mxu0 0
      %1599 = vmatprep.mubr.bf16.mxu0 0
      %1600 = vmatmul.mubr.bf16.gmra.mxu0 %v1549
      %v1601 = vpop.f32.mrf.mxu0
      %v1602 = vadd.f32 %v754, %v1601
      %v1603 = vpop.f32.mrf.mxu0
      %v1604 = vadd.f32 %v756, %v1603
      %v1605 = vpop.f32.mrf.mxu0
      %v1606 = vadd.f32 %v758, %v1605
      %v1607 = vpop.f32.mrf.mxu0
      %v1608 = vadd.f32 %v760, %v1607
      %1609 = vmatprep.mubr.bf16.mxu0 0
      %1610 = vmatmul.mubr.bf16.gmra.mxu0 %v1552
      %v1611 = vpop.f32.mrf.mxu0
      %v1612 = vadd.f32 %v764, %v1611
      %v1613 = vpop.f32.mrf.mxu0
      %v1614 = vadd.f32 %v766, %v1613
      %v1615 = vpop.f32.mrf.mxu0
      %v1616 = vadd.f32 %v768, %v1615
      %v1617 = vpop.f32.mrf.mxu0
      %v1618 = vadd.f32 %v770, %v1617
      %1619 = vdwg.mxu0
      %1620 = vmatprep.subr.bf16.mxu0 0
      %1621 = vmatpush1.bf16.msra.mxu0 0
      %1622 = vmatprep.subr.bf16.mxu0 0
      %1623 = vmatpush1.bf16.msra.mxu0 0
      %1624 = vmatprep.subr.bf16.mxu0 0
      %1625 = vmatpush1.bf16.msra.mxu0 0
      %1626 = vmatprep.subr.bf16.mxu0 0
      %1627 = vmatpush1.bf16.msra.mxu0 0
      %1628 = vmatprep.subr.bf16.mxu0 0
      %1629 = vmatpush1.bf16.msra.mxu0 0
      %1630 = vmatprep.subr.bf16.mxu0 0
      %1631 = vmatpush1.bf16.msra.mxu0 0
      %1632 = vmatprep.subr.bf16.mxu0 0
      %1633 = vmatpush1.bf16.msra.mxu0 0
      %1634 = vmatprep.subr.bf16.mxu0 %v1565
      %1635 = vmatpush1.bf16.msra.mxu0 %v1562
      %1636 = vmatprep.subr.bf16.mxu0 0
      %1637 = vmatpush2.bf16.msra.mxu0 0
      %1638 = vmatprep.subr.bf16.mxu0 0
      %1639 = vmatpush2.bf16.msra.mxu0 0
      %1640 = vmatprep.subr.bf16.mxu0 0
      %1641 = vmatpush2.bf16.msra.mxu0 0
      %1642 = vmatprep.subr.bf16.mxu0 0
      %1643 = vmatpush2.bf16.msra.mxu0 0
      %1644 = vmatprep.subr.bf16.mxu0 0
      %1645 = vmatpush2.bf16.msra.mxu0 0
      %1646 = vmatprep.subr.bf16.mxu0 0
      %1647 = vmatpush2.bf16.msra.mxu0 0
      %1648 = vmatprep.subr.bf16.mxu0 0
      %1649 = vmatpush2.bf16.msra.mxu0 0
      %1650 = vmatprep.subr.bf16.mxu0 0
      %1651 = vmatpush2.bf16.msra.mxu0 0
      %1652 = vmatprep.mubr.bf16.mxu0 0
      %1653 = vmatmul.mubr.bf16.gmra.mxu0 %v1549
      %v1654 = vpop.f32.mrf.mxu0
      %v1655 = vadd.f32 %v827, %v1654
      %v1656 = vpop.f32.mrf.mxu0
      %v1657 = vadd.f32 %v829, %v1656
      %v1658 = vpop.f32.mrf.mxu0
      %v1659 = vadd.f32 %v831, %v1658
      %v1660 = vpop.f32.mrf.mxu0
      %v1661 = vadd.f32 %v833, %v1660
      %1662 = vmatprep.mubr.bf16.mxu0 0
      %1663 = vmatmul.mubr.bf16.gmra.mxu0 %v1552
      %v1664 = vpop.f32.mrf.mxu0
      %v1665 = vadd.f32 %v837, %v1664
      %v1666 = vpop.f32.mrf.mxu0
      %v1667 = vadd.f32 %v839, %v1666
      %v1668 = vpop.f32.mrf.mxu0
      %v1669 = vadd.f32 %v841, %v1668
      %v1670 = vpop.f32.mrf.mxu0
      %v1671 = vadd.f32 %v843, %v1670
      %1672 = vdwg.mxu0
      %v1673 = vmax.f32 %v1602, 0.0
      %v1674 = vmax.f32 %v1604, 0.0
      %v1675 = vmax.f32 %v1655, 0.0
      %v1676 = vmax.f32 %v1657, 0.0
      %v1677 = vmax.f32 %v1606, 0.0
      %v1678 = vmax.f32 %v1608, 0.0
      %v1679 = vmax.f32 %v1659, 0.0
      %v1680 = vmax.f32 %v1661, 0.0
      %v1681 = vmax.f32 %v1612, 0.0
      %v1682 = vmax.f32 %v1614, 0.0
      %v1683 = vmax.f32 %v1665, 0.0
      %v1684 = vmax.f32 %v1667, 0.0
      %v1685 = vmax.f32 %v1616, 0.0
      %v1686 = vmax.f32 %v1618, 0.0
      %v1687 = vmax.f32 %v1669, 0.0
      %v1688 = vmax.f32 %v1671, 0.0
      %v1689 = vpack.c.bf16 %v1677, %v1673
      %v1690 = vpack.c.bf16 %v1678, %v1674
      %v1691 = vpack.c.bf16 %v1679, %v1675
      %v1692 = vpack.c.bf16 %v1680, %v1676
      %v1693 = vpack.c.bf16 %v1685, %v1681
      %v1694 = vpack.c.bf16 %v1686, %v1682
      %v1695 = vpack.c.bf16 %v1687, %v1683
      %v1696 = vpack.c.bf16 %v1688, %v1684
      %1698 = vset.pattern.permute.xlu0 0
      %1699 = vperm.xlu0 %1698, %v511
      %v1700 = vpop.permute.xlu0 %1699
      %1703 = vset.pattern.permute.xlu0 0
      %1704 = vperm.xlu0 %1703, %v512
      %v1705 = vpop.permute.xlu0 %1704
      %1708 = vset.pattern.permute.xlu0 0
      %1709 = vperm.xlu0 %1708, %v513
      %v1710 = vpop.permute.xlu0 %1709
      %1713 = vset.pattern.permute.xlu0 0
      %1714 = vperm.xlu0 %1713, %v514
      %v1715 = vpop.permute.xlu0 %1714
      %v1721 = vunpack.c.l.b16 %v495
      %v1722 = vunpack.c.l.b16 %v496
      %v1723 = vunpack.c.l.b16 %v497
      %v1724 = vunpack.c.l.b16 %v498
      %v1725 = vpack.c.b16 %v1722, %v1721
      %v1726 = vpack.c.b16 %v1724, %v1723
      %vm1727 = vcmask 261120
      %v1729 = vsel %vm1727, %v1725, 0
      %v1732 = vsel %vm1727, %v1726, 0
      %1734 = vmatprep.subr.bf16.mxu0 0
      %1735 = vmatpush1.bf16.msra.mxu0 0
      %1736 = vmatprep.subr.bf16.mxu0 0
      %1737 = vmatpush1.bf16.msra.mxu0 0
      %1738 = vmatprep.subr.bf16.mxu0 0
      %1739 = vmatpush1.bf16.msra.mxu0 0
      %1740 = vmatprep.subr.bf16.mxu0 0
      %1741 = vmatpush1.bf16.msra.mxu0 0
      %1742 = vmatprep.subr.bf16.mxu0 0
      %1743 = vmatpush1.bf16.msra.mxu0 0
      %1744 = vmatprep.subr.bf16.mxu0 0
      %1745 = vmatpush1.bf16.msra.mxu0 0
      %1746 = vmatprep.subr.bf16.mxu0 %v1694
      %1747 = vmatpush1.bf16.msra.mxu0 %v1693
      %1748 = vmatprep.subr.bf16.mxu0 %v1690
      %1749 = vmatpush1.bf16.msra.mxu0 %v1689
      %1750 = vmatprep.subr.bf16.mxu0 0
      %1751 = vmatpush2.bf16.msra.mxu0 0
      %1752 = vmatprep.subr.bf16.mxu0 0
      %1753 = vmatpush2.bf16.msra.mxu0 0
      %1754 = vmatprep.subr.bf16.mxu0 0
      %1755 = vmatpush2.bf16.msra.mxu0 0
      %1756 = vmatprep.subr.bf16.mxu0 0
      %1757 = vmatpush2.bf16.msra.mxu0 0
      %1758 = vmatprep.subr.bf16.mxu0 0
      %1759 = vmatpush2.bf16.msra.mxu0 0
      %1760 = vmatprep.subr.bf16.mxu0 0
      %1761 = vmatpush2.bf16.msra.mxu0 0
      %1762 = vmatprep.subr.bf16.mxu0 0
      %1763 = vmatpush2.bf16.msra.mxu0 0
      %1764 = vmatprep.subr.bf16.mxu0 0
      %1765 = vmatpush2.bf16.msra.mxu0 0
      %1766 = vmatprep.mubr.bf16.mxu0 0
      %1767 = vmatmul.mubr.bf16.gmra.mxu0 %v1729
      %v1768 = vpop.f32.mrf.mxu0
      %v1769 = vadd.f32 %v1700, %v1768
      %v1770 = vpop.f32.mrf.mxu0
      %v1771 = vadd.f32 %v1700, %v1770
      %v1772 = vpop.f32.mrf.mxu0
      %v1773 = vadd.f32 %v1705, %v1772
      %v1774 = vpop.f32.mrf.mxu0
      %v1775 = vadd.f32 %v1705, %v1774
      %1776 = vmatprep.mubr.bf16.mxu0 0
      %1777 = vmatmul.mubr.bf16.gmra.mxu0 %v1732
      %v1778 = vpop.f32.mrf.mxu0
      %v1779 = vadd.f32 %v1710, %v1778
      %v1780 = vpop.f32.mrf.mxu0
      %v1781 = vadd.f32 %v1710, %v1780
      %v1782 = vpop.f32.mrf.mxu0
      %v1783 = vadd.f32 %v1715, %v1782
      %v1784 = vpop.f32.mrf.mxu0
      %v1785 = vadd.f32 %v1715, %v1784
      %1786 = vdwg.mxu0
      %1787 = vmatprep.subr.bf16.mxu0 0
      %1788 = vmatpush1.bf16.msra.mxu0 0
      %1789 = vmatprep.subr.bf16.mxu0 0
      %1790 = vmatpush1.bf16.msra.mxu0 0
      %1791 = vmatprep.subr.bf16.mxu0 0
      %1792 = vmatpush1.bf16.msra.mxu0 0
      %1793 = vmatprep.subr.bf16.mxu0 0
      %1794 = vmatpush1.bf16.msra.mxu0 0
      %1795 = vmatprep.subr.bf16.mxu0 0
      %1796 = vmatpush1.bf16.msra.mxu0 0
      %1797 = vmatprep.subr.bf16.mxu0 0
      %1798 = vmatpush1.bf16.msra.mxu0 0
      %1799 = vmatprep.subr.bf16.mxu0 %v1696
      %1800 = vmatpush1.bf16.msra.mxu0 %v1695
      %1801 = vmatprep.subr.bf16.mxu0 %v1692
      %1802 = vmatpush1.bf16.msra.mxu0 %v1691
      %1803 = vmatprep.subr.bf16.mxu0 0
      %1804 = vmatpush2.bf16.msra.mxu0 0
      %1805 = vmatprep.subr.bf16.mxu0 0
      %1806 = vmatpush2.bf16.msra.mxu0 0
      %1807 = vmatprep.subr.bf16.mxu0 0
      %1808 = vmatpush2.bf16.msra.mxu0 0
      %1809 = vmatprep.subr.bf16.mxu0 0
      %1810 = vmatpush2.bf16.msra.mxu0 0
      %1811 = vmatprep.subr.bf16.mxu0 0
      %1812 = vmatpush2.bf16.msra.mxu0 0
      %1813 = vmatprep.subr.bf16.mxu0 0
      %1814 = vmatpush2.bf16.msra.mxu0 0
      %1815 = vmatprep.subr.bf16.mxu0 0
      %1816 = vmatpush2.bf16.msra.mxu0 0
      %1817 = vmatprep.subr.bf16.mxu0 0
      %1818 = vmatpush2.bf16.msra.mxu0 0
      %1819 = vmatprep.mubr.bf16.mxu0 0
      %1820 = vmatmul.mubr.bf16.gmra.mxu0 %v1729
      %v1821 = vpop.f32.mrf.mxu0
      %v1822 = vadd.f32 %v1700, %v1821
      %v1823 = vpop.f32.mrf.mxu0
      %v1824 = vadd.f32 %v1700, %v1823
      %v1825 = vpop.f32.mrf.mxu0
      %v1826 = vadd.f32 %v1705, %v1825
      %v1827 = vpop.f32.mrf.mxu0
      %v1828 = vadd.f32 %v1705, %v1827
      %1829 = vmatprep.mubr.bf16.mxu0 0
      %1830 = vmatmul.mubr.bf16.gmra.mxu0 %v1732
      %v1831 = vpop.f32.mrf.mxu0
      %v1832 = vadd.f32 %v1710, %v1831
      %v1833 = vpop.f32.mrf.mxu0
      %v1834 = vadd.f32 %v1710, %v1833
      %v1835 = vpop.f32.mrf.mxu0
      %v1836 = vadd.f32 %v1715, %v1835
      %v1837 = vpop.f32.mrf.mxu0
      %v1838 = vadd.f32 %v1715, %v1837
      %1839 = vdwg.mxu0
      %v1840 = vmax.f32 %v1769, 0.0
      %v1841 = vmax.f32 %v1771, 0.0
      %v1842 = vmax.f32 %v1822, 0.0
      %v1843 = vmax.f32 %v1824, 0.0
      %v1844 = vmax.f32 %v1773, 0.0
      %v1845 = vmax.f32 %v1775, 0.0
      %v1846 = vmax.f32 %v1826, 0.0
      %v1847 = vmax.f32 %v1828, 0.0
      %v1848 = vmax.f32 %v1779, 0.0
      %v1849 = vmax.f32 %v1781, 0.0
      %v1850 = vmax.f32 %v1832, 0.0
      %v1851 = vmax.f32 %v1834, 0.0
      %v1852 = vmax.f32 %v1783, 0.0
      %v1853 = vmax.f32 %v1785, 0.0
      %v1854 = vmax.f32 %v1836, 0.0
      %v1855 = vmax.f32 %v1838, 0.0
      %v1856 = vpack.c.bf16 %v1844, %v1840
      %v1857 = vpack.c.bf16 %v1845, %v1841
      %v1858 = vpack.c.bf16 %v1846, %v1842
      %v1859 = vpack.c.bf16 %v1847, %v1843
      %v1860 = vpack.c.bf16 %v1852, %v1848
      %v1861 = vpack.c.bf16 %v1853, %v1849
      %v1862 = vpack.c.bf16 %v1854, %v1850
      %v1863 = vpack.c.bf16 %v1855, %v1851
      %1865 = vset.pattern.permute.xlu0 0
      %1866 = vperm.xlu0 %1865, %v543
      %v1867 = vpop.permute.xlu0 %1866
      %1870 = vset.pattern.permute.xlu0 0
      %1871 = vperm.xlu0 %1870, %v544
      %v1872 = vpop.permute.xlu0 %1871
      %1875 = vset.pattern.permute.xlu0 0
      %1876 = vperm.xlu0 %1875, %v545
      %v1877 = vpop.permute.xlu0 %1876
      %1880 = vset.pattern.permute.xlu0 0
      %1881 = vperm.xlu0 %1880, %v546
      %v1882 = vpop.permute.xlu0 %1881
      %v1888 = vunpack.c.l.b16 %v527
      %v1889 = vunpack.c.l.b16 %v528
      %v1890 = vunpack.c.l.b16 %v529
      %v1891 = vunpack.c.l.b16 %v530
      %v1892 = vpack.c.b16 %v1889, %v1888
      %v1893 = vpack.c.b16 %v1891, %v1890
      %v1895 = vsel %vm1727, %v1892, 0
      %v1898 = vsel %vm1727, %v1893, 0
      %1900 = vmatprep.subr.bf16.mxu0 0
      %1901 = vmatpush1.bf16.msra.mxu0 0
      %1902 = vmatprep.subr.bf16.mxu0 0
      %1903 = vmatpush1.bf16.msra.mxu0 0
      %1904 = vmatprep.subr.bf16.mxu0 0
      %1905 = vmatpush1.bf16.msra.mxu0 0
      %1906 = vmatprep.subr.bf16.mxu0 0
      %1907 = vmatpush1.bf16.msra.mxu0 0
      %1908 = vmatprep.subr.bf16.mxu0 0
      %1909 = vmatpush1.bf16.msra.mxu0 0
      %1910 = vmatprep.subr.bf16.mxu0 0
      %1911 = vmatpush1.bf16.msra.mxu0 0
      %1912 = vmatprep.subr.bf16.mxu0 %v1861
      %1913 = vmatpush1.bf16.msra.mxu0 %v1860
      %1914 = vmatprep.subr.bf16.mxu0 %v1857
      %1915 = vmatpush1.bf16.msra.mxu0 %v1856
      %1916 = vmatprep.subr.bf16.mxu0 0
      %1917 = vmatpush2.bf16.msra.mxu0 0
      %1918 = vmatprep.subr.bf16.mxu0 0
      %1919 = vmatpush2.bf16.msra.mxu0 0
      %1920 = vmatprep.subr.bf16.mxu0 0
      %1921 = vmatpush2.bf16.msra.mxu0 0
      %1922 = vmatprep.subr.bf16.mxu0 0
      %1923 = vmatpush2.bf16.msra.mxu0 0
      %1924 = vmatprep.subr.bf16.mxu0 0
      %1925 = vmatpush2.bf16.msra.mxu0 0
      %1926 = vmatprep.subr.bf16.mxu0 0
      %1927 = vmatpush2.bf16.msra.mxu0 0
      %1928 = vmatprep.subr.bf16.mxu0 0
      %1929 = vmatpush2.bf16.msra.mxu0 0
      %1930 = vmatprep.subr.bf16.mxu0 0
      %1931 = vmatpush2.bf16.msra.mxu0 0
      %1932 = vmatprep.mubr.bf16.mxu0 0
      %1933 = vmatmul.mubr.bf16.gmra.mxu0 %v1895
      %v1934 = vpop.f32.mrf.mxu0
      %v1935 = vadd.f32 %v1867, %v1934
      %v1936 = vpop.f32.mrf.mxu0
      %v1937 = vadd.f32 %v1867, %v1936
      %v1938 = vpop.f32.mrf.mxu0
      %v1939 = vadd.f32 %v1872, %v1938
      %v1940 = vpop.f32.mrf.mxu0
      %v1941 = vadd.f32 %v1872, %v1940
      %1942 = vmatprep.mubr.bf16.mxu0 0
      %1943 = vmatmul.mubr.bf16.gmra.mxu0 %v1898
      %v1944 = vpop.f32.mrf.mxu0
      %v1945 = vadd.f32 %v1877, %v1944
      %v1946 = vpop.f32.mrf.mxu0
      %v1947 = vadd.f32 %v1877, %v1946
      %v1948 = vpop.f32.mrf.mxu0
      %v1949 = vadd.f32 %v1882, %v1948
      %v1950 = vpop.f32.mrf.mxu0
      %v1951 = vadd.f32 %v1882, %v1950
      %1952 = vdwg.mxu0
      %1953 = vmatprep.subr.bf16.mxu0 0
      %1954 = vmatpush1.bf16.msra.mxu0 0
      %1955 = vmatprep.subr.bf16.mxu0 0
      %1956 = vmatpush1.bf16.msra.mxu0 0
      %1957 = vmatprep.subr.bf16.mxu0 0
      %1958 = vmatpush1.bf16.msra.mxu0 0
      %1959 = vmatprep.subr.bf16.mxu0 0
      %1960 = vmatpush1.bf16.msra.mxu0 0
      %1961 = vmatprep.subr.bf16.mxu0 0
      %1962 = vmatpush1.bf16.msra.mxu0 0
      %1963 = vmatprep.subr.bf16.mxu0 0
      %1964 = vmatpush1.bf16.msra.mxu0 0
      %1965 = vmatprep.subr.bf16.mxu0 %v1863
      %1966 = vmatpush1.bf16.msra.mxu0 %v1862
      %1967 = vmatprep.subr.bf16.mxu0 %v1859
      %1968 = vmatpush1.bf16.msra.mxu0 %v1858
      %1969 = vmatprep.subr.bf16.mxu0 0
      %1970 = vmatpush2.bf16.msra.mxu0 0
      %1971 = vmatprep.subr.bf16.mxu0 0
      %1972 = vmatpush2.bf16.msra.mxu0 0
      %1973 = vmatprep.subr.bf16.mxu0 0
      %1974 = vmatpush2.bf16.msra.mxu0 0
      %1975 = vmatprep.subr.bf16.mxu0 0
      %1976 = vmatpush2.bf16.msra.mxu0 0
      %1977 = vmatprep.subr.bf16.mxu0 0
      %1978 = vmatpush2.bf16.msra.mxu0 0
      %1979 = vmatprep.subr.bf16.mxu0 0
      %1980 = vmatpush2.bf16.msra.mxu0 0
      %1981 = vmatprep.subr.bf16.mxu0 0
      %1982 = vmatpush2.bf16.msra.mxu0 0
      %1983 = vmatprep.subr.bf16.mxu0 0
      %1984 = vmatpush2.bf16.msra.mxu0 0
      %1985 = vmatprep.mubr.bf16.mxu0 0
      %1986 = vmatmul.mubr.bf16.gmra.mxu0 %v1895
      %v1987 = vpop.f32.mrf.mxu0
      %v1988 = vadd.f32 %v1867, %v1987
      %v1989 = vpop.f32.mrf.mxu0
      %v1990 = vadd.f32 %v1867, %v1989
      %v1991 = vpop.f32.mrf.mxu0
      %v1992 = vadd.f32 %v1872, %v1991
      %v1993 = vpop.f32.mrf.mxu0
      %v1994 = vadd.f32 %v1872, %v1993
      %1995 = vmatprep.mubr.bf16.mxu0 0
      %1996 = vmatmul.mubr.bf16.gmra.mxu0 %v1898
      %v1997 = vpop.f32.mrf.mxu0
      %v1998 = vadd.f32 %v1877, %v1997
      %v1999 = vpop.f32.mrf.mxu0
      %v2000 = vadd.f32 %v1877, %v1999
      %v2001 = vpop.f32.mrf.mxu0
      %v2002 = vadd.f32 %v1882, %v2001
      %v2003 = vpop.f32.mrf.mxu0
      %v2004 = vadd.f32 %v1882, %v2003
      %2005 = vdwg.mxu0
      %v2006 = vmul.f32 %v1935, %v1427
      %v2007 = vmul.f32 %v1937, %v1428
      %v2008 = vmul.f32 %v1988, %v1429
      %v2009 = vmul.f32 %v1990, %v1430
      %v2010 = vmul.f32 %v1939, %v1431
      %v2011 = vmul.f32 %v1941, %v1432
      %v2012 = vmul.f32 %v1992, %v1433
      %v2013 = vmul.f32 %v1994, %v1434
      %v2014 = vmul.f32 %v1945, %v1435
      %v2015 = vmul.f32 %v1947, %v1436
      %v2016 = vmul.f32 %v1998, %v1437
      %v2017 = vmul.f32 %v2000, %v1438
      %v2018 = vmul.f32 %v1949, %v1439
      %v2019 = vmul.f32 %v1951, %v1440
      %v2020 = vmul.f32 %v2002, %v1441
      %v2021 = vmul.f32 %v2004, %v1442
      %v2022 = vadd.f32 %v1602, %v2006
      %v2023 = vadd.f32 %v1604, %v2007
      %v2024 = vadd.f32 %v1655, %v2008
      %v2025 = vadd.f32 %v1657, %v2009
      %v2026 = vadd.f32 %v1606, %v2010
      %v2027 = vadd.f32 %v1608, %v2011
      %v2028 = vadd.f32 %v1659, %v2012
      %v2029 = vadd.f32 %v1661, %v2013
      %v2030 = vadd.f32 %v1612, %v2014
      %v2031 = vadd.f32 %v1614, %v2015
      %v2032 = vadd.f32 %v1665, %v2016
      %v2033 = vadd.f32 %v1667, %v2017
      %v2034 = vadd.f32 %v1616, %v2018
      %v2035 = vadd.f32 %v1618, %v2019
      %v2036 = vadd.f32 %v1669, %v2020
      %v2037 = vadd.f32 %v1671, %v2021
      %v2038 = vmax.f32 %v2022, 0.0
      %v2039 = vmax.f32 %v2023, 0.0
      %v2040 = vmax.f32 %v2024, 0.0
      %v2041 = vmax.f32 %v2025, 0.0
      %v2042 = vmax.f32 %v2026, 0.0
      %v2043 = vmax.f32 %v2027, 0.0
      %v2044 = vmax.f32 %v2028, 0.0
      %v2045 = vmax.f32 %v2029, 0.0
      %v2046 = vmax.f32 %v2030, 0.0
      %v2047 = vmax.f32 %v2031, 0.0
      %v2048 = vmax.f32 %v2032, 0.0
      %v2049 = vmax.f32 %v2033, 0.0
      %v2050 = vmax.f32 %v2034, 0.0
      %v2051 = vmax.f32 %v2035, 0.0
      %v2052 = vmax.f32 %v2036, 0.0
      %v2053 = vmax.f32 %v2037, 0.0
      %v2054 = vpack.c.bf16 %v2042, %v2038
      %v2055 = vpack.c.bf16 %v2043, %v2039
      %v2056 = vpack.c.bf16 %v2044, %v2040
      %v2057 = vpack.c.bf16 %v2045, %v2041
      %v2058 = vpack.c.bf16 %v2050, %v2046
      %v2059 = vpack.c.bf16 %v2051, %v2047
      %v2060 = vpack.c.bf16 %v2052, %v2048
      %v2061 = vpack.c.bf16 %v2053, %v2049
      %2063 = vset.pattern.permute.xlu0 0
      %2064 = vperm.xlu0 %2063, %v515
      %v2065 = vpop.permute.xlu0 %2064
      %2068 = vset.pattern.permute.xlu0 0
      %2069 = vperm.xlu0 %2068, %v516
      %v2070 = vpop.permute.xlu0 %2069
      %2073 = vset.pattern.permute.xlu0 0
      %2074 = vperm.xlu0 %2073, %v517
      %v2075 = vpop.permute.xlu0 %2074
      %2078 = vset.pattern.permute.xlu0 0
      %2079 = vperm.xlu0 %2078, %v518
      %v2080 = vpop.permute.xlu0 %2079
      %v2086 = vunpack.c.l.b16 %v499
      %v2087 = vunpack.c.l.b16 %v500
      %v2088 = vunpack.c.l.b16 %v501
      %v2089 = vunpack.c.l.b16 %v502
      %v2090 = vpack.c.b16 %v2087, %v2086
      %v2091 = vpack.c.b16 %v2089, %v2088
      %v2093 = vsel %vm1727, %v2090, 0
      %v2096 = vsel %vm1727, %v2091, 0
      %2098 = vmatprep.subr.bf16.mxu0 0
      %2099 = vmatpush1.bf16.msra.mxu0 0
      %2100 = vmatprep.subr.bf16.mxu0 0
      %2101 = vmatpush1.bf16.msra.mxu0 0
      %2102 = vmatprep.subr.bf16.mxu0 0
      %2103 = vmatpush1.bf16.msra.mxu0 0
      %2104 = vmatprep.subr.bf16.mxu0 0
      %2105 = vmatpush1.bf16.msra.mxu0 0
      %2106 = vmatprep.subr.bf16.mxu0 0
      %2107 = vmatpush1.bf16.msra.mxu0 0
      %2108 = vmatprep.subr.bf16.mxu0 0
      %2109 = vmatpush1.bf16.msra.mxu0 0
      %2110 = vmatprep.subr.bf16.mxu0 %v2059
      %2111 = vmatpush1.bf16.msra.mxu0 %v2058
      %2112 = vmatprep.subr.bf16.mxu0 %v2055
      %2113 = vmatpush1.bf16.msra.mxu0 %v2054
      %2114 = vmatprep.subr.bf16.mxu0 0
      %2115 = vmatpush2.bf16.msra.mxu0 0
      %2116 = vmatprep.subr.bf16.mxu0 0
      %2117 = vmatpush2.bf16.msra.mxu0 0
      %2118 = vmatprep.subr.bf16.mxu0 0
      %2119 = vmatpush2.bf16.msra.mxu0 0
      %2120 = vmatprep.subr.bf16.mxu0 0
      %2121 = vmatpush2.bf16.msra.mxu0 0
      %2122 = vmatprep.subr.bf16.mxu0 0
      %2123 = vmatpush2.bf16.msra.mxu0 0
      %2124 = vmatprep.subr.bf16.mxu0 0
      %2125 = vmatpush2.bf16.msra.mxu0 0
      %2126 = vmatprep.subr.bf16.mxu0 0
      %2127 = vmatpush2.bf16.msra.mxu0 0
      %2128 = vmatprep.subr.bf16.mxu0 0
      %2129 = vmatpush2.bf16.msra.mxu0 0
      %2130 = vmatprep.mubr.bf16.mxu0 0
      %2131 = vmatmul.mubr.bf16.gmra.mxu0 %v2093
      %v2132 = vpop.f32.mrf.mxu0
      %v2133 = vadd.f32 %v2065, %v2132
      %v2134 = vpop.f32.mrf.mxu0
      %v2135 = vadd.f32 %v2065, %v2134
      %v2136 = vpop.f32.mrf.mxu0
      %v2137 = vadd.f32 %v2070, %v2136
      %v2138 = vpop.f32.mrf.mxu0
      %v2139 = vadd.f32 %v2070, %v2138
      %2140 = vmatprep.mubr.bf16.mxu0 0
      %2141 = vmatmul.mubr.bf16.gmra.mxu0 %v2096
      %v2142 = vpop.f32.mrf.mxu0
      %v2143 = vadd.f32 %v2075, %v2142
      %v2144 = vpop.f32.mrf.mxu0
      %v2145 = vadd.f32 %v2075, %v2144
      %v2146 = vpop.f32.mrf.mxu0
      %v2147 = vadd.f32 %v2080, %v2146
      %v2148 = vpop.f32.mrf.mxu0
      %v2149 = vadd.f32 %v2080, %v2148
      %2150 = vdwg.mxu0
      %2151 = vmatprep.subr.bf16.mxu0 0
      %2152 = vmatpush1.bf16.msra.mxu0 0
      %2153 = vmatprep.subr.bf16.mxu0 0
      %2154 = vmatpush1.bf16.msra.mxu0 0
      %2155 = vmatprep.subr.bf16.mxu0 0
      %2156 = vmatpush1.bf16.msra.mxu0 0
      %2157 = vmatprep.subr.bf16.mxu0 0
      %2158 = vmatpush1.bf16.msra.mxu0 0
      %2159 = vmatprep.subr.bf16.mxu0 0
      %2160 = vmatpush1.bf16.msra.mxu0 0
      %2161 = vmatprep.subr.bf16.mxu0 0
      %2162 = vmatpush1.bf16.msra.mxu0 0
      %2163 = vmatprep.subr.bf16.mxu0 %v2061
      %2164 = vmatpush1.bf16.msra.mxu0 %v2060
      %2165 = vmatprep.subr.bf16.mxu0 %v2057
      %2166 = vmatpush1.bf16.msra.mxu0 %v2056
      %2167 = vmatprep.subr.bf16.mxu0 0
      %2168 = vmatpush2.bf16.msra.mxu0 0
      %2169 = vmatprep.subr.bf16.mxu0 0
      %2170 = vmatpush2.bf16.msra.mxu0 0
      %2171 = vmatprep.subr.bf16.mxu0 0
      %2172 = vmatpush2.bf16.msra.mxu0 0
      %2173 = vmatprep.subr.bf16.mxu0 0
      %2174 = vmatpush2.bf16.msra.mxu0 0
      %2175 = vmatprep.subr.bf16.mxu0 0
      %2176 = vmatpush2.bf16.msra.mxu0 0
      %2177 = vmatprep.subr.bf16.mxu0 0
      %2178 = vmatpush2.bf16.msra.mxu0 0
      %2179 = vmatprep.subr.bf16.mxu0 0
      %2180 = vmatpush2.bf16.msra.mxu0 0
      %2181 = vmatprep.subr.bf16.mxu0 0
      %2182 = vmatpush2.bf16.msra.mxu0 0
      %2183 = vmatprep.mubr.bf16.mxu0 0
      %2184 = vmatmul.mubr.bf16.gmra.mxu0 %v2093
      %v2185 = vpop.f32.mrf.mxu0
      %v2186 = vadd.f32 %v2065, %v2185
      %v2187 = vpop.f32.mrf.mxu0
      %v2188 = vadd.f32 %v2065, %v2187
      %v2189 = vpop.f32.mrf.mxu0
      %v2190 = vadd.f32 %v2070, %v2189
      %v2191 = vpop.f32.mrf.mxu0
      %v2192 = vadd.f32 %v2070, %v2191
      %2193 = vmatprep.mubr.bf16.mxu0 0
      %2194 = vmatmul.mubr.bf16.gmra.mxu0 %v2096
      %v2195 = vpop.f32.mrf.mxu0
      %v2196 = vadd.f32 %v2075, %v2195
      %v2197 = vpop.f32.mrf.mxu0
      %v2198 = vadd.f32 %v2075, %v2197
      %v2199 = vpop.f32.mrf.mxu0
      %v2200 = vadd.f32 %v2080, %v2199
      %v2201 = vpop.f32.mrf.mxu0
      %v2202 = vadd.f32 %v2080, %v2201
      %2203 = vdwg.mxu0
      %v2204 = vmax.f32 %v2133, 0.0
      %v2205 = vmax.f32 %v2135, 0.0
      %v2206 = vmax.f32 %v2186, 0.0
      %v2207 = vmax.f32 %v2188, 0.0
      %v2208 = vmax.f32 %v2137, 0.0
      %v2209 = vmax.f32 %v2139, 0.0
      %v2210 = vmax.f32 %v2190, 0.0
      %v2211 = vmax.f32 %v2192, 0.0
      %v2212 = vmax.f32 %v2143, 0.0
      %v2213 = vmax.f32 %v2145, 0.0
      %v2214 = vmax.f32 %v2196, 0.0
      %v2215 = vmax.f32 %v2198, 0.0
      %v2216 = vmax.f32 %v2147, 0.0
      %v2217 = vmax.f32 %v2149, 0.0
      %v2218 = vmax.f32 %v2200, 0.0
      %v2219 = vmax.f32 %v2202, 0.0
      %v2220 = vpack.c.bf16 %v2208, %v2204
      %v2221 = vpack.c.bf16 %v2209, %v2205
      %v2222 = vpack.c.bf16 %v2210, %v2206
      %v2223 = vpack.c.bf16 %v2211, %v2207
      %v2224 = vpack.c.bf16 %v2216, %v2212
      %v2225 = vpack.c.bf16 %v2217, %v2213
      %v2226 = vpack.c.bf16 %v2218, %v2214
      %v2227 = vpack.c.bf16 %v2219, %v2215
      %2229 = vset.pattern.permute.xlu0 0
      %2230 = vperm.xlu0 %2229, %v547
      %v2231 = vpop.permute.xlu0 %2230
      %2234 = vset.pattern.permute.xlu0 0
      %2235 = vperm.xlu0 %2234, %v548
      %v2236 = vpop.permute.xlu0 %2235
      %2239 = vset.pattern.permute.xlu0 0
      %2240 = vperm.xlu0 %2239, %v549
      %v2241 = vpop.permute.xlu0 %2240
      %2244 = vset.pattern.permute.xlu0 0
      %2245 = vperm.xlu0 %2244, %v550
      %v2246 = vpop.permute.xlu0 %2245
      %v2252 = vunpack.c.l.b16 %v531
      %v2253 = vunpack.c.l.b16 %v532
      %v2254 = vunpack.c.l.b16 %v533
      %v2255 = vunpack.c.l.b16 %v534
      %v2256 = vpack.c.b16 %v2253, %v2252
      %v2257 = vpack.c.b16 %v2255, %v2254
      %v2259 = vsel %vm1727, %v2256, 0
      %v2262 = vsel %vm1727, %v2257, 0
      %2264 = vmatprep.subr.bf16.mxu0 0
      %2265 = vmatpush1.bf16.msra.mxu0 0
      %2266 = vmatprep.subr.bf16.mxu0 0
      %2267 = vmatpush1.bf16.msra.mxu0 0
      %2268 = vmatprep.subr.bf16.mxu0 0
      %2269 = vmatpush1.bf16.msra.mxu0 0
      %2270 = vmatprep.subr.bf16.mxu0 0
      %2271 = vmatpush1.bf16.msra.mxu0 0
      %2272 = vmatprep.subr.bf16.mxu0 0
      %2273 = vmatpush1.bf16.msra.mxu0 0
      %2274 = vmatprep.subr.bf16.mxu0 0
      %2275 = vmatpush1.bf16.msra.mxu0 0
      %2276 = vmatprep.subr.bf16.mxu0 %v2225
      %2277 = vmatpush1.bf16.msra.mxu0 %v2224
      %2278 = vmatprep.subr.bf16.mxu0 %v2221
      %2279 = vmatpush1.bf16.msra.mxu0 %v2220
      %2280 = vmatprep.subr.bf16.mxu0 0
      %2281 = vmatpush2.bf16.msra.mxu0 0
      %2282 = vmatprep.subr.bf16.mxu0 0
      %2283 = vmatpush2.bf16.msra.mxu0 0
      %2284 = vmatprep.subr.bf16.mxu0 0
      %2285 = vmatpush2.bf16.msra.mxu0 0
      %2286 = vmatprep.subr.bf16.mxu0 0
      %2287 = vmatpush2.bf16.msra.mxu0 0
      %2288 = vmatprep.subr.bf16.mxu0 0
      %2289 = vmatpush2.bf16.msra.mxu0 0
      %2290 = vmatprep.subr.bf16.mxu0 0
      %2291 = vmatpush2.bf16.msra.mxu0 0
      %2292 = vmatprep.subr.bf16.mxu0 0
      %2293 = vmatpush2.bf16.msra.mxu0 0
      %2294 = vmatprep.subr.bf16.mxu0 0
      %2295 = vmatpush2.bf16.msra.mxu0 0
      %2296 = vmatprep.mubr.bf16.mxu0 0
      %2297 = vmatmul.mubr.bf16.gmra.mxu0 %v2259
      %v2298 = vpop.f32.mrf.mxu0
      %v2299 = vadd.f32 %v2231, %v2298
      %v2300 = vpop.f32.mrf.mxu0
      %v2301 = vadd.f32 %v2231, %v2300
      %v2302 = vpop.f32.mrf.mxu0
      %v2303 = vadd.f32 %v2236, %v2302
      %v2304 = vpop.f32.mrf.mxu0
      %v2305 = vadd.f32 %v2236, %v2304
      %2306 = vmatprep.mubr.bf16.mxu0 0
      %2307 = vmatmul.mubr.bf16.gmra.mxu0 %v2262
      %v2308 = vpop.f32.mrf.mxu0
      %v2309 = vadd.f32 %v2241, %v2308
      %v2310 = vpop.f32.mrf.mxu0
      %v2311 = vadd.f32 %v2241, %v2310
      %v2312 = vpop.f32.mrf.mxu0
      %v2313 = vadd.f32 %v2246, %v2312
      %v2314 = vpop.f32.mrf.mxu0
      %v2315 = vadd.f32 %v2246, %v2314
      %2316 = vdwg.mxu0
      %2317 = vmatprep.subr.bf16.mxu0 0
      %2318 = vmatpush1.bf16.msra.mxu0 0
      %2319 = vmatprep.subr.bf16.mxu0 0
      %2320 = vmatpush1.bf16.msra.mxu0 0
      %2321 = vmatprep.subr.bf16.mxu0 0
      %2322 = vmatpush1.bf16.msra.mxu0 0
      %2323 = vmatprep.subr.bf16.mxu0 0
      %2324 = vmatpush1.bf16.msra.mxu0 0
      %2325 = vmatprep.subr.bf16.mxu0 0
      %2326 = vmatpush1.bf16.msra.mxu0 0
      %2327 = vmatprep.subr.bf16.mxu0 0
      %2328 = vmatpush1.bf16.msra.mxu0 0
      %2329 = vmatprep.subr.bf16.mxu0 %v2227
      %2330 = vmatpush1.bf16.msra.mxu0 %v2226
      %2331 = vmatprep.subr.bf16.mxu0 %v2223
      %2332 = vmatpush1.bf16.msra.mxu0 %v2222
      %2333 = vmatprep.subr.bf16.mxu0 0
      %2334 = vmatpush2.bf16.msra.mxu0 0
      %2335 = vmatprep.subr.bf16.mxu0 0
      %2336 = vmatpush2.bf16.msra.mxu0 0
      %2337 = vmatprep.subr.bf16.mxu0 0
      %2338 = vmatpush2.bf16.msra.mxu0 0
      %2339 = vmatprep.subr.bf16.mxu0 0
      %2340 = vmatpush2.bf16.msra.mxu0 0
      %2341 = vmatprep.subr.bf16.mxu0 0
      %2342 = vmatpush2.bf16.msra.mxu0 0
      %2343 = vmatprep.subr.bf16.mxu0 0
      %2344 = vmatpush2.bf16.msra.mxu0 0
      %2345 = vmatprep.subr.bf16.mxu0 0
      %2346 = vmatpush2.bf16.msra.mxu0 0
      %2347 = vmatprep.subr.bf16.mxu0 0
      %2348 = vmatpush2.bf16.msra.mxu0 0
      %2349 = vmatprep.mubr.bf16.mxu0 0
      %2350 = vmatmul.mubr.bf16.gmra.mxu0 %v2259
      %v2351 = vpop.f32.mrf.mxu0
      %v2352 = vadd.f32 %v2231, %v2351
      %v2353 = vpop.f32.mrf.mxu0
      %v2354 = vadd.f32 %v2231, %v2353
      %v2355 = vpop.f32.mrf.mxu0
      %v2356 = vadd.f32 %v2236, %v2355
      %v2357 = vpop.f32.mrf.mxu0
      %v2358 = vadd.f32 %v2236, %v2357
      %2359 = vmatprep.mubr.bf16.mxu0 0
      %2360 = vmatmul.mubr.bf16.gmra.mxu0 %v2262
      %v2361 = vpop.f32.mrf.mxu0
      %v2362 = vadd.f32 %v2241, %v2361
      %v2363 = vpop.f32.mrf.mxu0
      %v2364 = vadd.f32 %v2241, %v2363
      %v2365 = vpop.f32.mrf.mxu0
      %v2366 = vadd.f32 %v2246, %v2365
      %v2367 = vpop.f32.mrf.mxu0
      %v2368 = vadd.f32 %v2246, %v2367
      %2369 = vdwg.mxu0
      %v2370 = vmul.f32 %v2299, %v1443
      %v2371 = vmul.f32 %v2301, %v1444
      %v2372 = vmul.f32 %v2352, %v1445
      %v2373 = vmul.f32 %v2354, %v1446
      %v2374 = vmul.f32 %v2303, %v1447
      %v2375 = vmul.f32 %v2305, %v1448
      %v2376 = vmul.f32 %v2356, %v1449
      %v2377 = vmul.f32 %v2358, %v1450
      %v2378 = vmul.f32 %v2309, %v1451
      %v2379 = vmul.f32 %v2311, %v1452
      %v2380 = vmul.f32 %v2362, %v1453
      %v2381 = vmul.f32 %v2364, %v1454
      %v2382 = vmul.f32 %v2313, %v1455
      %v2383 = vmul.f32 %v2315, %v1456
      %v2384 = vmul.f32 %v2366, %v1457
      %v2385 = vmul.f32 %v2368, %v1458
      %v2386 = vadd.f32 %v2022, %v2370
      %v2387 = vadd.f32 %v2023, %v2371
      %v2388 = vadd.f32 %v2024, %v2372
      %v2389 = vadd.f32 %v2025, %v2373
      %v2390 = vadd.f32 %v2026, %v2374
      %v2391 = vadd.f32 %v2027, %v2375
      %v2392 = vadd.f32 %v2028, %v2376
      %v2393 = vadd.f32 %v2029, %v2377
      %v2394 = vadd.f32 %v2030, %v2378
      %v2395 = vadd.f32 %v2031, %v2379
      %v2396 = vadd.f32 %v2032, %v2380
      %v2397 = vadd.f32 %v2033, %v2381
      %v2398 = vadd.f32 %v2034, %v2382
      %v2399 = vadd.f32 %v2035, %v2383
      %v2400 = vadd.f32 %v2036, %v2384
      %v2401 = vadd.f32 %v2037, %v2385
      %v2402 = vpack.c.bf16 %v2390, %v2386
      %v2403 = vpack.c.bf16 %v2391, %v2387
      %v2404 = vpack.c.bf16 %v2392, %v2388
      %v2405 = vpack.c.bf16 %v2393, %v2389
      %v2406 = vpack.c.bf16 %v2398, %v2394
      %v2407 = vpack.c.bf16 %v2399, %v2395
      %v2408 = vpack.c.bf16 %v2400, %v2396
      %v2409 = vpack.c.bf16 %v2401, %v2397
      %2411 = vset.pattern.permute.xlu0 0
      %2412 = vperm.xlu0 %2411, %v607
      %v2413 = vpop.permute.xlu0 %2412
      %2416 = vset.pattern.permute.xlu0 0
      %2417 = vperm.xlu0 %2416, %v608
      %v2418 = vpop.permute.xlu0 %2417
      %2421 = vset.pattern.permute.xlu0 0
      %2422 = vperm.xlu0 %2421, %v609
      %v2423 = vpop.permute.xlu0 %2422
      %2426 = vset.pattern.permute.xlu0 0
      %2427 = vperm.xlu0 %2426, %v610
      %v2428 = vpop.permute.xlu0 %2427
      %2431 = vset.pattern.permute.xlu0 0
      %2432 = vperm.xlu0 %2431, %v611
      %v2433 = vpop.permute.xlu0 %2432
      %2436 = vset.pattern.permute.xlu0 0
      %2437 = vperm.xlu0 %2436, %v612
      %v2438 = vpop.permute.xlu0 %2437
      %2441 = vset.pattern.permute.xlu0 0
      %2442 = vperm.xlu0 %2441, %v613
      %v2443 = vpop.permute.xlu0 %2442
      %2446 = vset.pattern.permute.xlu0 0
      %2447 = vperm.xlu0 %2446, %v614
      %v2448 = vpop.permute.xlu0 %2447
      %v2457 = vunpack.c.l.b16 %v591
      %v2458 = vunpack.c.l.b16 %v592
      %v2459 = vunpack.c.l.b16 %v593
      %v2460 = vunpack.c.l.b16 %v594
      %v2461 = vunpack.c.l.b16 %v595
      %v2462 = vunpack.c.l.b16 %v596
      %v2463 = vunpack.c.l.b16 %v597
      %v2464 = vunpack.c.l.b16 %v598
      %v2465 = vpack.c.b16 %v2458, %v2457
      %v2466 = vpack.c.b16 %v2460, %v2459
      %v2467 = vpack.c.b16 %v2462, %v2461
      %v2468 = vpack.c.b16 %v2464, %v2463
      %v2470 = vsel %vm1727, %v2465, 0
      %v2473 = vsel %vm1727, %v2466, 0
      %v2476 = vsel %vm1727, %v2467, 0
      %v2479 = vsel %vm1727, %v2468, 0
      %2481 = vmatprep.subr.bf16.mxu0 0
      %2482 = vmatpush1.bf16.msra.mxu0 0
      %2483 = vmatprep.subr.bf16.mxu0 0
      %2484 = vmatpush1.bf16.msra.mxu0 0
      %2485 = vmatprep.subr.bf16.mxu0 0
      %2486 = vmatpush1.bf16.msra.mxu0 0
      %2487 = vmatprep.subr.bf16.mxu0 0
      %2488 = vmatpush1.bf16.msra.mxu0 0
      %2489 = vmatprep.subr.bf16.mxu0 0
      %2490 = vmatpush1.bf16.msra.mxu0 0
      %2491 = vmatprep.subr.bf16.mxu0 0
      %2492 = vmatpush1.bf16.msra.mxu0 0
      %2493 = vmatprep.subr.bf16.mxu0 %v2407
      %2494 = vmatpush1.bf16.msra.mxu0 %v2406
      %2495 = vmatprep.subr.bf16.mxu0 %v2403
      %2496 = vmatpush1.bf16.msra.mxu0 %v2402
      %2497 = vmatprep.subr.bf16.mxu0 0
      %2498 = vmatpush2.bf16.msra.mxu0 0
      %2499 = vmatprep.subr.bf16.mxu0 0
      %2500 = vmatpush2.bf16.msra.mxu0 0
      %2501 = vmatprep.subr.bf16.mxu0 0
      %2502 = vmatpush2.bf16.msra.mxu0 0
      %2503 = vmatprep.subr.bf16.mxu0 0
      %2504 = vmatpush2.bf16.msra.mxu0 0
      %2505 = vmatprep.subr.bf16.mxu0 0
      %2506 = vmatpush2.bf16.msra.mxu0 0
      %2507 = vmatprep.subr.bf16.mxu0 0
      %2508 = vmatpush2.bf16.msra.mxu0 0
      %2509 = vmatprep.subr.bf16.mxu0 0
      %2510 = vmatpush2.bf16.msra.mxu0 0
      %2511 = vmatprep.subr.bf16.mxu0 0
      %2512 = vmatpush2.bf16.msra.mxu0 0
      %2513 = vmatprep.mubr.bf16.mxu0 0
      %2514 = vmatmul.mubr.bf16.gmra.mxu0 %v2470
      %v2515 = vpop.f32.mrf.mxu0
      %v2516 = vadd.f32 %v2413, %v2515
      %v2517 = vpop.f32.mrf.mxu0
      %v2518 = vadd.f32 %v2413, %v2517
      %v2519 = vpop.f32.mrf.mxu0
      %v2520 = vadd.f32 %v2418, %v2519
      %v2521 = vpop.f32.mrf.mxu0
      %v2522 = vadd.f32 %v2418, %v2521
      %2523 = vmatprep.mubr.bf16.mxu0 0
      %2524 = vmatmul.mubr.bf16.gmra.mxu0 %v2473
      %v2525 = vpop.f32.mrf.mxu0
      %v2526 = vadd.f32 %v2423, %v2525
      %v2527 = vpop.f32.mrf.mxu0
      %v2528 = vadd.f32 %v2423, %v2527
      %v2529 = vpop.f32.mrf.mxu0
      %v2530 = vadd.f32 %v2428, %v2529
      %v2531 = vpop.f32.mrf.mxu0
      %v2532 = vadd.f32 %v2428, %v2531
      %2533 = vmatprep.mubr.bf16.mxu0 0
      %2534 = vmatmul.mubr.bf16.gmra.mxu0 %v2476
      %v2535 = vpop.f32.mrf.mxu0
      %v2536 = vadd.f32 %v2433, %v2535
      %v2537 = vpop.f32.mrf.mxu0
      %v2538 = vadd.f32 %v2433, %v2537
      %v2539 = vpop.f32.mrf.mxu0
      %v2540 = vadd.f32 %v2438, %v2539
      %v2541 = vpop.f32.mrf.mxu0
      %v2542 = vadd.f32 %v2438, %v2541
      %2543 = vmatprep.mubr.bf16.mxu0 0
      %2544 = vmatmul.mubr.bf16.gmra.mxu0 %v2479
      %v2545 = vpop.f32.mrf.mxu0
      %v2546 = vadd.f32 %v2443, %v2545
      %v2547 = vpop.f32.mrf.mxu0
      %v2548 = vadd.f32 %v2443, %v2547
      %v2549 = vpop.f32.mrf.mxu0
      %v2550 = vpop.f32.mrf.mxu0
      %2551 = vdwg.mxu0
      %2552 = vmatprep.subr.bf16.mxu0 0
      %2553 = vmatpush1.bf16.msra.mxu0 0
      %2554 = vmatprep.subr.bf16.mxu0 0
      %2555 = vmatpush1.bf16.msra.mxu0 0
      %2556 = vmatprep.subr.bf16.mxu0 0
      %2557 = vmatpush1.bf16.msra.mxu0 0
      %2558 = vmatprep.subr.bf16.mxu0 0
      %2559 = vmatpush1.bf16.msra.mxu0 0
      %2560 = vmatprep.subr.bf16.mxu0 0
      %2561 = vmatpush1.bf16.msra.mxu0 0
      %2562 = vmatprep.subr.bf16.mxu0 0
      %2563 = vmatpush1.bf16.msra.mxu0 0
      %2564 = vmatprep.subr.bf16.mxu0 %v2409
      %2565 = vmatpush1.bf16.msra.mxu0 %v2408
      %2566 = vmatprep.subr.bf16.mxu0 %v2405
      %2567 = vmatpush1.bf16.msra.mxu0 %v2404
      %2568 = vmatprep.subr.bf16.mxu0 0
      %2569 = vmatpush2.bf16.msra.mxu0 0
      %2570 = vmatprep.subr.bf16.mxu0 0
      %2571 = vmatpush2.bf16.msra.mxu0 0
      %2572 = vmatprep.subr.bf16.mxu0 0
      %2573 = vmatpush2.bf16.msra.mxu0 0
      %2574 = vmatprep.subr.bf16.mxu0 0
      %2575 = vmatpush2.bf16.msra.mxu0 0
      %2576 = vmatprep.subr.bf16.mxu0 0
      %2577 = vmatpush2.bf16.msra.mxu0 0
      %2578 = vmatprep.subr.bf16.mxu0 0
      %2579 = vmatpush2.bf16.msra.mxu0 0
      %2580 = vmatprep.subr.bf16.mxu0 0
      %2581 = vmatpush2.bf16.msra.mxu0 0
      %2582 = vmatprep.subr.bf16.mxu0 0
      %2583 = vmatpush2.bf16.msra.mxu0 0
      %2584 = vmatprep.mubr.bf16.mxu0 0
      %2585 = vmatmul.mubr.bf16.gmra.mxu0 %v2470
      %v2586 = vpop.f32.mrf.mxu0
      %v2587 = vadd.f32 %v2413, %v2586
      %v2588 = vpop.f32.mrf.mxu0
      %v2589 = vadd.f32 %v2413, %v2588
      %v2590 = vpop.f32.mrf.mxu0
      %v2591 = vadd.f32 %v2418, %v2590
      %v2592 = vpop.f32.mrf.mxu0
      %v2593 = vadd.f32 %v2418, %v2592
      %2594 = vmatprep.mubr.bf16.mxu0 0
      %2595 = vmatmul.mubr.bf16.gmra.mxu0 %v2473
      %v2596 = vpop.f32.mrf.mxu0
      %v2597 = vadd.f32 %v2423, %v2596
      %v2598 = vpop.f32.mrf.mxu0
      %v2599 = vadd.f32 %v2423, %v2598
      %v2600 = vpop.f32.mrf.mxu0
      %v2601 = vadd.f32 %v2428, %v2600
      %v2602 = vpop.f32.mrf.mxu0
      %v2603 = vadd.f32 %v2428, %v2602
      %2604 = vmatprep.mubr.bf16.mxu0 0
      %2605 = vmatmul.mubr.bf16.gmra.mxu0 %v2476
      %v2606 = vpop.f32.mrf.mxu0
      %v2607 = vadd.f32 %v2433, %v2606
      %v2608 = vpop.f32.mrf.mxu0
      %v2609 = vadd.f32 %v2433, %v2608
      %v2610 = vpop.f32.mrf.mxu0
      %v2611 = vadd.f32 %v2438, %v2610
      %v2612 = vpop.f32.mrf.mxu0
      %v2613 = vadd.f32 %v2438, %v2612
      %2614 = vmatprep.mubr.bf16.mxu0 0
      %2615 = vmatmul.mubr.bf16.gmra.mxu0 %v2479
      %v2616 = vpop.f32.mrf.mxu0
      %v2617 = vadd.f32 %v2443, %v2616
      %v2618 = vpop.f32.mrf.mxu0
      %v2619 = vadd.f32 %v2443, %v2618
      %v2620 = vpop.f32.mrf.mxu0
      %v2621 = vpop.f32.mrf.mxu0
      %2622 = vdwg.mxu0
      %vm2623 = vcmp.ge.f32.partialorder %v1529, -3.0
      %vm2624 = vcmp.ge.f32.partialorder %v1530, -3.0
      %vm2625 = vcmp.ge.f32.partialorder %v1531, -3.0
      %vm2626 = vcmp.ge.f32.partialorder %v1532, -3.0
      %vm2627 = vcmp.le.f32.partialorder %v1529, 3.0
      %vm2628 = vcmp.le.f32.partialorder %v1530, 3.0
      %vm2629 = vcmp.le.f32.partialorder %v1531, 3.0
      %vm2630 = vcmp.le.f32.partialorder %v1532, 3.0
      %vm2631 = vmand %vm2623, %vm2627
      %vm2632 = vmand %vm2624, %vm2628
      %vm2633 = vmand %vm2625, %vm2629
      %vm2634 = vmand %vm2626, %vm2630
      %v2635 = vmax.f32 %v1529, -3.0
      %v2636 = vmax.f32 %v1530, -3.0
      %v2637 = vmax.f32 %v1531, -3.0
      %v2638 = vmax.f32 %v1532, -3.0
      %v2639 = vmin.f32 %v2635, 3.0
      %v2640 = vmin.f32 %v2636, 3.0
      %v2641 = vmin.f32 %v2637, 3.0
      %v2642 = vmin.f32 %v2638, 3.0
      %v2643 = vmax.f32 %v2516, %v2520
      %v2644 = vmax.f32 %v2518, %v2522
      %v2645 = vmax.f32 %v2587, %v2591
      %v2646 = vmax.f32 %v2589, %v2593
      %v2647 = vmax.f32 %v2643, %v2526
      %v2648 = vmax.f32 %v2644, %v2528
      %v2649 = vmax.f32 %v2645, %v2597
      %v2650 = vmax.f32 %v2646, %v2599
      %v2651 = vmax.f32 %v2647, %v2530
      %v2652 = vmax.f32 %v2648, %v2532
      %v2653 = vmax.f32 %v2649, %v2601
      %v2654 = vmax.f32 %v2650, %v2603
      %v2655 = vsub.f32 %v2516, %v2651
      %v2656 = vsub.f32 %v2518, %v2652
      %v2657 = vsub.f32 %v2587, %v2653
      %v2658 = vsub.f32 %v2589, %v2654
      %v2659 = vmul.f32 %v2655, 1.442695
      %v2660 = vpow.pop %v2659
      %v2661 = vmul.f32 %v2656, 1.442695
      %v2662 = vpow.pop %v2661
      %v2663 = vmul.f32 %v2657, 1.442695
      %v2664 = vpow.pop %v2663
      %v2665 = vmul.f32 %v2658, 1.442695
      %v2666 = vpow.pop %v2665
      %v2667 = vsub.f32 %v2520, %v2651
      %v2668 = vsub.f32 %v2522, %v2652
      %v2669 = vsub.f32 %v2591, %v2653
      %v2670 = vsub.f32 %v2593, %v2654
      %v2671 = vmul.f32 %v2667, 1.442695
      %v2672 = vpow.pop %v2671
      %v2673 = vmul.f32 %v2668, 1.442695
      %v2674 = vpow.pop %v2673
      %v2675 = vmul.f32 %v2669, 1.442695
      %v2676 = vpow.pop %v2675
      %v2677 = vmul.f32 %v2670, 1.442695
      %v2678 = vpow.pop %v2677
      %v2679 = vsub.f32 %v2526, %v2651
      %v2680 = vsub.f32 %v2528, %v2652
      %v2681 = vsub.f32 %v2597, %v2653
      %v2682 = vsub.f32 %v2599, %v2654
      %v2683 = vmul.f32 %v2679, 1.442695
      %v2684 = vpow.pop %v2683
      %v2685 = vmul.f32 %v2680, 1.442695
      %v2686 = vpow.pop %v2685
      %v2687 = vmul.f32 %v2681, 1.442695
      %v2688 = vpow.pop %v2687
      %v2689 = vmul.f32 %v2682, 1.442695
      %v2690 = vpow.pop %v2689
      %v2691 = vsub.f32 %v2530, %v2651
      %v2692 = vsub.f32 %v2532, %v2652
      %v2693 = vsub.f32 %v2601, %v2653
      %v2694 = vsub.f32 %v2603, %v2654
      %v2695 = vmul.f32 %v2691, 1.442695
      %v2696 = vpow.pop %v2695
      %v2697 = vmul.f32 %v2692, 1.442695
      %v2698 = vpow.pop %v2697
      %v2699 = vmul.f32 %v2693, 1.442695
      %v2700 = vpow.pop %v2699
      %v2701 = vmul.f32 %v2694, 1.442695
      %v2702 = vpow.pop %v2701
      %v2703 = vadd.f32 %v2660, %v2672
      %v2704 = vadd.f32 %v2662, %v2674
      %v2705 = vadd.f32 %v2664, %v2676
      %v2706 = vadd.f32 %v2666, %v2678
      %v2707 = vadd.f32 %v2703, %v2684
      %v2708 = vadd.f32 %v2704, %v2686
      %v2709 = vadd.f32 %v2705, %v2688
      %v2710 = vadd.f32 %v2706, %v2690
      %v2711 = vadd.f32 %v2707, %v2696
      %v2712 = vadd.f32 %v2708, %v2698
      %v2713 = vadd.f32 %v2709, %v2700
      %v2714 = vadd.f32 %v2710, %v2702
      %v2715 = vrcp.pop %v2711
      %v2716 = vrcp.pop %v2712
      %v2717 = vrcp.pop %v2713
      %v2718 = vrcp.pop %v2714
      %v2719 = vmul.f32 %v2660, %v2715
      %v2720 = vmul.f32 %v2662, %v2716
      %v2721 = vmul.f32 %v2664, %v2717
      %v2722 = vmul.f32 %v2666, %v2718
      %v2723 = vmul.f32 %v2672, %v2715
      %v2724 = vmul.f32 %v2674, %v2716
      %v2725 = vmul.f32 %v2676, %v2717
      %v2726 = vmul.f32 %v2678, %v2718
      %v2727 = vmul.f32 %v2684, %v2715
      %v2728 = vmul.f32 %v2686, %v2716
      %v2729 = vmul.f32 %v2688, %v2717
      %v2730 = vmul.f32 %v2690, %v2718
      %v2731 = vmul.f32 %v2696, %v2715
      %v2732 = vmul.f32 %v2698, %v2716
      %v2733 = vmul.f32 %v2700, %v2717
      %v2734 = vmul.f32 %v2702, %v2718
      %v2735 = vmul.f32 %v2719, 0.996
      %v2736 = vmul.f32 %v2720, 0.996
      %v2737 = vmul.f32 %v2721, 0.996
      %v2738 = vmul.f32 %v2722, 0.996
      %v2739 = vadd.f32 %v2735, 0.001
      %v2740 = vadd.f32 %v2736, 0.001
      %v2741 = vadd.f32 %v2737, 0.001
      %v2742 = vadd.f32 %v2738, 0.001
      %v2743 = vmul.f32 %v2723, 0.996
      %v2744 = vmul.f32 %v2724, 0.996
      %v2745 = vmul.f32 %v2725, 0.996
      %v2746 = vmul.f32 %v2726, 0.996
      %v2747 = vadd.f32 %v2743, 0.001
      %v2748 = vadd.f32 %v2744, 0.001
      %v2749 = vadd.f32 %v2745, 0.001
      %v2750 = vadd.f32 %v2746, 0.001
      %v2751 = vmul.f32 %v2727, 0.996
      %v2752 = vmul.f32 %v2728, 0.996
      %v2753 = vmul.f32 %v2729, 0.996
      %v2754 = vmul.f32 %v2730, 0.996
      %v2755 = vadd.f32 %v2751, 0.001
      %v2756 = vadd.f32 %v2752, 0.001
      %v2757 = vadd.f32 %v2753, 0.001
      %v2758 = vadd.f32 %v2754, 0.001
      %v2759 = vmul.f32 %v2731, 0.996
      %v2760 = vmul.f32 %v2732, 0.996
      %v2761 = vmul.f32 %v2733, 0.996
      %v2762 = vmul.f32 %v2734, 0.996
      %v2763 = vadd.f32 %v2759, 0.001
      %v2764 = vadd.f32 %v2760, 0.001
      %v2765 = vadd.f32 %v2761, 0.001
      %v2766 = vadd.f32 %v2762, 0.001
      %v2767 = vmul.f32 %v2739, 6.0
      %v2768 = vmul.f32 %v2740, 6.0
      %v2769 = vmul.f32 %v2741, 6.0
      %v2770 = vmul.f32 %v2742, 6.0
      %v2771 = vmul.f32 %v2747, 6.0
      %v2772 = vmul.f32 %v2748, 6.0
      %v2773 = vmul.f32 %v2749, 6.0
      %v2774 = vmul.f32 %v2750, 6.0
      %v2775 = vmul.f32 %v2755, 6.0
      %v2776 = vmul.f32 %v2756, 6.0
      %v2777 = vmul.f32 %v2757, 6.0
      %v2778 = vmul.f32 %v2758, 6.0
      %v2779 = vmul.f32 %v2763, 6.0
      %v2780 = vmul.f32 %v2764, 6.0
      %v2781 = vmul.f32 %v2765, 6.0
      %v2782 = vmul.f32 %v2766, 6.0
      %v2783 = vadd.f32 %v2767, -3.0
      %v2784 = vadd.f32 %v2768, -3.0
      %v2785 = vadd.f32 %v2769, -3.0
      %v2786 = vadd.f32 %v2770, -3.0
      %v2787 = vadd.f32 %v2739, %v2747
      %v2788 = vadd.f32 %v2740, %v2748
      %v2789 = vadd.f32 %v2741, %v2749
      %v2790 = vadd.f32 %v2742, %v2750
      %v2791 = vmul.f32 %v2787, 6.0
      %v2792 = vmul.f32 %v2788, 6.0
      %v2793 = vmul.f32 %v2789, 6.0
      %v2794 = vmul.f32 %v2790, 6.0
      %v2795 = vadd.f32 %v2791, -3.0
      %v2796 = vadd.f32 %v2792, -3.0
      %v2797 = vadd.f32 %v2793, -3.0
      %v2798 = vadd.f32 %v2794, -3.0
      %v2799 = vadd.f32 %v2787, %v2755
      %v2800 = vadd.f32 %v2788, %v2756
      %v2801 = vadd.f32 %v2789, %v2757
      %v2802 = vadd.f32 %v2790, %v2758
      %v2803 = vmul.f32 %v2799, 6.0
      %v2804 = vmul.f32 %v2800, 6.0
      %v2805 = vmul.f32 %v2801, 6.0
      %v2806 = vmul.f32 %v2802, 6.0
      %v2807 = vadd.f32 %v2803, -3.0
      %v2808 = vadd.f32 %v2804, -3.0
      %v2809 = vadd.f32 %v2805, -3.0
      %v2810 = vadd.f32 %v2806, -3.0
      %v2811 = vmax.f32 %v2536, 0.0
      %v2812 = vmax.f32 %v2538, 0.0
      %v2813 = vmax.f32 %v2607, 0.0
      %v2814 = vmax.f32 %v2609, 0.0
      %v2815 = vand.u32 2147483647, %v2536
      %v2816 = vand.u32 2147483647, %v2538
      %v2817 = vand.u32 2147483647, %v2607
      %v2818 = vand.u32 2147483647, %v2609
      %v2819 = vsub.f32 0.0, %v2815
      %v2820 = vsub.f32 0.0, %v2816
      %v2821 = vsub.f32 0.0, %v2817
      %v2822 = vsub.f32 0.0, %v2818
      %v2823 = vmul.f32 %v2819, 1.442695
      %v2824 = vpow.pop %v2823
      %v2825 = vmul.f32 %v2820, 1.442695
      %v2826 = vpow.pop %v2825
      %v2827 = vmul.f32 %v2821, 1.442695
      %v2828 = vpow.pop %v2827
      %v2829 = vmul.f32 %v2822, 1.442695
      %v2830 = vpow.pop %v2829
      %v2831 = vadd.f32 %v2824, 1.0
      %v2832 = vadd.f32 %v2826, 1.0
      %v2833 = vadd.f32 %v2828, 1.0
      %v2834 = vadd.f32 %v2830, 1.0
      %v2835 = vlog2.pop %v2831
      %v2836 = vmul.f32 %v2835, 0.6931472
      %v2837 = vlog2.pop %v2832
      %v2838 = vmul.f32 %v2837, 0.6931472
      %v2839 = vlog2.pop %v2833
      %v2840 = vmul.f32 %v2839, 0.6931472
      %v2841 = vlog2.pop %v2834
      %v2842 = vmul.f32 %v2841, 0.6931472
      %v2843 = vadd.f32 %v2811, %v2836
      %v2844 = vadd.f32 %v2812, %v2838
      %v2845 = vadd.f32 %v2813, %v2840
      %v2846 = vadd.f32 %v2814, %v2842
      %v2847 = vadd.f32 %v2843, 0.001
      %v2848 = vadd.f32 %v2844, 0.001
      %v2849 = vadd.f32 %v2845, 0.001
      %v2850 = vadd.f32 %v2846, 0.001
      %v2851 = vmax.f32 %v2540, 0.0
      %v2852 = vmax.f32 %v2542, 0.0
      %v2853 = vmax.f32 %v2611, 0.0
      %v2854 = vmax.f32 %v2613, 0.0
      %v2855 = vand.u32 2147483647, %v2540
      %v2856 = vand.u32 2147483647, %v2542
      %v2857 = vand.u32 2147483647, %v2611
      %v2858 = vand.u32 2147483647, %v2613
      %v2859 = vsub.f32 0.0, %v2855
      %v2860 = vsub.f32 0.0, %v2856
      %v2861 = vsub.f32 0.0, %v2857
      %v2862 = vsub.f32 0.0, %v2858
      %v2863 = vmul.f32 %v2859, 1.442695
      %v2864 = vpow.pop %v2863
      %v2865 = vmul.f32 %v2860, 1.442695
      %v2866 = vpow.pop %v2865
      %v2867 = vmul.f32 %v2861, 1.442695
      %v2868 = vpow.pop %v2867
      %v2869 = vmul.f32 %v2862, 1.442695
      %v2870 = vpow.pop %v2869
      %v2871 = vadd.f32 %v2864, 1.0
      %v2872 = vadd.f32 %v2866, 1.0
      %v2873 = vadd.f32 %v2868, 1.0
      %v2874 = vadd.f32 %v2870, 1.0
      %v2875 = vlog2.pop %v2871
      %v2876 = vmul.f32 %v2875, 0.6931472
      %v2877 = vlog2.pop %v2872
      %v2878 = vmul.f32 %v2877, 0.6931472
      %v2879 = vlog2.pop %v2873
      %v2880 = vmul.f32 %v2879, 0.6931472
      %v2881 = vlog2.pop %v2874
      %v2882 = vmul.f32 %v2881, 0.6931472
      %v2883 = vadd.f32 %v2851, %v2876
      %v2884 = vadd.f32 %v2852, %v2878
      %v2885 = vadd.f32 %v2853, %v2880
      %v2886 = vadd.f32 %v2854, %v2882
      %v2887 = vadd.f32 %v2883, 0.001
      %v2888 = vadd.f32 %v2884, 0.001
      %v2889 = vadd.f32 %v2885, 0.001
      %v2890 = vadd.f32 %v2886, 0.001
      %v2891 = vmax.f32 %v2546, 0.0
      %v2892 = vmax.f32 %v2548, 0.0
      %v2893 = vmax.f32 %v2617, 0.0
      %v2894 = vmax.f32 %v2619, 0.0
      %v2895 = vand.u32 2147483647, %v2546
      %v2896 = vand.u32 2147483647, %v2548
      %v2897 = vand.u32 2147483647, %v2617
      %v2898 = vand.u32 2147483647, %v2619
      %v2899 = vsub.f32 0.0, %v2895
      %v2900 = vsub.f32 0.0, %v2896
      %v2901 = vsub.f32 0.0, %v2897
      %v2902 = vsub.f32 0.0, %v2898
      %v2903 = vmul.f32 %v2899, 1.442695
      %v2904 = vpow.pop %v2903
      %v2905 = vmul.f32 %v2900, 1.442695
      %v2906 = vpow.pop %v2905
      %v2907 = vmul.f32 %v2901, 1.442695
      %v2908 = vpow.pop %v2907
      %v2909 = vmul.f32 %v2902, 1.442695
      %v2910 = vpow.pop %v2909
      %v2911 = vadd.f32 %v2904, 1.0
      %v2912 = vadd.f32 %v2906, 1.0
      %v2913 = vadd.f32 %v2908, 1.0
      %v2914 = vadd.f32 %v2910, 1.0
      %v2915 = vlog2.pop %v2911
      %v2916 = vmul.f32 %v2915, 0.6931472
      %v2917 = vlog2.pop %v2912
      %v2918 = vmul.f32 %v2917, 0.6931472
      %v2919 = vlog2.pop %v2913
      %v2920 = vmul.f32 %v2919, 0.6931472
      %v2921 = vlog2.pop %v2914
      %v2922 = vmul.f32 %v2921, 0.6931472
      %v2923 = vadd.f32 %v2891, %v2916
      %v2924 = vadd.f32 %v2892, %v2918
      %v2925 = vadd.f32 %v2893, %v2920
      %v2926 = vadd.f32 %v2894, %v2922
      %v2927 = vadd.f32 %v2923, 0.001
      %v2928 = vadd.f32 %v2924, 0.001
      %v2929 = vadd.f32 %v2925, 0.001
      %v2930 = vadd.f32 %v2926, 0.001
      %vm2931 = vcmp.ge.f32.partialorder %v2639, %v2783
      %vm2932 = vcmp.ge.f32.partialorder %v2640, %v2784
      %vm2933 = vcmp.ge.f32.partialorder %v2641, %v2785
      %vm2934 = vcmp.ge.f32.partialorder %v2642, %v2786
      %v2935 = vsel %vm2931, %v2783, -3.0
      %v2936 = vsel %vm2932, %v2784, -3.0
      %v2937 = vsel %vm2933, %v2785, -3.0
      %v2938 = vsel %vm2934, %v2786, -3.0
      %v2939 = vsel %vm2931, %v2771, %v2767
      %v2940 = vsel %vm2932, %v2772, %v2768
      %v2941 = vsel %vm2933, %v2773, %v2769
      %v2942 = vsel %vm2934, %v2774, %v2770
      %v2947 = vrot.slane %v2783, 4
      %v2948 = vrot.slane %v2784, 4
      %v2949 = vrot.slane %v2785, 4
      %v2950 = vrot.slane %v2786, 4
      %v2955 = vsel %vm2931, %v2947, -3.0
      %v2956 = vsel %vm2932, %v2948, -3.0
      %v2957 = vsel %vm2933, %v2949, -3.0
      %v2958 = vsel %vm2934, %v2950, -3.0
      %v2963 = vrot.slane %v2771, 4
      %v2964 = vrot.slane %v2772, 4
      %v2965 = vrot.slane %v2773, 4
      %v2966 = vrot.slane %v2774, 4
      %v2975 = vrot.slane %v2767, 4
      %v2976 = vrot.slane %v2768, 4
      %v2977 = vrot.slane %v2769, 4
      %v2978 = vrot.slane %v2770, 4
      %v2983 = vsel %vm2931, %v2963, %v2975
      %v2984 = vsel %vm2932, %v2964, %v2976
      %v2985 = vsel %vm2933, %v2965, %v2977
      %v2986 = vsel %vm2934, %v2966, %v2978
      %v2987 = vsel %vm2931, %v2847, 1.0
      %v2988 = vsel %vm2932, %v2848, 1.0
      %v2989 = vsel %vm2933, %v2849, 1.0
      %v2990 = vsel %vm2934, %v2850, 1.0
      %v2991 = vsel %vm2931, %v2887, %v2847
      %v2992 = vsel %vm2932, %v2888, %v2848
      %v2993 = vsel %vm2933, %v2889, %v2849
      %v2994 = vsel %vm2934, %v2890, %v2850
      %vm2995 = vcmp.ge.f32.partialorder %v2639, %v2795
      %vm2996 = vcmp.ge.f32.partialorder %v2640, %v2796
      %vm2997 = vcmp.ge.f32.partialorder %v2641, %v2797
      %vm2998 = vcmp.ge.f32.partialorder %v2642, %v2798
      %v2999 = vsel %vm2995, %v2795, %v2935
      %v3000 = vsel %vm2996, %v2796, %v2936
      %v3001 = vsel %vm2997, %v2797, %v2937
      %v3002 = vsel %vm2998, %v2798, %v2938
      %v3003 = vsel %vm2995, %v2775, %v2939
      %v3004 = vsel %vm2996, %v2776, %v2940
      %v3005 = vsel %vm2997, %v2777, %v2941
      %v3006 = vsel %vm2998, %v2778, %v2942
      %v3011 = vrot.slane %v2795, 4
      %v3012 = vrot.slane %v2796, 4
      %v3013 = vrot.slane %v2797, 4
      %v3014 = vrot.slane %v2798, 4
      %v3019 = vsel %vm2995, %v3011, %v2955
      %v3020 = vsel %vm2996, %v3012, %v2956
      %v3021 = vsel %vm2997, %v3013, %v2957
      %v3022 = vsel %vm2998, %v3014, %v2958
      %v3027 = vrot.slane %v2775, 4
      %v3028 = vrot.slane %v2776, 4
      %v3029 = vrot.slane %v2777, 4
      %v3030 = vrot.slane %v2778, 4
      %v3035 = vsel %vm2995, %v3027, %v2983
      %v3036 = vsel %vm2996, %v3028, %v2984
      %v3037 = vsel %vm2997, %v3029, %v2985
      %v3038 = vsel %vm2998, %v3030, %v2986
      %v3039 = vsel %vm2995, %v2887, %v2987
      %v3040 = vsel %vm2996, %v2888, %v2988
      %v3041 = vsel %vm2997, %v2889, %v2989
      %v3042 = vsel %vm2998, %v2890, %v2990
      %v3043 = vsel %vm2995, %v2927, %v2991
      %v3044 = vsel %vm2996, %v2928, %v2992
      %v3045 = vsel %vm2997, %v2929, %v2993
      %v3046 = vsel %vm2998, %v2930, %v2994
      %vm3047 = vcmp.ge.f32.partialorder %v2639, %v2807
      %vm3048 = vcmp.ge.f32.partialorder %v2640, %v2808
      %vm3049 = vcmp.ge.f32.partialorder %v2641, %v2809
      %vm3050 = vcmp.ge.f32.partialorder %v2642, %v2810
      %v3051 = vsel %vm3047, %v2807, %v2999
      %v3052 = vsel %vm3048, %v2808, %v3000
      %v3053 = vsel %vm3049, %v2809, %v3001
      %v3054 = vsel %vm3050, %v2810, %v3002
      %v3055 = vsel %vm3047, %v2779, %v3003
      %v3056 = vsel %vm3048, %v2780, %v3004
      %v3057 = vsel %vm3049, %v2781, %v3005
      %v3058 = vsel %vm3050, %v2782, %v3006
      %v3063 = vrot.slane %v2807, 4
      %v3064 = vrot.slane %v2808, 4
      %v3065 = vrot.slane %v2809, 4
      %v3066 = vrot.slane %v2810, 4
      %v3071 = vsel %vm3047, %v3063, %v3019
      %v3072 = vsel %vm3048, %v3064, %v3020
      %v3073 = vsel %vm3049, %v3065, %v3021
      %v3074 = vsel %vm3050, %v3066, %v3022
      %v3079 = vrot.slane %v2779, 4
      %v3080 = vrot.slane %v2780, 4
      %v3081 = vrot.slane %v2781, 4
      %v3082 = vrot.slane %v2782, 4
      %v3087 = vsel %vm3047, %v3079, %v3035
      %v3088 = vsel %vm3048, %v3080, %v3036
      %v3089 = vsel %vm3049, %v3081, %v3037
      %v3090 = vsel %vm3050, %v3082, %v3038
      %v3091 = vsel %vm3047, %v2927, %v3039
      %v3092 = vsel %vm3048, %v2928, %v3040
      %v3093 = vsel %vm3049, %v2929, %v3041
      %v3094 = vsel %vm3050, %v2930, %v3042
      %v3095 = vsel %vm3047, 1.0, %v3043
      %v3096 = vsel %vm3048, 1.0, %v3044
      %v3097 = vsel %vm3049, 1.0, %v3045
      %v3098 = vsel %vm3050, 1.0, %v3046
      %v3099 = vrcp.pop %v3055
      %v3100 = vmul.f32 1.0, %v3099
      %v3101 = vrcp.pop %v3056
      %v3102 = vmul.f32 1.0, %v3101
      %v3103 = vrcp.pop %v3057
      %v3104 = vmul.f32 1.0, %v3103
      %v3105 = vrcp.pop %v3058
      %v3106 = vmul.f32 1.0, %v3105
      %v3107 = vmul.f32 %v3087, %v3100
      %v3108 = vmul.f32 %v3088, %v3102
      %v3109 = vmul.f32 %v3089, %v3104
      %v3110 = vmul.f32 %v3090, %v3106
      %v3111 = vsub.f32 %v2639, %v3051
      %v3112 = vsub.f32 %v2640, %v3052
      %v3113 = vsub.f32 %v2641, %v3053
      %v3114 = vsub.f32 %v2642, %v3054
      %v3115 = vmul.f32 %v3111, %v3100
      %v3116 = vmul.f32 %v3112, %v3102
      %v3117 = vmul.f32 %v3113, %v3104
      %v3118 = vmul.f32 %v3114, %v3106
      %v3119 = vsub.f32 1.0, %v3115
      %v3120 = vsub.f32 1.0, %v3116
      %v3121 = vsub.f32 1.0, %v3117
      %v3122 = vsub.f32 1.0, %v3118
      %v3123 = vmul.f32 %v3115, %v3119
      %v3124 = vmul.f32 %v3116, %v3120
      %v3125 = vmul.f32 %v3117, %v3121
      %v3126 = vmul.f32 %v3118, %v3122
      %v3127 = vmul.f32 %v3115, %v3115
      %v3128 = vmul.f32 %v3116, %v3116
      %v3129 = vmul.f32 %v3117, %v3117
      %v3130 = vmul.f32 %v3118, %v3118
      %v3131 = vmul.f32 %v3107, %v3127
      %v3132 = vmul.f32 %v3108, %v3128
      %v3133 = vmul.f32 %v3109, %v3129
      %v3134 = vmul.f32 %v3110, %v3130
      %v3135 = vmul.f32 %v3091, %v3123
      %v3136 = vmul.f32 %v3092, %v3124
      %v3137 = vmul.f32 %v3093, %v3125
      %v3138 = vmul.f32 %v3094, %v3126
      %v3139 = vadd.f32 %v3131, %v3135
      %v3140 = vadd.f32 %v3132, %v3136
      %v3141 = vadd.f32 %v3133, %v3137
      %v3142 = vadd.f32 %v3134, %v3138
      %v3143 = vmul.f32 %v3087, %v3139
      %v3144 = vmul.f32 %v3088, %v3140
      %v3145 = vmul.f32 %v3089, %v3141
      %v3146 = vmul.f32 %v3090, %v3142
      %v3147 = vadd.f32 %v3091, %v3095
      %v3148 = vadd.f32 %v3092, %v3096
      %v3149 = vadd.f32 %v3093, %v3097
      %v3150 = vadd.f32 %v3094, %v3098
      %v3151 = vmul.f32 %v3107, 2.0
      %v3152 = vmul.f32 %v3108, 2.0
      %v3153 = vmul.f32 %v3109, 2.0
      %v3154 = vmul.f32 %v3110, 2.0
      %v3155 = vsub.f32 %v3147, %v3151
      %v3156 = vsub.f32 %v3148, %v3152
      %v3157 = vsub.f32 %v3149, %v3153
      %v3158 = vsub.f32 %v3150, %v3154
      %v3159 = vmul.f32 %v3155, %v3123
      %v3160 = vmul.f32 %v3156, %v3124
      %v3161 = vmul.f32 %v3157, %v3125
      %v3162 = vmul.f32 %v3158, %v3126
      %v3163 = vadd.f32 %v3107, %v3159
      %v3164 = vadd.f32 %v3108, %v3160
      %v3165 = vadd.f32 %v3109, %v3161
      %v3166 = vadd.f32 %v3110, %v3162
      %v3167 = vrcp.pop %v3163
      %v3168 = vmul.f32 1.0, %v3167
      %v3169 = vrcp.pop %v3164
      %v3170 = vmul.f32 1.0, %v3169
      %v3171 = vrcp.pop %v3165
      %v3172 = vmul.f32 1.0, %v3171
      %v3173 = vrcp.pop %v3166
      %v3174 = vmul.f32 1.0, %v3173
      %v3175 = vmul.f32 %v3107, %v3107
      %v3176 = vmul.f32 %v3108, %v3108
      %v3177 = vmul.f32 %v3109, %v3109
      %v3178 = vmul.f32 %v3110, %v3110
      %v3179 = vmul.f32 %v3095, %v3127
      %v3180 = vmul.f32 %v3096, %v3128
      %v3181 = vmul.f32 %v3097, %v3129
      %v3182 = vmul.f32 %v3098, %v3130
      %v3183 = vmul.f32 %v3151, %v3123
      %v3184 = vmul.f32 %v3152, %v3124
      %v3185 = vmul.f32 %v3153, %v3125
      %v3186 = vmul.f32 %v3154, %v3126
      %v3187 = vadd.f32 %v3179, %v3183
      %v3188 = vadd.f32 %v3180, %v3184
      %v3189 = vadd.f32 %v3181, %v3185
      %v3190 = vadd.f32 %v3182, %v3186
      %v3191 = vmul.f32 %v3091, %v3119
      %v3192 = vmul.f32 %v3092, %v3120
      %v3193 = vmul.f32 %v3093, %v3121
      %v3194 = vmul.f32 %v3094, %v3122
      %v3195 = vmul.f32 %v3191, %v3119
      %v3196 = vmul.f32 %v3192, %v3120
      %v3197 = vmul.f32 %v3193, %v3121
      %v3198 = vmul.f32 %v3194, %v3122
      %v3199 = vadd.f32 %v3187, %v3195
      %v3200 = vadd.f32 %v3188, %v3196
      %v3201 = vadd.f32 %v3189, %v3197
      %v3202 = vadd.f32 %v3190, %v3198
      %v3203 = vmul.f32 %v3175, %v3199
      %v3204 = vmul.f32 %v3176, %v3200
      %v3205 = vmul.f32 %v3177, %v3201
      %v3206 = vmul.f32 %v3178, %v3202
      %v3207 = vmul.f32 %v3143, %v3168
      %v3208 = vmul.f32 %v3144, %v3170
      %v3209 = vmul.f32 %v3145, %v3172
      %v3210 = vmul.f32 %v3146, %v3174
      %v3211 = vadd.f32 %v3071, %v3207
      %v3212 = vadd.f32 %v3072, %v3208
      %v3213 = vadd.f32 %v3073, %v3209
      %v3214 = vadd.f32 %v3074, %v3210
      %v3215 = vsel %vm2631, %v3211, %v1529
      %v3216 = vsel %vm2632, %v3212, %v1530
      %v3217 = vsel %vm2633, %v3213, %v1531
      %v3218 = vsel %vm2634, %v3214, %v1532
      %v3219 = vmul.f32 %v3168, %v3168
      %v3220 = vmul.f32 %v3170, %v3170
      %v3221 = vmul.f32 %v3172, %v3172
      %v3222 = vmul.f32 %v3174, %v3174
      %v3223 = vmul.f32 %v3203, %v3219
      %v3224 = vmul.f32 %v3204, %v3220
      %v3225 = vmul.f32 %v3205, %v3221
      %v3226 = vmul.f32 %v3206, %v3222
      %v3227 = vlog2.pop %v3223
      %v3228 = vmul.f32 %v3227, 0.6931472
      %v3229 = vlog2.pop %v3224
      %v3230 = vmul.f32 %v3229, 0.6931472
      %v3231 = vlog2.pop %v3225
      %v3232 = vmul.f32 %v3231, 0.6931472
      %v3233 = vlog2.pop %v3226
      %v3234 = vmul.f32 %v3233, 0.6931472
      %v3235 = vsel %vm2631, %v3228, 0.0
      %v3236 = vsel %vm2632, %v3230, 0.0
      %v3237 = vsel %vm2633, %v3232, 0.0
      %v3238 = vsel %vm2634, %v3234, 0.0
      %v3239 = vsel %vm1554, %v3235, 0.0
      %v3240 = vrot.slane %v3239, 4
      %v3241 = vadd.f32 %v3239, %v3240
      %v3242 = vrot.slane %v3241, 2
      %v3243 = vadd.f32 %v3241, %v3242
      %v3244 = vrot.slane %v3243, 1
      %v3245 = vadd.f32 %v3243, %v3244
      %v3246 = vsel %vm1554, %v3236, 0.0
      %v3247 = vrot.slane %v3246, 4
      %v3248 = vadd.f32 %v3246, %v3247
      %v3249 = vrot.slane %v3248, 2
      %v3250 = vadd.f32 %v3248, %v3249
      %v3251 = vrot.slane %v3250, 1
      %v3252 = vadd.f32 %v3250, %v3251
      %v3253 = vsel %vm1554, %v3237, 0.0
      %v3254 = vrot.slane %v3253, 4
      %v3255 = vadd.f32 %v3253, %v3254
      %v3256 = vrot.slane %v3255, 2
      %v3257 = vadd.f32 %v3255, %v3256
      %v3258 = vrot.slane %v3257, 1
      %v3259 = vadd.f32 %v3257, %v3258
      %v3260 = vsel %vm1554, %v3238, 0.0
      %v3261 = vrot.slane %v3260, 4
      %v3262 = vadd.f32 %v3260, %v3261
      %v3263 = vrot.slane %v3262, 2
      %v3264 = vadd.f32 %v3262, %v3263
      %v3265 = vrot.slane %v3264, 1
      %v3266 = vadd.f32 %v3264, %v3265
      %v3267 = vadd.f32 %v3245, 0.0
      %v3268 = vadd.f32 %v3252, 0.0
      %v3269 = vadd.f32 %v3259, 0.0
      %v3270 = vadd.f32 %v3266, 0.0
      %v3275 = vrot.slane %v3215, 2
      %v3276 = vrot.slane %v3216, 2
      %v3277 = vrot.slane %v3217, 2
      %v3278 = vrot.slane %v3218, 2
      %v3283 = vrot.slane %v3215, 7
      %v3284 = vrot.slane %v3216, 7
      %v3285 = vrot.slane %v3217, 7
      %v3286 = vrot.slane %v3218, 7
      %v3291 = vrot.slane %v3215, 1
      %v3292 = vrot.slane %v3216, 1
      %v3293 = vrot.slane %v3217, 1
      %v3294 = vrot.slane %v3218, 1
      %v3299 = vsel %vm1519, %v465, %v3275
      %v3300 = vsel %vm1519, %v466, %v3276
      %v3301 = vsel %vm1519, %v467, %v3277
      %v3302 = vsel %vm1519, %v468, %v3278
      %v3303 = vsel %vm706, %v3299, %v3283
      %v3304 = vsel %vm706, %v3300, %v3284
      %v3305 = vsel %vm706, %v3301, %v3285
      %v3306 = vsel %vm706, %v3302, %v3286
      %v3307 = vsel %vm1528, %v3303, %v3283
      %v3308 = vsel %vm1528, %v3304, %v3284
      %v3309 = vsel %vm1528, %v3305, %v3285
      %v3310 = vsel %vm1528, %v3306, %v3286
      %v3311 = vsel %vm1554, %v3307, %v465
      %v3312 = vsel %vm1554, %v3308, %v466
      %v3313 = vsel %vm1554, %v3309, %v467
      %v3314 = vsel %vm1554, %v3310, %v468
      %vm3315 = vcmask 1044480
      %v3316 = vsel %vm3315, %v3311, %v465
      %v3317 = vsel %vm3315, %v3312, %v466
      %v3318 = vsel %vm3315, %v3313, %v467
      %v3319 = vsel %vm3315, %v3314, %v468
      %vm3320 = vcmask 1045504
      %v3321 = vsel %vm3320, %v3316, %v465
      %v3322 = vsel %vm3320, %v3317, %v466
      %v3323 = vsel %vm3320, %v3318, %v467
      %v3324 = vsel %vm3320, %v3319, %v468
      %vm3325 = vcmask 1046528
      %v3326 = vsel %vm3325, %v3321, %v3291
      %v3327 = vsel %vm3325, %v3322, %v3292
      %v3328 = vsel %vm3325, %v3323, %v3293
      %v3329 = vsel %vm3325, %v3324, %v3294
      %v3334 = vrot.slane %v3326, 4
      %v3335 = vrot.slane %v3327, 4
      %v3336 = vrot.slane %v3328, 4
      %v3337 = vrot.slane %v3329, 4
      %v3342 = vrot.slane %v3326, 5
      %v3343 = vrot.slane %v3327, 5
      %v3344 = vrot.slane %v3328, 5
      %v3345 = vrot.slane %v3329, 5
      %v3350 = vrot.slane %v3326, 2
      %v3351 = vrot.slane %v3327, 2
      %v3352 = vrot.slane %v3328, 2
      %v3353 = vrot.slane %v3329, 2
      %v3358 = vsel %vm1519, %v3334, %v3342
      %v3359 = vsel %vm1519, %v3335, %v3343
      %v3360 = vsel %vm1519, %v3336, %v3344
      %v3361 = vsel %vm1519, %v3337, %v3345
      %v3362 = vsel %vm706, %v3358, %v3326
      %v3363 = vsel %vm706, %v3359, %v3327
      %v3364 = vsel %vm706, %v3360, %v3328
      %v3365 = vsel %vm706, %v3361, %v3329
      %v3366 = vsel %vm1528, %v3362, %v3350
      %v3367 = vsel %vm1528, %v3363, %v3351
      %v3368 = vsel %vm1528, %v3364, %v3352
      %v3369 = vsel %vm1528, %v3365, %v3353
      %v3370 = vpack.c.bf16 %v3326, %v3326
      %v3371 = vpack.c.bf16 %v3327, %v3327
      %v3372 = vpack.c.bf16 %v3328, %v3328
      %v3373 = vpack.c.bf16 %v3329, %v3329
      %v3378 = vunpack.c.l.b16 %v475
      %v3379 = vunpack.c.l.b16 %v476
      %v3380 = vunpack.c.l.b16 %v477
      %v3381 = vunpack.c.l.b16 %v478
      %v3382 = vpack.c.b16 %v3379, %v3378
      %v3383 = vpack.c.b16 %v3381, %v3380
      %v3385 = vsel %vm1547, %v3382, 0
      %v3388 = vsel %vm1547, %v3383, 0
      %v3391 = vsel %vm1554, %v3370, 0
      %v3394 = vsel %vm1554, %v3371, 0
      %v3397 = vsel %vm1554, %v3372, 0
      %v3400 = vsel %vm1554, %v3373, 0
      %3402 = vmatprep.subr.bf16.mxu0 0
      %3403 = vmatpush1.bf16.msra.mxu0 0
      %3404 = vmatprep.subr.bf16.mxu0 0
      %3405 = vmatpush1.bf16.msra.mxu0 0
      %3406 = vmatprep.subr.bf16.mxu0 0
      %3407 = vmatpush1.bf16.msra.mxu0 0
      %3408 = vmatprep.subr.bf16.mxu0 0
      %3409 = vmatpush1.bf16.msra.mxu0 0
      %3410 = vmatprep.subr.bf16.mxu0 0
      %3411 = vmatpush1.bf16.msra.mxu0 0
      %3412 = vmatprep.subr.bf16.mxu0 0
      %3413 = vmatpush1.bf16.msra.mxu0 0
      %3414 = vmatprep.subr.bf16.mxu0 0
      %3415 = vmatpush1.bf16.msra.mxu0 0
      %3416 = vmatprep.subr.bf16.mxu0 %v3394
      %3417 = vmatpush1.bf16.msra.mxu0 %v3391
      %3418 = vmatprep.subr.bf16.mxu0 0
      %3419 = vmatpush2.bf16.msra.mxu0 0
      %3420 = vmatprep.subr.bf16.mxu0 0
      %3421 = vmatpush2.bf16.msra.mxu0 0
      %3422 = vmatprep.subr.bf16.mxu0 0
      %3423 = vmatpush2.bf16.msra.mxu0 0
      %3424 = vmatprep.subr.bf16.mxu0 0
      %3425 = vmatpush2.bf16.msra.mxu0 0
      %3426 = vmatprep.subr.bf16.mxu0 0
      %3427 = vmatpush2.bf16.msra.mxu0 0
      %3428 = vmatprep.subr.bf16.mxu0 0
      %3429 = vmatpush2.bf16.msra.mxu0 0
      %3430 = vmatprep.subr.bf16.mxu0 0
      %3431 = vmatpush2.bf16.msra.mxu0 0
      %3432 = vmatprep.subr.bf16.mxu0 0
      %3433 = vmatpush2.bf16.msra.mxu0 0
      %3434 = vmatprep.mubr.bf16.mxu0 0
      %3435 = vmatmul.mubr.bf16.gmra.mxu0 %v3385
      %v3436 = vpop.f32.mrf.mxu0
      %v3437 = vadd.f32 %v774, %v3436
      %v3438 = vpop.f32.mrf.mxu0
      %v3439 = vadd.f32 %v776, %v3438
      %v3440 = vpop.f32.mrf.mxu0
      %v3441 = vadd.f32 %v778, %v3440
      %v3442 = vpop.f32.mrf.mxu0
      %v3443 = vadd.f32 %v780, %v3442
      %3444 = vmatprep.mubr.bf16.mxu0 0
      %3445 = vmatmul.mubr.bf16.gmra.mxu0 %v3388
      %v3446 = vpop.f32.mrf.mxu0
      %v3447 = vadd.f32 %v784, %v3446
      %v3448 = vpop.f32.mrf.mxu0
      %v3449 = vadd.f32 %v786, %v3448
      %v3450 = vpop.f32.mrf.mxu0
      %v3451 = vadd.f32 %v788, %v3450
      %v3452 = vpop.f32.mrf.mxu0
      %v3453 = vadd.f32 %v790, %v3452
      %3454 = vdwg.mxu0
      %3455 = vmatprep.subr.bf16.mxu0 0
      %3456 = vmatpush1.bf16.msra.mxu0 0
      %3457 = vmatprep.subr.bf16.mxu0 0
      %3458 = vmatpush1.bf16.msra.mxu0 0
      %3459 = vmatprep.subr.bf16.mxu0 0
      %3460 = vmatpush1.bf16.msra.mxu0 0
      %3461 = vmatprep.subr.bf16.mxu0 0
      %3462 = vmatpush1.bf16.msra.mxu0 0
      %3463 = vmatprep.subr.bf16.mxu0 0
      %3464 = vmatpush1.bf16.msra.mxu0 0
      %3465 = vmatprep.subr.bf16.mxu0 0
      %3466 = vmatpush1.bf16.msra.mxu0 0
      %3467 = vmatprep.subr.bf16.mxu0 0
      %3468 = vmatpush1.bf16.msra.mxu0 0
      %3469 = vmatprep.subr.bf16.mxu0 %v3400
      %3470 = vmatpush1.bf16.msra.mxu0 %v3397
      %3471 = vmatprep.subr.bf16.mxu0 0
      %3472 = vmatpush2.bf16.msra.mxu0 0
      %3473 = vmatprep.subr.bf16.mxu0 0
      %3474 = vmatpush2.bf16.msra.mxu0 0
      %3475 = vmatprep.subr.bf16.mxu0 0
      %3476 = vmatpush2.bf16.msra.mxu0 0
      %3477 = vmatprep.subr.bf16.mxu0 0
      %3478 = vmatpush2.bf16.msra.mxu0 0
      %3479 = vmatprep.subr.bf16.mxu0 0
      %3480 = vmatpush2.bf16.msra.mxu0 0
      %3481 = vmatprep.subr.bf16.mxu0 0
      %3482 = vmatpush2.bf16.msra.mxu0 0
      %3483 = vmatprep.subr.bf16.mxu0 0
      %3484 = vmatpush2.bf16.msra.mxu0 0
      %3485 = vmatprep.subr.bf16.mxu0 0
      %3486 = vmatpush2.bf16.msra.mxu0 0
      %3487 = vmatprep.mubr.bf16.mxu0 0
      %3488 = vmatmul.mubr.bf16.gmra.mxu0 %v3385
      %v3489 = vpop.f32.mrf.mxu0
      %v3490 = vadd.f32 %v847, %v3489
      %v3491 = vpop.f32.mrf.mxu0
      %v3492 = vadd.f32 %v849, %v3491
      %v3493 = vpop.f32.mrf.mxu0
      %v3494 = vadd.f32 %v851, %v3493
      %v3495 = vpop.f32.mrf.mxu0
      %v3496 = vadd.f32 %v853, %v3495
      %3497 = vmatprep.mubr.bf16.mxu0 0
      %3498 = vmatmul.mubr.bf16.gmra.mxu0 %v3388
      %v3499 = vpop.f32.mrf.mxu0
      %v3500 = vadd.f32 %v857, %v3499
      %v3501 = vpop.f32.mrf.mxu0
      %v3502 = vadd.f32 %v859, %v3501
      %v3503 = vpop.f32.mrf.mxu0
      %v3504 = vadd.f32 %v861, %v3503
      %v3505 = vpop.f32.mrf.mxu0
      %v3506 = vadd.f32 %v863, %v3505
      %3507 = vdwg.mxu0
      %v3508 = vmax.f32 %v3437, 0.0
      %v3509 = vmax.f32 %v3439, 0.0
      %v3510 = vmax.f32 %v3490, 0.0
      %v3511 = vmax.f32 %v3492, 0.0
      %v3512 = vmax.f32 %v3441, 0.0
      %v3513 = vmax.f32 %v3443, 0.0
      %v3514 = vmax.f32 %v3494, 0.0
      %v3515 = vmax.f32 %v3496, 0.0
      %v3516 = vmax.f32 %v3447, 0.0
      %v3517 = vmax.f32 %v3449, 0.0
      %v3518 = vmax.f32 %v3500, 0.0
      %v3519 = vmax.f32 %v3502, 0.0
      %v3520 = vmax.f32 %v3451, 0.0
      %v3521 = vmax.f32 %v3453, 0.0
      %v3522 = vmax.f32 %v3504, 0.0
      %v3523 = vmax.f32 %v3506, 0.0
      %v3524 = vpack.c.bf16 %v3512, %v3508
      %v3525 = vpack.c.bf16 %v3513, %v3509
      %v3526 = vpack.c.bf16 %v3514, %v3510
      %v3527 = vpack.c.bf16 %v3515, %v3511
      %v3528 = vpack.c.bf16 %v3520, %v3516
      %v3529 = vpack.c.bf16 %v3521, %v3517
      %v3530 = vpack.c.bf16 %v3522, %v3518
      %v3531 = vpack.c.bf16 %v3523, %v3519
      %3533 = vset.pattern.permute.xlu0 0
      %3534 = vperm.xlu0 %3533, %v519
      %v3535 = vpop.permute.xlu0 %3534
      %3538 = vset.pattern.permute.xlu0 0
      %3539 = vperm.xlu0 %3538, %v520
      %v3540 = vpop.permute.xlu0 %3539
      %3543 = vset.pattern.permute.xlu0 0
      %3544 = vperm.xlu0 %3543, %v521
      %v3545 = vpop.permute.xlu0 %3544
      %3548 = vset.pattern.permute.xlu0 0
      %3549 = vperm.xlu0 %3548, %v522
      %v3550 = vpop.permute.xlu0 %3549
      %v3556 = vunpack.c.l.b16 %v503
      %v3557 = vunpack.c.l.b16 %v504
      %v3558 = vunpack.c.l.b16 %v505
      %v3559 = vunpack.c.l.b16 %v506
      %v3560 = vpack.c.b16 %v3557, %v3556
      %v3561 = vpack.c.b16 %v3559, %v3558
      %v3563 = vsel %vm1727, %v3560, 0
      %v3566 = vsel %vm1727, %v3561, 0
      %3568 = vmatprep.subr.bf16.mxu0 0
      %3569 = vmatpush1.bf16.msra.mxu0 0
      %3570 = vmatprep.subr.bf16.mxu0 0
      %3571 = vmatpush1.bf16.msra.mxu0 0
      %3572 = vmatprep.subr.bf16.mxu0 0
      %3573 = vmatpush1.bf16.msra.mxu0 0
      %3574 = vmatprep.subr.bf16.mxu0 0
      %3575 = vmatpush1.bf16.msra.mxu0 0
      %3576 = vmatprep.subr.bf16.mxu0 0
      %3577 = vmatpush1.bf16.msra.mxu0 0
      %3578 = vmatprep.subr.bf16.mxu0 0
      %3579 = vmatpush1.bf16.msra.mxu0 0
      %3580 = vmatprep.subr.bf16.mxu0 %v3529
      %3581 = vmatpush1.bf16.msra.mxu0 %v3528
      %3582 = vmatprep.subr.bf16.mxu0 %v3525
      %3583 = vmatpush1.bf16.msra.mxu0 %v3524
      %3584 = vmatprep.subr.bf16.mxu0 0
      %3585 = vmatpush2.bf16.msra.mxu0 0
      %3586 = vmatprep.subr.bf16.mxu0 0
      %3587 = vmatpush2.bf16.msra.mxu0 0
      %3588 = vmatprep.subr.bf16.mxu0 0
      %3589 = vmatpush2.bf16.msra.mxu0 0
      %3590 = vmatprep.subr.bf16.mxu0 0
      %3591 = vmatpush2.bf16.msra.mxu0 0
      %3592 = vmatprep.subr.bf16.mxu0 0
      %3593 = vmatpush2.bf16.msra.mxu0 0
      %3594 = vmatprep.subr.bf16.mxu0 0
      %3595 = vmatpush2.bf16.msra.mxu0 0
      %3596 = vmatprep.subr.bf16.mxu0 0
      %3597 = vmatpush2.bf16.msra.mxu0 0
      %3598 = vmatprep.subr.bf16.mxu0 0
      %3599 = vmatpush2.bf16.msra.mxu0 0
      %3600 = vmatprep.mubr.bf16.mxu0 0
      %3601 = vmatmul.mubr.bf16.gmra.mxu0 %v3563
      %v3602 = vpop.f32.mrf.mxu0
      %v3603 = vadd.f32 %v3535, %v3602
      %v3604 = vpop.f32.mrf.mxu0
      %v3605 = vadd.f32 %v3535, %v3604
      %v3606 = vpop.f32.mrf.mxu0
      %v3607 = vadd.f32 %v3540, %v3606
      %v3608 = vpop.f32.mrf.mxu0
      %v3609 = vadd.f32 %v3540, %v3608
      %3610 = vmatprep.mubr.bf16.mxu0 0
      %3611 = vmatmul.mubr.bf16.gmra.mxu0 %v3566
      %v3612 = vpop.f32.mrf.mxu0
      %v3613 = vadd.f32 %v3545, %v3612
      %v3614 = vpop.f32.mrf.mxu0
      %v3615 = vadd.f32 %v3545, %v3614
      %v3616 = vpop.f32.mrf.mxu0
      %v3617 = vadd.f32 %v3550, %v3616
      %v3618 = vpop.f32.mrf.mxu0
      %v3619 = vadd.f32 %v3550, %v3618
      %3620 = vdwg.mxu0
      %3621 = vmatprep.subr.bf16.mxu0 0
      %3622 = vmatpush1.bf16.msra.mxu0 0
      %3623 = vmatprep.subr.bf16.mxu0 0
      %3624 = vmatpush1.bf16.msra.mxu0 0
      %3625 = vmatprep.subr.bf16.mxu0 0
      %3626 = vmatpush1.bf16.msra.mxu0 0
      %3627 = vmatprep.subr.bf16.mxu0 0
      %3628 = vmatpush1.bf16.msra.mxu0 0
      %3629 = vmatprep.subr.bf16.mxu0 0
      %3630 = vmatpush1.bf16.msra.mxu0 0
      %3631 = vmatprep.subr.bf16.mxu0 0
      %3632 = vmatpush1.bf16.msra.mxu0 0
      %3633 = vmatprep.subr.bf16.mxu0 %v3531
      %3634 = vmatpush1.bf16.msra.mxu0 %v3530
      %3635 = vmatprep.subr.bf16.mxu0 %v3527
      %3636 = vmatpush1.bf16.msra.mxu0 %v3526
      %3637 = vmatprep.subr.bf16.mxu0 0
      %3638 = vmatpush2.bf16.msra.mxu0 0
      %3639 = vmatprep.subr.bf16.mxu0 0
      %3640 = vmatpush2.bf16.msra.mxu0 0
      %3641 = vmatprep.subr.bf16.mxu0 0
      %3642 = vmatpush2.bf16.msra.mxu0 0
      %3643 = vmatprep.subr.bf16.mxu0 0
      %3644 = vmatpush2.bf16.msra.mxu0 0
      %3645 = vmatprep.subr.bf16.mxu0 0
      %3646 = vmatpush2.bf16.msra.mxu0 0
      %3647 = vmatprep.subr.bf16.mxu0 0
      %3648 = vmatpush2.bf16.msra.mxu0 0
      %3649 = vmatprep.subr.bf16.mxu0 0
      %3650 = vmatpush2.bf16.msra.mxu0 0
      %3651 = vmatprep.subr.bf16.mxu0 0
      %3652 = vmatpush2.bf16.msra.mxu0 0
      %3653 = vmatprep.mubr.bf16.mxu0 0
      %3654 = vmatmul.mubr.bf16.gmra.mxu0 %v3563
      %v3655 = vpop.f32.mrf.mxu0
      %v3656 = vadd.f32 %v3535, %v3655
      %v3657 = vpop.f32.mrf.mxu0
      %v3658 = vadd.f32 %v3535, %v3657
      %v3659 = vpop.f32.mrf.mxu0
      %v3660 = vadd.f32 %v3540, %v3659
      %v3661 = vpop.f32.mrf.mxu0
      %v3662 = vadd.f32 %v3540, %v3661
      %3663 = vmatprep.mubr.bf16.mxu0 0
      %3664 = vmatmul.mubr.bf16.gmra.mxu0 %v3566
      %v3665 = vpop.f32.mrf.mxu0
      %v3666 = vadd.f32 %v3545, %v3665
      %v3667 = vpop.f32.mrf.mxu0
      %v3668 = vadd.f32 %v3545, %v3667
      %v3669 = vpop.f32.mrf.mxu0
      %v3670 = vadd.f32 %v3550, %v3669
      %v3671 = vpop.f32.mrf.mxu0
      %v3672 = vadd.f32 %v3550, %v3671
      %3673 = vdwg.mxu0
      %v3674 = vmax.f32 %v3603, 0.0
      %v3675 = vmax.f32 %v3605, 0.0
      %v3676 = vmax.f32 %v3656, 0.0
      %v3677 = vmax.f32 %v3658, 0.0
      %v3678 = vmax.f32 %v3607, 0.0
      %v3679 = vmax.f32 %v3609, 0.0
      %v3680 = vmax.f32 %v3660, 0.0
      %v3681 = vmax.f32 %v3662, 0.0
      %v3682 = vmax.f32 %v3613, 0.0
      %v3683 = vmax.f32 %v3615, 0.0
      %v3684 = vmax.f32 %v3666, 0.0
      %v3685 = vmax.f32 %v3668, 0.0
      %v3686 = vmax.f32 %v3617, 0.0
      %v3687 = vmax.f32 %v3619, 0.0
      %v3688 = vmax.f32 %v3670, 0.0
      %v3689 = vmax.f32 %v3672, 0.0
      %v3690 = vpack.c.bf16 %v3678, %v3674
      %v3691 = vpack.c.bf16 %v3679, %v3675
      %v3692 = vpack.c.bf16 %v3680, %v3676
      %v3693 = vpack.c.bf16 %v3681, %v3677
      %v3694 = vpack.c.bf16 %v3686, %v3682
      %v3695 = vpack.c.bf16 %v3687, %v3683
      %v3696 = vpack.c.bf16 %v3688, %v3684
      %v3697 = vpack.c.bf16 %v3689, %v3685
      %3699 = vset.pattern.permute.xlu0 0
      %3700 = vperm.xlu0 %3699, %v551
      %v3701 = vpop.permute.xlu0 %3700
      %3704 = vset.pattern.permute.xlu0 0
      %3705 = vperm.xlu0 %3704, %v552
      %v3706 = vpop.permute.xlu0 %3705
      %3709 = vset.pattern.permute.xlu0 0
      %3710 = vperm.xlu0 %3709, %v553
      %v3711 = vpop.permute.xlu0 %3710
      %3714 = vset.pattern.permute.xlu0 0
      %3715 = vperm.xlu0 %3714, %v554
      %v3716 = vpop.permute.xlu0 %3715
      %v3722 = vunpack.c.l.b16 %v535
      %v3723 = vunpack.c.l.b16 %v536
      %v3724 = vunpack.c.l.b16 %v537
      %v3725 = vunpack.c.l.b16 %v538
      %v3726 = vpack.c.b16 %v3723, %v3722
      %v3727 = vpack.c.b16 %v3725, %v3724
      %v3729 = vsel %vm1727, %v3726, 0
      %v3732 = vsel %vm1727, %v3727, 0
      %3734 = vmatprep.subr.bf16.mxu0 0
      %3735 = vmatpush1.bf16.msra.mxu0 0
      %3736 = vmatprep.subr.bf16.mxu0 0
      %3737 = vmatpush1.bf16.msra.mxu0 0
      %3738 = vmatprep.subr.bf16.mxu0 0
      %3739 = vmatpush1.bf16.msra.mxu0 0
      %3740 = vmatprep.subr.bf16.mxu0 0
      %3741 = vmatpush1.bf16.msra.mxu0 0
      %3742 = vmatprep.subr.bf16.mxu0 0
      %3743 = vmatpush1.bf16.msra.mxu0 0
      %3744 = vmatprep.subr.bf16.mxu0 0
      %3745 = vmatpush1.bf16.msra.mxu0 0
      %3746 = vmatprep.subr.bf16.mxu0 %v3695
      %3747 = vmatpush1.bf16.msra.mxu0 %v3694
      %3748 = vmatprep.subr.bf16.mxu0 %v3691
      %3749 = vmatpush1.bf16.msra.mxu0 %v3690
      %3750 = vmatprep.subr.bf16.mxu0 0
      %3751 = vmatpush2.bf16.msra.mxu0 0
      %3752 = vmatprep.subr.bf16.mxu0 0
      %3753 = vmatpush2.bf16.msra.mxu0 0
      %3754 = vmatprep.subr.bf16.mxu0 0
      %3755 = vmatpush2.bf16.msra.mxu0 0
      %3756 = vmatprep.subr.bf16.mxu0 0
      %3757 = vmatpush2.bf16.msra.mxu0 0
      %3758 = vmatprep.subr.bf16.mxu0 0
      %3759 = vmatpush2.bf16.msra.mxu0 0
      %3760 = vmatprep.subr.bf16.mxu0 0
      %3761 = vmatpush2.bf16.msra.mxu0 0
      %3762 = vmatprep.subr.bf16.mxu0 0
      %3763 = vmatpush2.bf16.msra.mxu0 0
      %3764 = vmatprep.subr.bf16.mxu0 0
      %3765 = vmatpush2.bf16.msra.mxu0 0
      %3766 = vmatprep.mubr.bf16.mxu0 0
      %3767 = vmatmul.mubr.bf16.gmra.mxu0 %v3729
      %v3768 = vpop.f32.mrf.mxu0
      %v3769 = vadd.f32 %v3701, %v3768
      %v3770 = vpop.f32.mrf.mxu0
      %v3771 = vadd.f32 %v3701, %v3770
      %v3772 = vpop.f32.mrf.mxu0
      %v3773 = vadd.f32 %v3706, %v3772
      %v3774 = vpop.f32.mrf.mxu0
      %v3775 = vadd.f32 %v3706, %v3774
      %3776 = vmatprep.mubr.bf16.mxu0 0
      %3777 = vmatmul.mubr.bf16.gmra.mxu0 %v3732
      %v3778 = vpop.f32.mrf.mxu0
      %v3779 = vadd.f32 %v3711, %v3778
      %v3780 = vpop.f32.mrf.mxu0
      %v3781 = vadd.f32 %v3711, %v3780
      %v3782 = vpop.f32.mrf.mxu0
      %v3783 = vadd.f32 %v3716, %v3782
      %v3784 = vpop.f32.mrf.mxu0
      %v3785 = vadd.f32 %v3716, %v3784
      %3786 = vdwg.mxu0
      %3787 = vmatprep.subr.bf16.mxu0 0
      %3788 = vmatpush1.bf16.msra.mxu0 0
      %3789 = vmatprep.subr.bf16.mxu0 0
      %3790 = vmatpush1.bf16.msra.mxu0 0
      %3791 = vmatprep.subr.bf16.mxu0 0
      %3792 = vmatpush1.bf16.msra.mxu0 0
      %3793 = vmatprep.subr.bf16.mxu0 0
      %3794 = vmatpush1.bf16.msra.mxu0 0
      %3795 = vmatprep.subr.bf16.mxu0 0
      %3796 = vmatpush1.bf16.msra.mxu0 0
      %3797 = vmatprep.subr.bf16.mxu0 0
      %3798 = vmatpush1.bf16.msra.mxu0 0
      %3799 = vmatprep.subr.bf16.mxu0 %v3697
      %3800 = vmatpush1.bf16.msra.mxu0 %v3696
      %3801 = vmatprep.subr.bf16.mxu0 %v3693
      %3802 = vmatpush1.bf16.msra.mxu0 %v3692
      %3803 = vmatprep.subr.bf16.mxu0 0
      %3804 = vmatpush2.bf16.msra.mxu0 0
      %3805 = vmatprep.subr.bf16.mxu0 0
      %3806 = vmatpush2.bf16.msra.mxu0 0
      %3807 = vmatprep.subr.bf16.mxu0 0
      %3808 = vmatpush2.bf16.msra.mxu0 0
      %3809 = vmatprep.subr.bf16.mxu0 0
      %3810 = vmatpush2.bf16.msra.mxu0 0
      %3811 = vmatprep.subr.bf16.mxu0 0
      %3812 = vmatpush2.bf16.msra.mxu0 0
      %3813 = vmatprep.subr.bf16.mxu0 0
      %3814 = vmatpush2.bf16.msra.mxu0 0
      %3815 = vmatprep.subr.bf16.mxu0 0
      %3816 = vmatpush2.bf16.msra.mxu0 0
      %3817 = vmatprep.subr.bf16.mxu0 0
      %3818 = vmatpush2.bf16.msra.mxu0 0
      %3819 = vmatprep.mubr.bf16.mxu0 0
      %3820 = vmatmul.mubr.bf16.gmra.mxu0 %v3729
      %v3821 = vpop.f32.mrf.mxu0
      %v3822 = vadd.f32 %v3701, %v3821
      %v3823 = vpop.f32.mrf.mxu0
      %v3824 = vadd.f32 %v3701, %v3823
      %v3825 = vpop.f32.mrf.mxu0
      %v3826 = vadd.f32 %v3706, %v3825
      %v3827 = vpop.f32.mrf.mxu0
      %v3828 = vadd.f32 %v3706, %v3827
      %3829 = vmatprep.mubr.bf16.mxu0 0
      %3830 = vmatmul.mubr.bf16.gmra.mxu0 %v3732
      %v3831 = vpop.f32.mrf.mxu0
      %v3832 = vadd.f32 %v3711, %v3831
      %v3833 = vpop.f32.mrf.mxu0
      %v3834 = vadd.f32 %v3711, %v3833
      %v3835 = vpop.f32.mrf.mxu0
      %v3836 = vadd.f32 %v3716, %v3835
      %v3837 = vpop.f32.mrf.mxu0
      %v3838 = vadd.f32 %v3716, %v3837
      %3839 = vdwg.mxu0
      %v3840 = vmul.f32 %v3769, %v1459
      %v3841 = vmul.f32 %v3771, %v1460
      %v3842 = vmul.f32 %v3822, %v1461
      %v3843 = vmul.f32 %v3824, %v1462
      %v3844 = vmul.f32 %v3773, %v1463
      %v3845 = vmul.f32 %v3775, %v1464
      %v3846 = vmul.f32 %v3826, %v1465
      %v3847 = vmul.f32 %v3828, %v1466
      %v3848 = vmul.f32 %v3779, %v1467
      %v3849 = vmul.f32 %v3781, %v1468
      %v3850 = vmul.f32 %v3832, %v1469
      %v3851 = vmul.f32 %v3834, %v1470
      %v3852 = vmul.f32 %v3783, %v1471
      %v3853 = vmul.f32 %v3785, %v1472
      %v3854 = vmul.f32 %v3836, %v1473
      %v3855 = vmul.f32 %v3838, %v1474
      %v3856 = vadd.f32 %v3437, %v3840
      %v3857 = vadd.f32 %v3439, %v3841
      %v3858 = vadd.f32 %v3490, %v3842
      %v3859 = vadd.f32 %v3492, %v3843
      %v3860 = vadd.f32 %v3441, %v3844
      %v3861 = vadd.f32 %v3443, %v3845
      %v3862 = vadd.f32 %v3494, %v3846
      %v3863 = vadd.f32 %v3496, %v3847
      %v3864 = vadd.f32 %v3447, %v3848
      %v3865 = vadd.f32 %v3449, %v3849
      %v3866 = vadd.f32 %v3500, %v3850
      %v3867 = vadd.f32 %v3502, %v3851
      %v3868 = vadd.f32 %v3451, %v3852
      %v3869 = vadd.f32 %v3453, %v3853
      %v3870 = vadd.f32 %v3504, %v3854
      %v3871 = vadd.f32 %v3506, %v3855
      %v3872 = vmax.f32 %v3856, 0.0
      %v3873 = vmax.f32 %v3857, 0.0
      %v3874 = vmax.f32 %v3858, 0.0
      %v3875 = vmax.f32 %v3859, 0.0
      %v3876 = vmax.f32 %v3860, 0.0
      %v3877 = vmax.f32 %v3861, 0.0
      %v3878 = vmax.f32 %v3862, 0.0
      %v3879 = vmax.f32 %v3863, 0.0
      %v3880 = vmax.f32 %v3864, 0.0
      %v3881 = vmax.f32 %v3865, 0.0
      %v3882 = vmax.f32 %v3866, 0.0
      %v3883 = vmax.f32 %v3867, 0.0
      %v3884 = vmax.f32 %v3868, 0.0
      %v3885 = vmax.f32 %v3869, 0.0
      %v3886 = vmax.f32 %v3870, 0.0
      %v3887 = vmax.f32 %v3871, 0.0
      %v3888 = vpack.c.bf16 %v3876, %v3872
      %v3889 = vpack.c.bf16 %v3877, %v3873
      %v3890 = vpack.c.bf16 %v3878, %v3874
      %v3891 = vpack.c.bf16 %v3879, %v3875
      %v3892 = vpack.c.bf16 %v3884, %v3880
      %v3893 = vpack.c.bf16 %v3885, %v3881
      %v3894 = vpack.c.bf16 %v3886, %v3882
      %v3895 = vpack.c.bf16 %v3887, %v3883
      %3897 = vset.pattern.permute.xlu0 0
      %3898 = vperm.xlu0 %3897, %v523
      %v3899 = vpop.permute.xlu0 %3898
      %3902 = vset.pattern.permute.xlu0 0
      %3903 = vperm.xlu0 %3902, %v524
      %v3904 = vpop.permute.xlu0 %3903
      %3907 = vset.pattern.permute.xlu0 0
      %3908 = vperm.xlu0 %3907, %v525
      %v3909 = vpop.permute.xlu0 %3908
      %3912 = vset.pattern.permute.xlu0 0
      %3913 = vperm.xlu0 %3912, %v526
      %v3914 = vpop.permute.xlu0 %3913
      %v3920 = vunpack.c.l.b16 %v507
      %v3921 = vunpack.c.l.b16 %v508
      %v3922 = vunpack.c.l.b16 %v509
      %v3923 = vunpack.c.l.b16 %v510
      %v3924 = vpack.c.b16 %v3921, %v3920
      %v3925 = vpack.c.b16 %v3923, %v3922
      %v3927 = vsel %vm1727, %v3924, 0
      %v3930 = vsel %vm1727, %v3925, 0
      %3932 = vmatprep.subr.bf16.mxu0 0
      %3933 = vmatpush1.bf16.msra.mxu0 0
      %3934 = vmatprep.subr.bf16.mxu0 0
      %3935 = vmatpush1.bf16.msra.mxu0 0
      %3936 = vmatprep.subr.bf16.mxu0 0
      %3937 = vmatpush1.bf16.msra.mxu0 0
      %3938 = vmatprep.subr.bf16.mxu0 0
      %3939 = vmatpush1.bf16.msra.mxu0 0
      %3940 = vmatprep.subr.bf16.mxu0 0
      %3941 = vmatpush1.bf16.msra.mxu0 0
      %3942 = vmatprep.subr.bf16.mxu0 0
      %3943 = vmatpush1.bf16.msra.mxu0 0
      %3944 = vmatprep.subr.bf16.mxu0 %v3893
      %3945 = vmatpush1.bf16.msra.mxu0 %v3892
      %3946 = vmatprep.subr.bf16.mxu0 %v3889
      %3947 = vmatpush1.bf16.msra.mxu0 %v3888
      %3948 = vmatprep.subr.bf16.mxu0 0
      %3949 = vmatpush2.bf16.msra.mxu0 0
      %3950 = vmatprep.subr.bf16.mxu0 0
      %3951 = vmatpush2.bf16.msra.mxu0 0
      %3952 = vmatprep.subr.bf16.mxu0 0
      %3953 = vmatpush2.bf16.msra.mxu0 0
      %3954 = vmatprep.subr.bf16.mxu0 0
      %3955 = vmatpush2.bf16.msra.mxu0 0
      %3956 = vmatprep.subr.bf16.mxu0 0
      %3957 = vmatpush2.bf16.msra.mxu0 0
      %3958 = vmatprep.subr.bf16.mxu0 0
      %3959 = vmatpush2.bf16.msra.mxu0 0
      %3960 = vmatprep.subr.bf16.mxu0 0
      %3961 = vmatpush2.bf16.msra.mxu0 0
      %3962 = vmatprep.subr.bf16.mxu0 0
      %3963 = vmatpush2.bf16.msra.mxu0 0
      %3964 = vmatprep.mubr.bf16.mxu0 0
      %3965 = vmatmul.mubr.bf16.gmra.mxu0 %v3927
      %v3966 = vpop.f32.mrf.mxu0
      %v3967 = vadd.f32 %v3899, %v3966
      %v3968 = vpop.f32.mrf.mxu0
      %v3969 = vadd.f32 %v3899, %v3968
      %v3970 = vpop.f32.mrf.mxu0
      %v3971 = vadd.f32 %v3904, %v3970
      %v3972 = vpop.f32.mrf.mxu0
      %v3973 = vadd.f32 %v3904, %v3972
      %3974 = vmatprep.mubr.bf16.mxu0 0
      %3975 = vmatmul.mubr.bf16.gmra.mxu0 %v3930
      %v3976 = vpop.f32.mrf.mxu0
      %v3977 = vadd.f32 %v3909, %v3976
      %v3978 = vpop.f32.mrf.mxu0
      %v3979 = vadd.f32 %v3909, %v3978
      %v3980 = vpop.f32.mrf.mxu0
      %v3981 = vadd.f32 %v3914, %v3980
      %v3982 = vpop.f32.mrf.mxu0
      %v3983 = vadd.f32 %v3914, %v3982
      %3984 = vdwg.mxu0
      %3985 = vmatprep.subr.bf16.mxu0 0
      %3986 = vmatpush1.bf16.msra.mxu0 0
      %3987 = vmatprep.subr.bf16.mxu0 0
      %3988 = vmatpush1.bf16.msra.mxu0 0
      %3989 = vmatprep.subr.bf16.mxu0 0
      %3990 = vmatpush1.bf16.msra.mxu0 0
      %3991 = vmatprep.subr.bf16.mxu0 0
      %3992 = vmatpush1.bf16.msra.mxu0 0
      %3993 = vmatprep.subr.bf16.mxu0 0
      %3994 = vmatpush1.bf16.msra.mxu0 0
      %3995 = vmatprep.subr.bf16.mxu0 0
      %3996 = vmatpush1.bf16.msra.mxu0 0
      %3997 = vmatprep.subr.bf16.mxu0 %v3895
      %3998 = vmatpush1.bf16.msra.mxu0 %v3894
      %3999 = vmatprep.subr.bf16.mxu0 %v3891
      %4000 = vmatpush1.bf16.msra.mxu0 %v3890
      %4001 = vmatprep.subr.bf16.mxu0 0
      %4002 = vmatpush2.bf16.msra.mxu0 0
      %4003 = vmatprep.subr.bf16.mxu0 0
      %4004 = vmatpush2.bf16.msra.mxu0 0
      %4005 = vmatprep.subr.bf16.mxu0 0
      %4006 = vmatpush2.bf16.msra.mxu0 0
      %4007 = vmatprep.subr.bf16.mxu0 0
      %4008 = vmatpush2.bf16.msra.mxu0 0
      %4009 = vmatprep.subr.bf16.mxu0 0
      %4010 = vmatpush2.bf16.msra.mxu0 0
      %4011 = vmatprep.subr.bf16.mxu0 0
      %4012 = vmatpush2.bf16.msra.mxu0 0
      %4013 = vmatprep.subr.bf16.mxu0 0
      %4014 = vmatpush2.bf16.msra.mxu0 0
      %4015 = vmatprep.subr.bf16.mxu0 0
      %4016 = vmatpush2.bf16.msra.mxu0 0
      %4017 = vmatprep.mubr.bf16.mxu0 0
      %4018 = vmatmul.mubr.bf16.gmra.mxu0 %v3927
      %v4019 = vpop.f32.mrf.mxu0
      %v4020 = vadd.f32 %v3899, %v4019
      %v4021 = vpop.f32.mrf.mxu0
      %v4022 = vadd.f32 %v3899, %v4021
      %v4023 = vpop.f32.mrf.mxu0
      %v4024 = vadd.f32 %v3904, %v4023
      %v4025 = vpop.f32.mrf.mxu0
      %v4026 = vadd.f32 %v3904, %v4025
      %4027 = vmatprep.mubr.bf16.mxu0 0
      %4028 = vmatmul.mubr.bf16.gmra.mxu0 %v3930
      %v4029 = vpop.f32.mrf.mxu0
      %v4030 = vadd.f32 %v3909, %v4029
      %v4031 = vpop.f32.mrf.mxu0
      %v4032 = vadd.f32 %v3909, %v4031
      %v4033 = vpop.f32.mrf.mxu0
      %v4034 = vadd.f32 %v3914, %v4033
      %v4035 = vpop.f32.mrf.mxu0
      %v4036 = vadd.f32 %v3914, %v4035
      %4037 = vdwg.mxu0
      %v4038 = vmax.f32 %v3967, 0.0
      %v4039 = vmax.f32 %v3969, 0.0
      %v4040 = vmax.f32 %v4020, 0.0
      %v4041 = vmax.f32 %v4022, 0.0
      %v4042 = vmax.f32 %v3971, 0.0
      %v4043 = vmax.f32 %v3973, 0.0
      %v4044 = vmax.f32 %v4024, 0.0
      %v4045 = vmax.f32 %v4026, 0.0
      %v4046 = vmax.f32 %v3977, 0.0
      %v4047 = vmax.f32 %v3979, 0.0
      %v4048 = vmax.f32 %v4030, 0.0
      %v4049 = vmax.f32 %v4032, 0.0
      %v4050 = vmax.f32 %v3981, 0.0
      %v4051 = vmax.f32 %v3983, 0.0
      %v4052 = vmax.f32 %v4034, 0.0
      %v4053 = vmax.f32 %v4036, 0.0
      %v4054 = vpack.c.bf16 %v4042, %v4038
      %v4055 = vpack.c.bf16 %v4043, %v4039
      %v4056 = vpack.c.bf16 %v4044, %v4040
      %v4057 = vpack.c.bf16 %v4045, %v4041
      %v4058 = vpack.c.bf16 %v4050, %v4046
      %v4059 = vpack.c.bf16 %v4051, %v4047
      %v4060 = vpack.c.bf16 %v4052, %v4048
      %v4061 = vpack.c.bf16 %v4053, %v4049
      %4063 = vset.pattern.permute.xlu0 0
      %4064 = vperm.xlu0 %4063, %v555
      %v4065 = vpop.permute.xlu0 %4064
      %4068 = vset.pattern.permute.xlu0 0
      %4069 = vperm.xlu0 %4068, %v556
      %v4070 = vpop.permute.xlu0 %4069
      %4073 = vset.pattern.permute.xlu0 0
      %4074 = vperm.xlu0 %4073, %v557
      %v4075 = vpop.permute.xlu0 %4074
      %4078 = vset.pattern.permute.xlu0 0
      %4079 = vperm.xlu0 %4078, %v558
      %v4080 = vpop.permute.xlu0 %4079
      %v4086 = vunpack.c.l.b16 %v539
      %v4087 = vunpack.c.l.b16 %v540
      %v4088 = vunpack.c.l.b16 %v541
      %v4089 = vunpack.c.l.b16 %v542
      %v4090 = vpack.c.b16 %v4087, %v4086
      %v4091 = vpack.c.b16 %v4089, %v4088
      %v4093 = vsel %vm1727, %v4090, 0
      %v4096 = vsel %vm1727, %v4091, 0
      %4098 = vmatprep.subr.bf16.mxu0 0
      %4099 = vmatpush1.bf16.msra.mxu0 0
      %4100 = vmatprep.subr.bf16.mxu0 0
      %4101 = vmatpush1.bf16.msra.mxu0 0
      %4102 = vmatprep.subr.bf16.mxu0 0
      %4103 = vmatpush1.bf16.msra.mxu0 0
      %4104 = vmatprep.subr.bf16.mxu0 0
      %4105 = vmatpush1.bf16.msra.mxu0 0
      %4106 = vmatprep.subr.bf16.mxu0 0
      %4107 = vmatpush1.bf16.msra.mxu0 0
      %4108 = vmatprep.subr.bf16.mxu0 0
      %4109 = vmatpush1.bf16.msra.mxu0 0
      %4110 = vmatprep.subr.bf16.mxu0 %v4059
      %4111 = vmatpush1.bf16.msra.mxu0 %v4058
      %4112 = vmatprep.subr.bf16.mxu0 %v4055
      %4113 = vmatpush1.bf16.msra.mxu0 %v4054
      %4114 = vmatprep.subr.bf16.mxu0 0
      %4115 = vmatpush2.bf16.msra.mxu0 0
      %4116 = vmatprep.subr.bf16.mxu0 0
      %4117 = vmatpush2.bf16.msra.mxu0 0
      %4118 = vmatprep.subr.bf16.mxu0 0
      %4119 = vmatpush2.bf16.msra.mxu0 0
      %4120 = vmatprep.subr.bf16.mxu0 0
      %4121 = vmatpush2.bf16.msra.mxu0 0
      %4122 = vmatprep.subr.bf16.mxu0 0
      %4123 = vmatpush2.bf16.msra.mxu0 0
      %4124 = vmatprep.subr.bf16.mxu0 0
      %4125 = vmatpush2.bf16.msra.mxu0 0
      %4126 = vmatprep.subr.bf16.mxu0 0
      %4127 = vmatpush2.bf16.msra.mxu0 0
      %4128 = vmatprep.subr.bf16.mxu0 0
      %4129 = vmatpush2.bf16.msra.mxu0 0
      %4130 = vmatprep.mubr.bf16.mxu0 0
      %4131 = vmatmul.mubr.bf16.gmra.mxu0 %v4093
      %v4132 = vpop.f32.mrf.mxu0
      %v4133 = vadd.f32 %v4065, %v4132
      %v4134 = vpop.f32.mrf.mxu0
      %v4135 = vadd.f32 %v4065, %v4134
      %v4136 = vpop.f32.mrf.mxu0
      %v4137 = vadd.f32 %v4070, %v4136
      %v4138 = vpop.f32.mrf.mxu0
      %v4139 = vadd.f32 %v4070, %v4138
      %4140 = vmatprep.mubr.bf16.mxu0 0
      %4141 = vmatmul.mubr.bf16.gmra.mxu0 %v4096
      %v4142 = vpop.f32.mrf.mxu0
      %v4143 = vadd.f32 %v4075, %v4142
      %v4144 = vpop.f32.mrf.mxu0
      %v4145 = vadd.f32 %v4075, %v4144
      %v4146 = vpop.f32.mrf.mxu0
      %v4147 = vadd.f32 %v4080, %v4146
      %v4148 = vpop.f32.mrf.mxu0
      %v4149 = vadd.f32 %v4080, %v4148
      %4150 = vdwg.mxu0
      %4151 = vmatprep.subr.bf16.mxu0 0
      %4152 = vmatpush1.bf16.msra.mxu0 0
      %4153 = vmatprep.subr.bf16.mxu0 0
      %4154 = vmatpush1.bf16.msra.mxu0 0
      %4155 = vmatprep.subr.bf16.mxu0 0
      %4156 = vmatpush1.bf16.msra.mxu0 0
      %4157 = vmatprep.subr.bf16.mxu0 0
      %4158 = vmatpush1.bf16.msra.mxu0 0
      %4159 = vmatprep.subr.bf16.mxu0 0
      %4160 = vmatpush1.bf16.msra.mxu0 0
      %4161 = vmatprep.subr.bf16.mxu0 0
      %4162 = vmatpush1.bf16.msra.mxu0 0
      %4163 = vmatprep.subr.bf16.mxu0 %v4061
      %4164 = vmatpush1.bf16.msra.mxu0 %v4060
      %4165 = vmatprep.subr.bf16.mxu0 %v4057
      %4166 = vmatpush1.bf16.msra.mxu0 %v4056
      %4167 = vmatprep.subr.bf16.mxu0 0
      %4168 = vmatpush2.bf16.msra.mxu0 0
      %4169 = vmatprep.subr.bf16.mxu0 0
      %4170 = vmatpush2.bf16.msra.mxu0 0
      %4171 = vmatprep.subr.bf16.mxu0 0
      %4172 = vmatpush2.bf16.msra.mxu0 0
      %4173 = vmatprep.subr.bf16.mxu0 0
      %4174 = vmatpush2.bf16.msra.mxu0 0
      %4175 = vmatprep.subr.bf16.mxu0 0
      %4176 = vmatpush2.bf16.msra.mxu0 0
      %4177 = vmatprep.subr.bf16.mxu0 0
      %4178 = vmatpush2.bf16.msra.mxu0 0
      %4179 = vmatprep.subr.bf16.mxu0 0
      %4180 = vmatpush2.bf16.msra.mxu0 0
      %4181 = vmatprep.subr.bf16.mxu0 0
      %4182 = vmatpush2.bf16.msra.mxu0 0
      %4183 = vmatprep.mubr.bf16.mxu0 0
      %4184 = vmatmul.mubr.bf16.gmra.mxu0 %v4093
      %v4185 = vpop.f32.mrf.mxu0
      %v4186 = vadd.f32 %v4065, %v4185
      %v4187 = vpop.f32.mrf.mxu0
      %v4188 = vadd.f32 %v4065, %v4187
      %v4189 = vpop.f32.mrf.mxu0
      %v4190 = vadd.f32 %v4070, %v4189
      %v4191 = vpop.f32.mrf.mxu0
      %v4192 = vadd.f32 %v4070, %v4191
      %4193 = vmatprep.mubr.bf16.mxu0 0
      %4194 = vmatmul.mubr.bf16.gmra.mxu0 %v4096
      %v4195 = vpop.f32.mrf.mxu0
      %v4196 = vadd.f32 %v4075, %v4195
      %v4197 = vpop.f32.mrf.mxu0
      %v4198 = vadd.f32 %v4075, %v4197
      %v4199 = vpop.f32.mrf.mxu0
      %v4200 = vadd.f32 %v4080, %v4199
      %v4201 = vpop.f32.mrf.mxu0
      %v4202 = vadd.f32 %v4080, %v4201
      %4203 = vdwg.mxu0
      %v4204 = vmul.f32 %v4133, %v1475
      %v4205 = vmul.f32 %v4135, %v1476
      %v4206 = vmul.f32 %v4186, %v1477
      %v4207 = vmul.f32 %v4188, %v1478
      %v4208 = vmul.f32 %v4137, %v1479
      %v4209 = vmul.f32 %v4139, %v1480
      %v4210 = vmul.f32 %v4190, %v1481
      %v4211 = vmul.f32 %v4192, %v1482
      %v4212 = vmul.f32 %v4143, %v1483
      %v4213 = vmul.f32 %v4145, %v1484
      %v4214 = vmul.f32 %v4196, %v1485
      %v4215 = vmul.f32 %v4198, %v1486
      %v4216 = vmul.f32 %v4147, %v1487
      %v4217 = vmul.f32 %v4149, %v1488
      %v4218 = vmul.f32 %v4200, %v1489
      %v4219 = vmul.f32 %v4202, %v1490
      %v4220 = vadd.f32 %v3856, %v4204
      %v4221 = vadd.f32 %v3857, %v4205
      %v4222 = vadd.f32 %v3858, %v4206
      %v4223 = vadd.f32 %v3859, %v4207
      %v4224 = vadd.f32 %v3860, %v4208
      %v4225 = vadd.f32 %v3861, %v4209
      %v4226 = vadd.f32 %v3862, %v4210
      %v4227 = vadd.f32 %v3863, %v4211
      %v4228 = vadd.f32 %v3864, %v4212
      %v4229 = vadd.f32 %v3865, %v4213
      %v4230 = vadd.f32 %v3866, %v4214
      %v4231 = vadd.f32 %v3867, %v4215
      %v4232 = vadd.f32 %v3868, %v4216
      %v4233 = vadd.f32 %v3869, %v4217
      %v4234 = vadd.f32 %v3870, %v4218
      %v4235 = vadd.f32 %v3871, %v4219
      %v4236 = vpack.c.bf16 %v4224, %v4220
      %v4237 = vpack.c.bf16 %v4225, %v4221
      %v4238 = vpack.c.bf16 %v4226, %v4222
      %v4239 = vpack.c.bf16 %v4227, %v4223
      %v4240 = vpack.c.bf16 %v4232, %v4228
      %v4241 = vpack.c.bf16 %v4233, %v4229
      %v4242 = vpack.c.bf16 %v4234, %v4230
      %v4243 = vpack.c.bf16 %v4235, %v4231
      %4245 = vset.pattern.permute.xlu0 0
      %4246 = vperm.xlu0 %4245, %v615
      %v4247 = vpop.permute.xlu0 %4246
      %4250 = vset.pattern.permute.xlu0 0
      %4251 = vperm.xlu0 %4250, %v616
      %v4252 = vpop.permute.xlu0 %4251
      %4255 = vset.pattern.permute.xlu0 0
      %4256 = vperm.xlu0 %4255, %v617
      %v4257 = vpop.permute.xlu0 %4256
      %4260 = vset.pattern.permute.xlu0 0
      %4261 = vperm.xlu0 %4260, %v618
      %v4262 = vpop.permute.xlu0 %4261
      %4265 = vset.pattern.permute.xlu0 0
      %4266 = vperm.xlu0 %4265, %v619
      %v4267 = vpop.permute.xlu0 %4266
      %4270 = vset.pattern.permute.xlu0 0
      %4271 = vperm.xlu0 %4270, %v620
      %v4272 = vpop.permute.xlu0 %4271
      %4275 = vset.pattern.permute.xlu0 0
      %4276 = vperm.xlu0 %4275, %v621
      %v4277 = vpop.permute.xlu0 %4276
      %4280 = vset.pattern.permute.xlu0 0
      %4281 = vperm.xlu0 %4280, %v622
      %v4282 = vpop.permute.xlu0 %4281
      %v4291 = vunpack.c.l.b16 %v599
      %v4292 = vunpack.c.l.b16 %v600
      %v4293 = vunpack.c.l.b16 %v601
      %v4294 = vunpack.c.l.b16 %v602
      %v4295 = vunpack.c.l.b16 %v603
      %v4296 = vunpack.c.l.b16 %v604
      %v4297 = vunpack.c.l.b16 %v605
      %v4298 = vunpack.c.l.b16 %v606
      %v4299 = vpack.c.b16 %v4292, %v4291
      %v4300 = vpack.c.b16 %v4294, %v4293
      %v4301 = vpack.c.b16 %v4296, %v4295
      %v4302 = vpack.c.b16 %v4298, %v4297
      %v4304 = vsel %vm1727, %v4299, 0
      %v4307 = vsel %vm1727, %v4300, 0
      %v4310 = vsel %vm1727, %v4301, 0
      %v4313 = vsel %vm1727, %v4302, 0
      %4315 = vmatprep.subr.bf16.mxu0 0
      %4316 = vmatpush1.bf16.msra.mxu0 0
      %4317 = vmatprep.subr.bf16.mxu0 0
      %4318 = vmatpush1.bf16.msra.mxu0 0
      %4319 = vmatprep.subr.bf16.mxu0 0
      %4320 = vmatpush1.bf16.msra.mxu0 0
      %4321 = vmatprep.subr.bf16.mxu0 0
      %4322 = vmatpush1.bf16.msra.mxu0 0
      %4323 = vmatprep.subr.bf16.mxu0 0
      %4324 = vmatpush1.bf16.msra.mxu0 0
      %4325 = vmatprep.subr.bf16.mxu0 0
      %4326 = vmatpush1.bf16.msra.mxu0 0
      %4327 = vmatprep.subr.bf16.mxu0 %v4241
      %4328 = vmatpush1.bf16.msra.mxu0 %v4240
      %4329 = vmatprep.subr.bf16.mxu0 %v4237
      %4330 = vmatpush1.bf16.msra.mxu0 %v4236
      %4331 = vmatprep.subr.bf16.mxu0 0
      %4332 = vmatpush2.bf16.msra.mxu0 0
      %4333 = vmatprep.subr.bf16.mxu0 0
      %4334 = vmatpush2.bf16.msra.mxu0 0
      %4335 = vmatprep.subr.bf16.mxu0 0
      %4336 = vmatpush2.bf16.msra.mxu0 0
      %4337 = vmatprep.subr.bf16.mxu0 0
      %4338 = vmatpush2.bf16.msra.mxu0 0
      %4339 = vmatprep.subr.bf16.mxu0 0
      %4340 = vmatpush2.bf16.msra.mxu0 0
      %4341 = vmatprep.subr.bf16.mxu0 0
      %4342 = vmatpush2.bf16.msra.mxu0 0
      %4343 = vmatprep.subr.bf16.mxu0 0
      %4344 = vmatpush2.bf16.msra.mxu0 0
      %4345 = vmatprep.subr.bf16.mxu0 0
      %4346 = vmatpush2.bf16.msra.mxu0 0
      %4347 = vmatprep.mubr.bf16.mxu0 0
      %4348 = vmatmul.mubr.bf16.gmra.mxu0 %v4304
      %v4349 = vpop.f32.mrf.mxu0
      %v4350 = vadd.f32 %v4247, %v4349
      %v4351 = vpop.f32.mrf.mxu0
      %v4352 = vadd.f32 %v4247, %v4351
      %v4353 = vpop.f32.mrf.mxu0
      %v4354 = vadd.f32 %v4252, %v4353
      %v4355 = vpop.f32.mrf.mxu0
      %v4356 = vadd.f32 %v4252, %v4355
      %4357 = vmatprep.mubr.bf16.mxu0 0
      %4358 = vmatmul.mubr.bf16.gmra.mxu0 %v4307
      %v4359 = vpop.f32.mrf.mxu0
      %v4360 = vadd.f32 %v4257, %v4359
      %v4361 = vpop.f32.mrf.mxu0
      %v4362 = vadd.f32 %v4257, %v4361
      %v4363 = vpop.f32.mrf.mxu0
      %v4364 = vadd.f32 %v4262, %v4363
      %v4365 = vpop.f32.mrf.mxu0
      %v4366 = vadd.f32 %v4262, %v4365
      %4367 = vmatprep.mubr.bf16.mxu0 0
      %4368 = vmatmul.mubr.bf16.gmra.mxu0 %v4310
      %v4369 = vpop.f32.mrf.mxu0
      %v4370 = vadd.f32 %v4267, %v4369
      %v4371 = vpop.f32.mrf.mxu0
      %v4372 = vadd.f32 %v4267, %v4371
      %v4373 = vpop.f32.mrf.mxu0
      %v4374 = vadd.f32 %v4272, %v4373
      %v4375 = vpop.f32.mrf.mxu0
      %v4376 = vadd.f32 %v4272, %v4375
      %4377 = vmatprep.mubr.bf16.mxu0 0
      %4378 = vmatmul.mubr.bf16.gmra.mxu0 %v4313
      %v4379 = vpop.f32.mrf.mxu0
      %v4380 = vadd.f32 %v4277, %v4379
      %v4381 = vpop.f32.mrf.mxu0
      %v4382 = vadd.f32 %v4277, %v4381
      %v4383 = vpop.f32.mrf.mxu0
      %v4384 = vpop.f32.mrf.mxu0
      %4385 = vdwg.mxu0
      %4386 = vmatprep.subr.bf16.mxu0 0
      %4387 = vmatpush1.bf16.msra.mxu0 0
      %4388 = vmatprep.subr.bf16.mxu0 0
      %4389 = vmatpush1.bf16.msra.mxu0 0
      %4390 = vmatprep.subr.bf16.mxu0 0
      %4391 = vmatpush1.bf16.msra.mxu0 0
      %4392 = vmatprep.subr.bf16.mxu0 0
      %4393 = vmatpush1.bf16.msra.mxu0 0
      %4394 = vmatprep.subr.bf16.mxu0 0
      %4395 = vmatpush1.bf16.msra.mxu0 0
      %4396 = vmatprep.subr.bf16.mxu0 0
      %4397 = vmatpush1.bf16.msra.mxu0 0
      %4398 = vmatprep.subr.bf16.mxu0 %v4243
      %4399 = vmatpush1.bf16.msra.mxu0 %v4242
      %4400 = vmatprep.subr.bf16.mxu0 %v4239
      %4401 = vmatpush1.bf16.msra.mxu0 %v4238
      %4402 = vmatprep.subr.bf16.mxu0 0
      %4403 = vmatpush2.bf16.msra.mxu0 0
      %4404 = vmatprep.subr.bf16.mxu0 0
      %4405 = vmatpush2.bf16.msra.mxu0 0
      %4406 = vmatprep.subr.bf16.mxu0 0
      %4407 = vmatpush2.bf16.msra.mxu0 0
      %4408 = vmatprep.subr.bf16.mxu0 0
      %4409 = vmatpush2.bf16.msra.mxu0 0
      %4410 = vmatprep.subr.bf16.mxu0 0
      %4411 = vmatpush2.bf16.msra.mxu0 0
      %4412 = vmatprep.subr.bf16.mxu0 0
      %4413 = vmatpush2.bf16.msra.mxu0 0
      %4414 = vmatprep.subr.bf16.mxu0 0
      %4415 = vmatpush2.bf16.msra.mxu0 0
      %4416 = vmatprep.subr.bf16.mxu0 0
      %4417 = vmatpush2.bf16.msra.mxu0 0
      %4418 = vmatprep.mubr.bf16.mxu0 0
      %4419 = vmatmul.mubr.bf16.gmra.mxu0 %v4304
      %v4420 = vpop.f32.mrf.mxu0
      %v4421 = vadd.f32 %v4247, %v4420
      %v4422 = vpop.f32.mrf.mxu0
      %v4423 = vadd.f32 %v4247, %v4422
      %v4424 = vpop.f32.mrf.mxu0
      %v4425 = vadd.f32 %v4252, %v4424
      %v4426 = vpop.f32.mrf.mxu0
      %v4427 = vadd.f32 %v4252, %v4426
      %4428 = vmatprep.mubr.bf16.mxu0 0
      %4429 = vmatmul.mubr.bf16.gmra.mxu0 %v4307
      %v4430 = vpop.f32.mrf.mxu0
      %v4431 = vadd.f32 %v4257, %v4430
      %v4432 = vpop.f32.mrf.mxu0
      %v4433 = vadd.f32 %v4257, %v4432
      %v4434 = vpop.f32.mrf.mxu0
      %v4435 = vadd.f32 %v4262, %v4434
      %v4436 = vpop.f32.mrf.mxu0
      %v4437 = vadd.f32 %v4262, %v4436
      %4438 = vmatprep.mubr.bf16.mxu0 0
      %4439 = vmatmul.mubr.bf16.gmra.mxu0 %v4310
      %v4440 = vpop.f32.mrf.mxu0
      %v4441 = vadd.f32 %v4267, %v4440
      %v4442 = vpop.f32.mrf.mxu0
      %v4443 = vadd.f32 %v4267, %v4442
      %v4444 = vpop.f32.mrf.mxu0
      %v4445 = vadd.f32 %v4272, %v4444
      %v4446 = vpop.f32.mrf.mxu0
      %v4447 = vadd.f32 %v4272, %v4446
      %4448 = vmatprep.mubr.bf16.mxu0 0
      %4449 = vmatmul.mubr.bf16.gmra.mxu0 %v4313
      %v4450 = vpop.f32.mrf.mxu0
      %v4451 = vadd.f32 %v4277, %v4450
      %v4452 = vpop.f32.mrf.mxu0
      %v4453 = vadd.f32 %v4277, %v4452
      %v4454 = vpop.f32.mrf.mxu0
      %v4455 = vpop.f32.mrf.mxu0
      %4456 = vdwg.mxu0
      %vm4457 = vcmp.ge.f32.partialorder %v3366, -3.0
      %vm4458 = vcmp.ge.f32.partialorder %v3367, -3.0
      %vm4459 = vcmp.ge.f32.partialorder %v3368, -3.0
      %vm4460 = vcmp.ge.f32.partialorder %v3369, -3.0
      %vm4461 = vcmp.le.f32.partialorder %v3366, 3.0
      %vm4462 = vcmp.le.f32.partialorder %v3367, 3.0
      %vm4463 = vcmp.le.f32.partialorder %v3368, 3.0
      %vm4464 = vcmp.le.f32.partialorder %v3369, 3.0
      %vm4465 = vmand %vm4457, %vm4461
      %vm4466 = vmand %vm4458, %vm4462
      %vm4467 = vmand %vm4459, %vm4463
      %vm4468 = vmand %vm4460, %vm4464
      %v4469 = vmax.f32 %v3366, -3.0
      %v4470 = vmax.f32 %v3367, -3.0
      %v4471 = vmax.f32 %v3368, -3.0
      %v4472 = vmax.f32 %v3369, -3.0
      %v4473 = vmin.f32 %v4469, 3.0
      %v4474 = vmin.f32 %v4470, 3.0
      %v4475 = vmin.f32 %v4471, 3.0
      %v4476 = vmin.f32 %v4472, 3.0
      %v4477 = vmax.f32 %v4350, %v4354
      %v4478 = vmax.f32 %v4352, %v4356
      %v4479 = vmax.f32 %v4421, %v4425
      %v4480 = vmax.f32 %v4423, %v4427
      %v4481 = vmax.f32 %v4477, %v4360
      %v4482 = vmax.f32 %v4478, %v4362
      %v4483 = vmax.f32 %v4479, %v4431
      %v4484 = vmax.f32 %v4480, %v4433
      %v4485 = vmax.f32 %v4481, %v4364
      %v4486 = vmax.f32 %v4482, %v4366
      %v4487 = vmax.f32 %v4483, %v4435
      %v4488 = vmax.f32 %v4484, %v4437
      %v4489 = vsub.f32 %v4350, %v4485
      %v4490 = vsub.f32 %v4352, %v4486
      %v4491 = vsub.f32 %v4421, %v4487
      %v4492 = vsub.f32 %v4423, %v4488
      %v4493 = vmul.f32 %v4489, 1.442695
      %v4494 = vpow.pop %v4493
      %v4495 = vmul.f32 %v4490, 1.442695
      %v4496 = vpow.pop %v4495
      %v4497 = vmul.f32 %v4491, 1.442695
      %v4498 = vpow.pop %v4497
      %v4499 = vmul.f32 %v4492, 1.442695
      %v4500 = vpow.pop %v4499
      %v4501 = vsub.f32 %v4354, %v4485
      %v4502 = vsub.f32 %v4356, %v4486
      %v4503 = vsub.f32 %v4425, %v4487
      %v4504 = vsub.f32 %v4427, %v4488
      %v4505 = vmul.f32 %v4501, 1.442695
      %v4506 = vpow.pop %v4505
      %v4507 = vmul.f32 %v4502, 1.442695
      %v4508 = vpow.pop %v4507
      %v4509 = vmul.f32 %v4503, 1.442695
      %v4510 = vpow.pop %v4509
      %v4511 = vmul.f32 %v4504, 1.442695
      %v4512 = vpow.pop %v4511
      %v4513 = vsub.f32 %v4360, %v4485
      %v4514 = vsub.f32 %v4362, %v4486
      %v4515 = vsub.f32 %v4431, %v4487
      %v4516 = vsub.f32 %v4433, %v4488
      %v4517 = vmul.f32 %v4513, 1.442695
      %v4518 = vpow.pop %v4517
      %v4519 = vmul.f32 %v4514, 1.442695
      %v4520 = vpow.pop %v4519
      %v4521 = vmul.f32 %v4515, 1.442695
      %v4522 = vpow.pop %v4521
      %v4523 = vmul.f32 %v4516, 1.442695
      %v4524 = vpow.pop %v4523
      %v4525 = vsub.f32 %v4364, %v4485
      %v4526 = vsub.f32 %v4366, %v4486
      %v4527 = vsub.f32 %v4435, %v4487
      %v4528 = vsub.f32 %v4437, %v4488
      %v4529 = vmul.f32 %v4525, 1.442695
      %v4530 = vpow.pop %v4529
      %v4531 = vmul.f32 %v4526, 1.442695
      %v4532 = vpow.pop %v4531
      %v4533 = vmul.f32 %v4527, 1.442695
      %v4534 = vpow.pop %v4533
      %v4535 = vmul.f32 %v4528, 1.442695
      %v4536 = vpow.pop %v4535
      %v4537 = vadd.f32 %v4494, %v4506
      %v4538 = vadd.f32 %v4496, %v4508
      %v4539 = vadd.f32 %v4498, %v4510
      %v4540 = vadd.f32 %v4500, %v4512
      %v4541 = vadd.f32 %v4537, %v4518
      %v4542 = vadd.f32 %v4538, %v4520
      %v4543 = vadd.f32 %v4539, %v4522
      %v4544 = vadd.f32 %v4540, %v4524
      %v4545 = vadd.f32 %v4541, %v4530
      %v4546 = vadd.f32 %v4542, %v4532
      %v4547 = vadd.f32 %v4543, %v4534
      %v4548 = vadd.f32 %v4544, %v4536
      %v4549 = vrcp.pop %v4545
      %v4550 = vrcp.pop %v4546
      %v4551 = vrcp.pop %v4547
      %v4552 = vrcp.pop %v4548
      %v4553 = vmul.f32 %v4494, %v4549
      %v4554 = vmul.f32 %v4496, %v4550
      %v4555 = vmul.f32 %v4498, %v4551
      %v4556 = vmul.f32 %v4500, %v4552
      %v4557 = vmul.f32 %v4506, %v4549
      %v4558 = vmul.f32 %v4508, %v4550
      %v4559 = vmul.f32 %v4510, %v4551
      %v4560 = vmul.f32 %v4512, %v4552
      %v4561 = vmul.f32 %v4518, %v4549
      %v4562 = vmul.f32 %v4520, %v4550
      %v4563 = vmul.f32 %v4522, %v4551
      %v4564 = vmul.f32 %v4524, %v4552
      %v4565 = vmul.f32 %v4530, %v4549
      %v4566 = vmul.f32 %v4532, %v4550
      %v4567 = vmul.f32 %v4534, %v4551
      %v4568 = vmul.f32 %v4536, %v4552
      %v4569 = vmul.f32 %v4553, 0.996
      %v4570 = vmul.f32 %v4554, 0.996
      %v4571 = vmul.f32 %v4555, 0.996
      %v4572 = vmul.f32 %v4556, 0.996
      %v4573 = vadd.f32 %v4569, 0.001
      %v4574 = vadd.f32 %v4570, 0.001
      %v4575 = vadd.f32 %v4571, 0.001
      %v4576 = vadd.f32 %v4572, 0.001
      %v4577 = vmul.f32 %v4557, 0.996
      %v4578 = vmul.f32 %v4558, 0.996
      %v4579 = vmul.f32 %v4559, 0.996
      %v4580 = vmul.f32 %v4560, 0.996
      %v4581 = vadd.f32 %v4577, 0.001
      %v4582 = vadd.f32 %v4578, 0.001
      %v4583 = vadd.f32 %v4579, 0.001
      %v4584 = vadd.f32 %v4580, 0.001
      %v4585 = vmul.f32 %v4561, 0.996
      %v4586 = vmul.f32 %v4562, 0.996
      %v4587 = vmul.f32 %v4563, 0.996
      %v4588 = vmul.f32 %v4564, 0.996
      %v4589 = vadd.f32 %v4585, 0.001
      %v4590 = vadd.f32 %v4586, 0.001
      %v4591 = vadd.f32 %v4587, 0.001
      %v4592 = vadd.f32 %v4588, 0.001
      %v4593 = vmul.f32 %v4565, 0.996
      %v4594 = vmul.f32 %v4566, 0.996
      %v4595 = vmul.f32 %v4567, 0.996
      %v4596 = vmul.f32 %v4568, 0.996
      %v4597 = vadd.f32 %v4593, 0.001
      %v4598 = vadd.f32 %v4594, 0.001
      %v4599 = vadd.f32 %v4595, 0.001
      %v4600 = vadd.f32 %v4596, 0.001
      %v4601 = vmul.f32 %v4573, 6.0
      %v4602 = vmul.f32 %v4574, 6.0
      %v4603 = vmul.f32 %v4575, 6.0
      %v4604 = vmul.f32 %v4576, 6.0
      %v4605 = vmul.f32 %v4581, 6.0
      %v4606 = vmul.f32 %v4582, 6.0
      %v4607 = vmul.f32 %v4583, 6.0
      %v4608 = vmul.f32 %v4584, 6.0
      %v4609 = vmul.f32 %v4589, 6.0
      %v4610 = vmul.f32 %v4590, 6.0
      %v4611 = vmul.f32 %v4591, 6.0
      %v4612 = vmul.f32 %v4592, 6.0
      %v4613 = vmul.f32 %v4597, 6.0
      %v4614 = vmul.f32 %v4598, 6.0
      %v4615 = vmul.f32 %v4599, 6.0
      %v4616 = vmul.f32 %v4600, 6.0
      %v4617 = vadd.f32 %v4601, -3.0
      %v4618 = vadd.f32 %v4602, -3.0
      %v4619 = vadd.f32 %v4603, -3.0
      %v4620 = vadd.f32 %v4604, -3.0
      %v4621 = vadd.f32 %v4573, %v4581
      %v4622 = vadd.f32 %v4574, %v4582
      %v4623 = vadd.f32 %v4575, %v4583
      %v4624 = vadd.f32 %v4576, %v4584
      %v4625 = vmul.f32 %v4621, 6.0
      %v4626 = vmul.f32 %v4622, 6.0
      %v4627 = vmul.f32 %v4623, 6.0
      %v4628 = vmul.f32 %v4624, 6.0
      %v4629 = vadd.f32 %v4625, -3.0
      %v4630 = vadd.f32 %v4626, -3.0
      %v4631 = vadd.f32 %v4627, -3.0
      %v4632 = vadd.f32 %v4628, -3.0
      %v4633 = vadd.f32 %v4621, %v4589
      %v4634 = vadd.f32 %v4622, %v4590
      %v4635 = vadd.f32 %v4623, %v4591
      %v4636 = vadd.f32 %v4624, %v4592
      %v4637 = vmul.f32 %v4633, 6.0
      %v4638 = vmul.f32 %v4634, 6.0
      %v4639 = vmul.f32 %v4635, 6.0
      %v4640 = vmul.f32 %v4636, 6.0
      %v4641 = vadd.f32 %v4637, -3.0
      %v4642 = vadd.f32 %v4638, -3.0
      %v4643 = vadd.f32 %v4639, -3.0
      %v4644 = vadd.f32 %v4640, -3.0
      %v4645 = vmax.f32 %v4370, 0.0
      %v4646 = vmax.f32 %v4372, 0.0
      %v4647 = vmax.f32 %v4441, 0.0
      %v4648 = vmax.f32 %v4443, 0.0
      %v4649 = vand.u32 2147483647, %v4370
      %v4650 = vand.u32 2147483647, %v4372
      %v4651 = vand.u32 2147483647, %v4441
      %v4652 = vand.u32 2147483647, %v4443
      %v4653 = vsub.f32 0.0, %v4649
      %v4654 = vsub.f32 0.0, %v4650
      %v4655 = vsub.f32 0.0, %v4651
      %v4656 = vsub.f32 0.0, %v4652
      %v4657 = vmul.f32 %v4653, 1.442695
      %v4658 = vpow.pop %v4657
      %v4659 = vmul.f32 %v4654, 1.442695
      %v4660 = vpow.pop %v4659
      %v4661 = vmul.f32 %v4655, 1.442695
      %v4662 = vpow.pop %v4661
      %v4663 = vmul.f32 %v4656, 1.442695
      %v4664 = vpow.pop %v4663
      %v4665 = vadd.f32 %v4658, 1.0
      %v4666 = vadd.f32 %v4660, 1.0
      %v4667 = vadd.f32 %v4662, 1.0
      %v4668 = vadd.f32 %v4664, 1.0
      %v4669 = vlog2.pop %v4665
      %v4670 = vmul.f32 %v4669, 0.6931472
      %v4671 = vlog2.pop %v4666
      %v4672 = vmul.f32 %v4671, 0.6931472
      %v4673 = vlog2.pop %v4667
      %v4674 = vmul.f32 %v4673, 0.6931472
      %v4675 = vlog2.pop %v4668
      %v4676 = vmul.f32 %v4675, 0.6931472
      %v4677 = vadd.f32 %v4645, %v4670
      %v4678 = vadd.f32 %v4646, %v4672
      %v4679 = vadd.f32 %v4647, %v4674
      %v4680 = vadd.f32 %v4648, %v4676
      %v4681 = vadd.f32 %v4677, 0.001
      %v4682 = vadd.f32 %v4678, 0.001
      %v4683 = vadd.f32 %v4679, 0.001
      %v4684 = vadd.f32 %v4680, 0.001
      %v4685 = vmax.f32 %v4374, 0.0
      %v4686 = vmax.f32 %v4376, 0.0
      %v4687 = vmax.f32 %v4445, 0.0
      %v4688 = vmax.f32 %v4447, 0.0
      %v4689 = vand.u32 2147483647, %v4374
      %v4690 = vand.u32 2147483647, %v4376
      %v4691 = vand.u32 2147483647, %v4445
      %v4692 = vand.u32 2147483647, %v4447
      %v4693 = vsub.f32 0.0, %v4689
      %v4694 = vsub.f32 0.0, %v4690
      %v4695 = vsub.f32 0.0, %v4691
      %v4696 = vsub.f32 0.0, %v4692
      %v4697 = vmul.f32 %v4693, 1.442695
      %v4698 = vpow.pop %v4697
      %v4699 = vmul.f32 %v4694, 1.442695
      %v4700 = vpow.pop %v4699
      %v4701 = vmul.f32 %v4695, 1.442695
      %v4702 = vpow.pop %v4701
      %v4703 = vmul.f32 %v4696, 1.442695
      %v4704 = vpow.pop %v4703
      %v4705 = vadd.f32 %v4698, 1.0
      %v4706 = vadd.f32 %v4700, 1.0
      %v4707 = vadd.f32 %v4702, 1.0
      %v4708 = vadd.f32 %v4704, 1.0
      %v4709 = vlog2.pop %v4705
      %v4710 = vmul.f32 %v4709, 0.6931472
      %v4711 = vlog2.pop %v4706
      %v4712 = vmul.f32 %v4711, 0.6931472
      %v4713 = vlog2.pop %v4707
      %v4714 = vmul.f32 %v4713, 0.6931472
      %v4715 = vlog2.pop %v4708
      %v4716 = vmul.f32 %v4715, 0.6931472
      %v4717 = vadd.f32 %v4685, %v4710
      %v4718 = vadd.f32 %v4686, %v4712
      %v4719 = vadd.f32 %v4687, %v4714
      %v4720 = vadd.f32 %v4688, %v4716
      %v4721 = vadd.f32 %v4717, 0.001
      %v4722 = vadd.f32 %v4718, 0.001
      %v4723 = vadd.f32 %v4719, 0.001
      %v4724 = vadd.f32 %v4720, 0.001
      %v4725 = vmax.f32 %v4380, 0.0
      %v4726 = vmax.f32 %v4382, 0.0
      %v4727 = vmax.f32 %v4451, 0.0
      %v4728 = vmax.f32 %v4453, 0.0
      %v4729 = vand.u32 2147483647, %v4380
      %v4730 = vand.u32 2147483647, %v4382
      %v4731 = vand.u32 2147483647, %v4451
      %v4732 = vand.u32 2147483647, %v4453
      %v4733 = vsub.f32 0.0, %v4729
      %v4734 = vsub.f32 0.0, %v4730
      %v4735 = vsub.f32 0.0, %v4731
      %v4736 = vsub.f32 0.0, %v4732
      %v4737 = vmul.f32 %v4733, 1.442695
      %v4738 = vpow.pop %v4737
      %v4739 = vmul.f32 %v4734, 1.442695
      %v4740 = vpow.pop %v4739
      %v4741 = vmul.f32 %v4735, 1.442695
      %v4742 = vpow.pop %v4741
      %v4743 = vmul.f32 %v4736, 1.442695
      %v4744 = vpow.pop %v4743
      %v4745 = vadd.f32 %v4738, 1.0
      %v4746 = vadd.f32 %v4740, 1.0
      %v4747 = vadd.f32 %v4742, 1.0
      %v4748 = vadd.f32 %v4744, 1.0
      %v4749 = vlog2.pop %v4745
      %v4750 = vmul.f32 %v4749, 0.6931472
      %v4751 = vlog2.pop %v4746
      %v4752 = vmul.f32 %v4751, 0.6931472
      %v4753 = vlog2.pop %v4747
      %v4754 = vmul.f32 %v4753, 0.6931472
      %v4755 = vlog2.pop %v4748
      %v4756 = vmul.f32 %v4755, 0.6931472
      %v4757 = vadd.f32 %v4725, %v4750
      %v4758 = vadd.f32 %v4726, %v4752
      %v4759 = vadd.f32 %v4727, %v4754
      %v4760 = vadd.f32 %v4728, %v4756
      %v4761 = vadd.f32 %v4757, 0.001
      %v4762 = vadd.f32 %v4758, 0.001
      %v4763 = vadd.f32 %v4759, 0.001
      %v4764 = vadd.f32 %v4760, 0.001
      %vm4765 = vcmp.ge.f32.partialorder %v4473, %v4617
      %vm4766 = vcmp.ge.f32.partialorder %v4474, %v4618
      %vm4767 = vcmp.ge.f32.partialorder %v4475, %v4619
      %vm4768 = vcmp.ge.f32.partialorder %v4476, %v4620
      %v4769 = vsel %vm4765, %v4617, -3.0
      %v4770 = vsel %vm4766, %v4618, -3.0
      %v4771 = vsel %vm4767, %v4619, -3.0
      %v4772 = vsel %vm4768, %v4620, -3.0
      %v4773 = vsel %vm4765, %v4605, %v4601
      %v4774 = vsel %vm4766, %v4606, %v4602
      %v4775 = vsel %vm4767, %v4607, %v4603
      %v4776 = vsel %vm4768, %v4608, %v4604
      %v4781 = vrot.slane %v4617, 4
      %v4782 = vrot.slane %v4618, 4
      %v4783 = vrot.slane %v4619, 4
      %v4784 = vrot.slane %v4620, 4
      %v4789 = vsel %vm4765, %v4781, -3.0
      %v4790 = vsel %vm4766, %v4782, -3.0
      %v4791 = vsel %vm4767, %v4783, -3.0
      %v4792 = vsel %vm4768, %v4784, -3.0
      %v4797 = vrot.slane %v4605, 4
      %v4798 = vrot.slane %v4606, 4
      %v4799 = vrot.slane %v4607, 4
      %v4800 = vrot.slane %v4608, 4
      %v4809 = vrot.slane %v4601, 4
      %v4810 = vrot.slane %v4602, 4
      %v4811 = vrot.slane %v4603, 4
      %v4812 = vrot.slane %v4604, 4
      %v4817 = vsel %vm4765, %v4797, %v4809
      %v4818 = vsel %vm4766, %v4798, %v4810
      %v4819 = vsel %vm4767, %v4799, %v4811
      %v4820 = vsel %vm4768, %v4800, %v4812
      %v4821 = vsel %vm4765, %v4681, 1.0
      %v4822 = vsel %vm4766, %v4682, 1.0
      %v4823 = vsel %vm4767, %v4683, 1.0
      %v4824 = vsel %vm4768, %v4684, 1.0
      %v4825 = vsel %vm4765, %v4721, %v4681
      %v4826 = vsel %vm4766, %v4722, %v4682
      %v4827 = vsel %vm4767, %v4723, %v4683
      %v4828 = vsel %vm4768, %v4724, %v4684
      %vm4829 = vcmp.ge.f32.partialorder %v4473, %v4629
      %vm4830 = vcmp.ge.f32.partialorder %v4474, %v4630
      %vm4831 = vcmp.ge.f32.partialorder %v4475, %v4631
      %vm4832 = vcmp.ge.f32.partialorder %v4476, %v4632
      %v4833 = vsel %vm4829, %v4629, %v4769
      %v4834 = vsel %vm4830, %v4630, %v4770
      %v4835 = vsel %vm4831, %v4631, %v4771
      %v4836 = vsel %vm4832, %v4632, %v4772
      %v4837 = vsel %vm4829, %v4609, %v4773
      %v4838 = vsel %vm4830, %v4610, %v4774
      %v4839 = vsel %vm4831, %v4611, %v4775
      %v4840 = vsel %vm4832, %v4612, %v4776
      %v4845 = vrot.slane %v4629, 4
      %v4846 = vrot.slane %v4630, 4
      %v4847 = vrot.slane %v4631, 4
      %v4848 = vrot.slane %v4632, 4
      %v4853 = vsel %vm4829, %v4845, %v4789
      %v4854 = vsel %vm4830, %v4846, %v4790
      %v4855 = vsel %vm4831, %v4847, %v4791
      %v4856 = vsel %vm4832, %v4848, %v4792
      %v4861 = vrot.slane %v4609, 4
      %v4862 = vrot.slane %v4610, 4
      %v4863 = vrot.slane %v4611, 4
      %v4864 = vrot.slane %v4612, 4
      %v4869 = vsel %vm4829, %v4861, %v4817
      %v4870 = vsel %vm4830, %v4862, %v4818
      %v4871 = vsel %vm4831, %v4863, %v4819
      %v4872 = vsel %vm4832, %v4864, %v4820
      %v4873 = vsel %vm4829, %v4721, %v4821
      %v4874 = vsel %vm4830, %v4722, %v4822
      %v4875 = vsel %vm4831, %v4723, %v4823
      %v4876 = vsel %vm4832, %v4724, %v4824
      %v4877 = vsel %vm4829, %v4761, %v4825
      %v4878 = vsel %vm4830, %v4762, %v4826
      %v4879 = vsel %vm4831, %v4763, %v4827
      %v4880 = vsel %vm4832, %v4764, %v4828
      %vm4881 = vcmp.ge.f32.partialorder %v4473, %v4641
      %vm4882 = vcmp.ge.f32.partialorder %v4474, %v4642
      %vm4883 = vcmp.ge.f32.partialorder %v4475, %v4643
      %vm4884 = vcmp.ge.f32.partialorder %v4476, %v4644
      %v4885 = vsel %vm4881, %v4641, %v4833
      %v4886 = vsel %vm4882, %v4642, %v4834
      %v4887 = vsel %vm4883, %v4643, %v4835
      %v4888 = vsel %vm4884, %v4644, %v4836
      %v4889 = vsel %vm4881, %v4613, %v4837
      %v4890 = vsel %vm4882, %v4614, %v4838
      %v4891 = vsel %vm4883, %v4615, %v4839
      %v4892 = vsel %vm4884, %v4616, %v4840
      %v4897 = vrot.slane %v4641, 4
      %v4898 = vrot.slane %v4642, 4
      %v4899 = vrot.slane %v4643, 4
      %v4900 = vrot.slane %v4644, 4
      %v4905 = vsel %vm4881, %v4897, %v4853
      %v4906 = vsel %vm4882, %v4898, %v4854
      %v4907 = vsel %vm4883, %v4899, %v4855
      %v4908 = vsel %vm4884, %v4900, %v4856
      %v4913 = vrot.slane %v4613, 4
      %v4914 = vrot.slane %v4614, 4
      %v4915 = vrot.slane %v4615, 4
      %v4916 = vrot.slane %v4616, 4
      %v4921 = vsel %vm4881, %v4913, %v4869
      %v4922 = vsel %vm4882, %v4914, %v4870
      %v4923 = vsel %vm4883, %v4915, %v4871
      %v4924 = vsel %vm4884, %v4916, %v4872
      %v4925 = vsel %vm4881, %v4761, %v4873
      %v4926 = vsel %vm4882, %v4762, %v4874
      %v4927 = vsel %vm4883, %v4763, %v4875
      %v4928 = vsel %vm4884, %v4764, %v4876
      %v4929 = vsel %vm4881, 1.0, %v4877
      %v4930 = vsel %vm4882, 1.0, %v4878
      %v4931 = vsel %vm4883, 1.0, %v4879
      %v4932 = vsel %vm4884, 1.0, %v4880
      %v4933 = vrcp.pop %v4889
      %v4934 = vmul.f32 1.0, %v4933
      %v4935 = vrcp.pop %v4890
      %v4936 = vmul.f32 1.0, %v4935
      %v4937 = vrcp.pop %v4891
      %v4938 = vmul.f32 1.0, %v4937
      %v4939 = vrcp.pop %v4892
      %v4940 = vmul.f32 1.0, %v4939
      %v4941 = vmul.f32 %v4921, %v4934
      %v4942 = vmul.f32 %v4922, %v4936
      %v4943 = vmul.f32 %v4923, %v4938
      %v4944 = vmul.f32 %v4924, %v4940
      %v4945 = vsub.f32 %v4473, %v4885
      %v4946 = vsub.f32 %v4474, %v4886
      %v4947 = vsub.f32 %v4475, %v4887
      %v4948 = vsub.f32 %v4476, %v4888
      %v4949 = vmul.f32 %v4945, %v4934
      %v4950 = vmul.f32 %v4946, %v4936
      %v4951 = vmul.f32 %v4947, %v4938
      %v4952 = vmul.f32 %v4948, %v4940
      %v4953 = vsub.f32 1.0, %v4949
      %v4954 = vsub.f32 1.0, %v4950
      %v4955 = vsub.f32 1.0, %v4951
      %v4956 = vsub.f32 1.0, %v4952
      %v4957 = vmul.f32 %v4949, %v4953
      %v4958 = vmul.f32 %v4950, %v4954
      %v4959 = vmul.f32 %v4951, %v4955
      %v4960 = vmul.f32 %v4952, %v4956
      %v4961 = vmul.f32 %v4949, %v4949
      %v4962 = vmul.f32 %v4950, %v4950
      %v4963 = vmul.f32 %v4951, %v4951
      %v4964 = vmul.f32 %v4952, %v4952
      %v4965 = vmul.f32 %v4941, %v4961
      %v4966 = vmul.f32 %v4942, %v4962
      %v4967 = vmul.f32 %v4943, %v4963
      %v4968 = vmul.f32 %v4944, %v4964
      %v4969 = vmul.f32 %v4925, %v4957
      %v4970 = vmul.f32 %v4926, %v4958
      %v4971 = vmul.f32 %v4927, %v4959
      %v4972 = vmul.f32 %v4928, %v4960
      %v4973 = vadd.f32 %v4965, %v4969
      %v4974 = vadd.f32 %v4966, %v4970
      %v4975 = vadd.f32 %v4967, %v4971
      %v4976 = vadd.f32 %v4968, %v4972
      %v4977 = vmul.f32 %v4921, %v4973
      %v4978 = vmul.f32 %v4922, %v4974
      %v4979 = vmul.f32 %v4923, %v4975
      %v4980 = vmul.f32 %v4924, %v4976
      %v4981 = vadd.f32 %v4925, %v4929
      %v4982 = vadd.f32 %v4926, %v4930
      %v4983 = vadd.f32 %v4927, %v4931
      %v4984 = vadd.f32 %v4928, %v4932
      %v4985 = vmul.f32 %v4941, 2.0
      %v4986 = vmul.f32 %v4942, 2.0
      %v4987 = vmul.f32 %v4943, 2.0
      %v4988 = vmul.f32 %v4944, 2.0
      %v4989 = vsub.f32 %v4981, %v4985
      %v4990 = vsub.f32 %v4982, %v4986
      %v4991 = vsub.f32 %v4983, %v4987
      %v4992 = vsub.f32 %v4984, %v4988
      %v4993 = vmul.f32 %v4989, %v4957
      %v4994 = vmul.f32 %v4990, %v4958
      %v4995 = vmul.f32 %v4991, %v4959
      %v4996 = vmul.f32 %v4992, %v4960
      %v4997 = vadd.f32 %v4941, %v4993
      %v4998 = vadd.f32 %v4942, %v4994
      %v4999 = vadd.f32 %v4943, %v4995
      %v5000 = vadd.f32 %v4944, %v4996
      %v5001 = vrcp.pop %v4997
      %v5002 = vmul.f32 1.0, %v5001
      %v5003 = vrcp.pop %v4998
      %v5004 = vmul.f32 1.0, %v5003
      %v5005 = vrcp.pop %v4999
      %v5006 = vmul.f32 1.0, %v5005
      %v5007 = vrcp.pop %v5000
      %v5008 = vmul.f32 1.0, %v5007
      %v5009 = vmul.f32 %v4941, %v4941
      %v5010 = vmul.f32 %v4942, %v4942
      %v5011 = vmul.f32 %v4943, %v4943
      %v5012 = vmul.f32 %v4944, %v4944
      %v5013 = vmul.f32 %v4929, %v4961
      %v5014 = vmul.f32 %v4930, %v4962
      %v5015 = vmul.f32 %v4931, %v4963
      %v5016 = vmul.f32 %v4932, %v4964
      %v5017 = vmul.f32 %v4985, %v4957
      %v5018 = vmul.f32 %v4986, %v4958
      %v5019 = vmul.f32 %v4987, %v4959
      %v5020 = vmul.f32 %v4988, %v4960
      %v5021 = vadd.f32 %v5013, %v5017
      %v5022 = vadd.f32 %v5014, %v5018
      %v5023 = vadd.f32 %v5015, %v5019
      %v5024 = vadd.f32 %v5016, %v5020
      %v5025 = vmul.f32 %v4925, %v4953
      %v5026 = vmul.f32 %v4926, %v4954
      %v5027 = vmul.f32 %v4927, %v4955
      %v5028 = vmul.f32 %v4928, %v4956
      %v5029 = vmul.f32 %v5025, %v4953
      %v5030 = vmul.f32 %v5026, %v4954
      %v5031 = vmul.f32 %v5027, %v4955
      %v5032 = vmul.f32 %v5028, %v4956
      %v5033 = vadd.f32 %v5021, %v5029
      %v5034 = vadd.f32 %v5022, %v5030
      %v5035 = vadd.f32 %v5023, %v5031
      %v5036 = vadd.f32 %v5024, %v5032
      %v5037 = vmul.f32 %v5009, %v5033
      %v5038 = vmul.f32 %v5010, %v5034
      %v5039 = vmul.f32 %v5011, %v5035
      %v5040 = vmul.f32 %v5012, %v5036
      %v5041 = vmul.f32 %v4977, %v5002
      %v5042 = vmul.f32 %v4978, %v5004
      %v5043 = vmul.f32 %v4979, %v5006
      %v5044 = vmul.f32 %v4980, %v5008
      %v5045 = vadd.f32 %v4905, %v5041
      %v5046 = vadd.f32 %v4906, %v5042
      %v5047 = vadd.f32 %v4907, %v5043
      %v5048 = vadd.f32 %v4908, %v5044
      %v5049 = vsel %vm4465, %v5045, %v3366
      %v5050 = vsel %vm4466, %v5046, %v3367
      %v5051 = vsel %vm4467, %v5047, %v3368
      %v5052 = vsel %vm4468, %v5048, %v3369
      %v5053 = vmul.f32 %v5002, %v5002
      %v5054 = vmul.f32 %v5004, %v5004
      %v5055 = vmul.f32 %v5006, %v5006
      %v5056 = vmul.f32 %v5008, %v5008
      %v5057 = vmul.f32 %v5037, %v5053
      %v5058 = vmul.f32 %v5038, %v5054
      %v5059 = vmul.f32 %v5039, %v5055
      %v5060 = vmul.f32 %v5040, %v5056
      %v5061 = vlog2.pop %v5057
      %v5062 = vmul.f32 %v5061, 0.6931472
      %v5063 = vlog2.pop %v5058
      %v5064 = vmul.f32 %v5063, 0.6931472
      %v5065 = vlog2.pop %v5059
      %v5066 = vmul.f32 %v5065, 0.6931472
      %v5067 = vlog2.pop %v5060
      %v5068 = vmul.f32 %v5067, 0.6931472
      %v5069 = vsel %vm4465, %v5062, 0.0
      %v5070 = vsel %vm4466, %v5064, 0.0
      %v5071 = vsel %vm4467, %v5066, 0.0
      %v5072 = vsel %vm4468, %v5068, 0.0
      %v5073 = vsel %vm1554, %v5069, 0.0
      %v5074 = vrot.slane %v5073, 4
      %v5075 = vadd.f32 %v5073, %v5074
      %v5076 = vrot.slane %v5075, 2
      %v5077 = vadd.f32 %v5075, %v5076
      %v5078 = vrot.slane %v5077, 1
      %v5079 = vadd.f32 %v5077, %v5078
      %v5080 = vsel %vm1554, %v5070, 0.0
      %v5081 = vrot.slane %v5080, 4
      %v5082 = vadd.f32 %v5080, %v5081
      %v5083 = vrot.slane %v5082, 2
      %v5084 = vadd.f32 %v5082, %v5083
      %v5085 = vrot.slane %v5084, 1
      %v5086 = vadd.f32 %v5084, %v5085
      %v5087 = vsel %vm1554, %v5071, 0.0
      %v5088 = vrot.slane %v5087, 4
      %v5089 = vadd.f32 %v5087, %v5088
      %v5090 = vrot.slane %v5089, 2
      %v5091 = vadd.f32 %v5089, %v5090
      %v5092 = vrot.slane %v5091, 1
      %v5093 = vadd.f32 %v5091, %v5092
      %v5094 = vsel %vm1554, %v5072, 0.0
      %v5095 = vrot.slane %v5094, 4
      %v5096 = vadd.f32 %v5094, %v5095
      %v5097 = vrot.slane %v5096, 2
      %v5098 = vadd.f32 %v5096, %v5097
      %v5099 = vrot.slane %v5098, 1
      %v5100 = vadd.f32 %v5098, %v5099
      %v5101 = vadd.f32 %v3267, %v5079
      %v5102 = vadd.f32 %v3268, %v5086
      %v5103 = vadd.f32 %v3269, %v5093
      %v5104 = vadd.f32 %v3270, %v5100
      %v5105 = vmul.f32 %v3326, %v3326
      %v5106 = vmul.f32 %v3327, %v3327
      %v5107 = vmul.f32 %v3328, %v3328
      %v5108 = vmul.f32 %v3329, %v3329
      %v5109 = vrot.slane %v5105, 4
      %v5110 = vadd.f32 %v5105, %v5109
      %v5111 = vrot.slane %v5110, 2
      %v5112 = vadd.f32 %v5110, %v5111
      %v5113 = vrot.slane %v5112, 1
      %v5114 = vadd.f32 %v5112, %v5113
      %v5115 = vrot.slane %v5106, 4
      %v5116 = vadd.f32 %v5106, %v5115
      %v5117 = vrot.slane %v5116, 2
      %v5118 = vadd.f32 %v5116, %v5117
      %v5119 = vrot.slane %v5118, 1
      %v5120 = vadd.f32 %v5118, %v5119
      %v5121 = vrot.slane %v5107, 4
      %v5122 = vadd.f32 %v5107, %v5121
      %v5123 = vrot.slane %v5122, 2
      %v5124 = vadd.f32 %v5122, %v5123
      %v5125 = vrot.slane %v5124, 1
      %v5126 = vadd.f32 %v5124, %v5125
      %v5127 = vrot.slane %v5108, 4
      %v5128 = vadd.f32 %v5108, %v5127
      %v5129 = vrot.slane %v5128, 2
      %v5130 = vadd.f32 %v5128, %v5129
      %v5131 = vrot.slane %v5130, 1
      %v5132 = vadd.f32 %v5130, %v5131
      %v5133 = vmul.f32 %v3366, %v3366
      %v5134 = vmul.f32 %v3367, %v3367
      %v5135 = vmul.f32 %v3368, %v3368
      %v5136 = vmul.f32 %v3369, %v3369
      %v5137 = vsel %vm1554, %v5133, 0.0
      %v5138 = vrot.slane %v5137, 4
      %v5139 = vadd.f32 %v5137, %v5138
      %v5140 = vrot.slane %v5139, 2
      %v5141 = vadd.f32 %v5139, %v5140
      %v5142 = vrot.slane %v5141, 1
      %v5143 = vadd.f32 %v5141, %v5142
      %v5144 = vsel %vm1554, %v5134, 0.0
      %v5145 = vrot.slane %v5144, 4
      %v5146 = vadd.f32 %v5144, %v5145
      %v5147 = vrot.slane %v5146, 2
      %v5148 = vadd.f32 %v5146, %v5147
      %v5149 = vrot.slane %v5148, 1
      %v5150 = vadd.f32 %v5148, %v5149
      %v5151 = vsel %vm1554, %v5135, 0.0
      %v5152 = vrot.slane %v5151, 4
      %v5153 = vadd.f32 %v5151, %v5152
      %v5154 = vrot.slane %v5153, 2
      %v5155 = vadd.f32 %v5153, %v5154
      %v5156 = vrot.slane %v5155, 1
      %v5157 = vadd.f32 %v5155, %v5156
      %v5158 = vsel %vm1554, %v5136, 0.0
      %v5159 = vrot.slane %v5158, 4
      %v5160 = vadd.f32 %v5158, %v5159
      %v5161 = vrot.slane %v5160, 2
      %v5162 = vadd.f32 %v5160, %v5161
      %v5163 = vrot.slane %v5162, 1
      %v5164 = vadd.f32 %v5162, %v5163
      %v5165 = vsub.f32 %v5114, %v5143
      %v5166 = vsub.f32 %v5120, %v5150
      %v5167 = vsub.f32 %v5126, %v5157
      %v5168 = vsub.f32 %v5132, %v5164
      %v5169 = vmul.f32 %v5049, %v5049
      %v5170 = vmul.f32 %v5050, %v5050
      %v5171 = vmul.f32 %v5051, %v5051
      %v5172 = vmul.f32 %v5052, %v5052
      %v5173 = vsel %vm1554, %v5169, 0.0
      %v5174 = vrot.slane %v5173, 4
      %v5175 = vadd.f32 %v5173, %v5174
      %v5176 = vrot.slane %v5175, 2
      %v5177 = vadd.f32 %v5175, %v5176
      %v5178 = vrot.slane %v5177, 1
      %v5179 = vadd.f32 %v5177, %v5178
      %v5180 = vsel %vm1554, %v5170, 0.0
      %v5181 = vrot.slane %v5180, 4
      %v5182 = vadd.f32 %v5180, %v5181
      %v5183 = vrot.slane %v5182, 2
      %v5184 = vadd.f32 %v5182, %v5183
      %v5185 = vrot.slane %v5184, 1
      %v5186 = vadd.f32 %v5184, %v5185
      %v5187 = vsel %vm1554, %v5171, 0.0
      %v5188 = vrot.slane %v5187, 4
      %v5189 = vadd.f32 %v5187, %v5188
      %v5190 = vrot.slane %v5189, 2
      %v5191 = vadd.f32 %v5189, %v5190
      %v5192 = vrot.slane %v5191, 1
      %v5193 = vadd.f32 %v5191, %v5192
      %v5194 = vsel %vm1554, %v5172, 0.0
      %v5195 = vrot.slane %v5194, 4
      %v5196 = vadd.f32 %v5194, %v5195
      %v5197 = vrot.slane %v5196, 2
      %v5198 = vadd.f32 %v5196, %v5197
      %v5199 = vrot.slane %v5198, 1
      %v5200 = vadd.f32 %v5198, %v5199
      %v5201 = vadd.f32 %v5165, %v5179
      %v5202 = vadd.f32 %v5166, %v5186
      %v5203 = vadd.f32 %v5167, %v5193
      %v5204 = vadd.f32 %v5168, %v5200
      %v5205 = vmul.f32 %v5201, -0.5
      %v5206 = vmul.f32 %v5202, -0.5
      %v5207 = vmul.f32 %v5203, -0.5
      %v5208 = vmul.f32 %v5204, -0.5
      %v5209 = vsub.f32 %v5205, 7.351508
      %v5210 = vsub.f32 %v5206, 7.351508
      %v5211 = vsub.f32 %v5207, 7.351508
      %v5212 = vsub.f32 %v5208, 7.351508
      %v5213 = vadd.f32 %v5209, %v5101
      %v5214 = vadd.f32 %v5210, %v5102
      %v5215 = vadd.f32 %v5211, %v5103
      %v5216 = vadd.f32 %v5212, %v5104
      %v5221 = vcombine.low %v5213, %v5214
      %v5222 = vcombine.low %v5215, %v5216
      %v5224 = vunpack.c.l.s4 1966171168
      %v5225 = vunpack.c.0.s8 %v5224
      %v5226 = vlaneseq
      %v5227 = vshrl.u32 %v5226, 7
      %v5228 = vsub.s32 %v5225, %v5227
      %v5229 = vrot.slane %v5221, %v5228
      %v5231 = vunpack.c.l.s4 1966171168
      %v5232 = vunpack.c.0.s8 %v5231
      %v5233 = vlaneseq
      %v5234 = vshrl.u32 %v5233, 7
      %v5235 = vsub.s32 %v5232, %v5234
      %v5236 = vrot.slane %v5222, %v5235
      %v5237 = vcombine.low %v5229, %v5236
      %v5239 = vunpack.c.l.s4 1966171168
      %v5240 = vunpack.c.0.s8 %v5239
      %v5241 = vlaneseq
      %v5242 = vshrl.u32 %v5241, 7
      %v5243 = vsub.s32 %v5240, %v5242
      %v5244 = vrot.slane %v5237, %v5243
      %v5246 = vlaneseq
      %vm5247 = vcmp.ge.s32.totalorder %v5246, 0
      %vm5248 = vcmp.lt.s32.totalorder %v5246, 512
      %vm5249 = vmand %vm5247, %vm5248
      %5250 = vst.msk [vmem:[%s462] sm:$0xf] %vm5249, %v5244
      %s5251 = smul.u32 4, %s24
      %p5252 = scmp.lt.s32.totalorder %s5251, 7
      %s5253 = scalar_select %p5252, %s5251, 7
      %s5254 = scalar_lea.vmem %s13, %s5253
      // Predicated region
      $region73: #{_lambda_.1} parent=71 // pred_check
        %p5255 = pneg %p325
      $region74: #{_lambda_.1} parent=71 // pred_check_branch
        %5257 = sbr.rel (%p5255) target = $region76
      $region75: #{_lambda_.1} parent=71 // pred_region
        %s5258 = smul.u32 4, %s24
      $region76: #{_lambda_.1} parent=71 // pred_fallthru
        _
    $region72: #{_lambda_.1} parent=5 // pred_fallthru
      _
    %p5259 = scmp.le.s32.totalorder 2, %s19
    // Predicated region
    $region77: #{_lambda_.1} parent=5 // pred_check
      %p5260 = pneg %p5259
    $region78: #{_lambda_.1} parent=5 // pred_check_branch
      %5262 = sbr.rel (%p5260) target = $region80
    $region79: #{_lambda_.1} parent=5 // pred_region
      %s5263 = ssub.s32 %s19, 2
      // Predicated region
      $region81: #{_lambda_.1} parent=79 // pred_check
        %p5264 = pneg %p331
      $region82: #{_lambda_.1} parent=79 // pred_check_branch
        %5266 = sbr.rel (%p5264) target = $region84
      $region83: #{_lambda_.1} parent=79 // pred_region
        %s5267 = smul.u32 4, %s25
        %p5268 = scmp.lt.s32.totalorder %s5267, 7
        %s5269 = scalar_select %p5268, %s5267, 7
        %s5270 = scalar_lea.vmem %s13, %s5269
      $region84: #{_lambda_.1} parent=79 // pred_fallthru
        _
    $region80: #{_lambda_.1} parent=5 // pred_fallthru
      _
  $region6: #{_lambda_.1} parent=0 // loop_footer
    %s23 = sadd.s32 1, %s19
  $region7: #{_lambda_.1} parent=0 // loop_footer_branch
    %18 = sbr.rel target = $region3
  $region8: #{_lambda_.1} parent=0 // loop_exit
    _

</llo_original>
